<compile_context>
chip_gen: v5e
topology: v5e:2x2
jax: 0.10.0
libtpu: 0.0.40
codegen_flags: <defaults>
</compile_context>

<pallas_src>
import functools

import jax
import jax.numpy as jnp
import numpy as np
from jax import lax
from jax.experimental import pallas as pl
from jax.experimental.pallas import tpu as pltpu


# ----------------------------------------------------------------------------
# Pallas kernel: full time recurrence of one CLSTMCell (one layer).
# Grid = (B, T); T axis is sequential ("arbitrary"), state lives in scratch.
# ----------------------------------------------------------------------------
def _make_clstm_kernel(K, H, W, Ch, pad):
    Hp, Wp = H + 2 * pad, W + 2 * pad
    HW = H * W
    C4 = 4 * Ch

    def kernel(x_ref, wx_ref, wh_ref, b_ref, h_out_ref, hpad_ref, c_ref):
        # x_ref    : (1, 1, H*W, K*K*Cin)  bf16   pre-im2col'd input for (b, t)
        # wx_ref   : (K*K*Cin, 4*Ch)       bf16   input-part conv weights
        # wh_ref   : (K, K*Ch, 4*Ch)       bf16   hidden-part conv weights (per dy)
        # b_ref    : (1, 4*Ch)             f32    conv bias
        # h_out_ref: (1, 1, H, W, Ch)      f32    per-step hidden output
        # hpad_ref : (Hp, Wp, Ch)          f32    zero-padded recurrent h (scratch)
        # c_ref    : (H*W, Ch)             f32    recurrent cell state (scratch)
        t = pl.program_id(1)

        @pl.when(t == 0)
        def _init():
            # init_hidden: h = c = 0; border of hpad stays zero forever.
            hpad_ref[...] = jnp.zeros_like(hpad_ref)
            c_ref[...] = jnp.zeros_like(c_ref)

        # ---- conv(x) contribution: one deep MXU matmul (depth K*K*Cin). ----
        acc = jnp.dot(x_ref[0, 0], wx_ref[...],
                      preferred_element_type=jnp.float32)        # (HW, 4*Ch) f32
        acc = acc + b_ref[...]

        # ---- conv(h) contribution: per-dy grouped matmuls (depth K*Ch). ----
        hp = hpad_ref[...]                                        # (Hp, Wp, Ch) f32
        # row-im2col over dx: lanes ordered (dx, c); dy handled by row slices.
        hrows = jnp.concatenate([hp[:, dx:dx + W, :] for dx in range(K)],
                                axis=-1)                          # (Hp, W, K*Ch)
        hrows = hrows.reshape(Hp * W, K * Ch).astype(jnp.bfloat16)
        for dy in range(K):
            patch = hrows[dy * W:(dy + H) * W]                    # (HW, K*Ch) bf16
            acc = acc + jnp.dot(patch, wh_ref[dy],
                                preferred_element_type=jnp.float32)

        # ---- gates [i, f, o, g]: one dense sigmoid over all 4*Ch lanes, ----
        # with tanh(x) = 2*sigmoid(2x) - 1 for the g lanes (lane-dense EUP).
        lane = lax.broadcasted_iota(jnp.int32, (HW, C4), 1)
        is_g = lane >= 3 * Ch
        s = jax.nn.sigmoid(jnp.where(is_g, 2.0 * acc, acc))
        act = jnp.where(is_g, 2.0 * s - 1.0, s)
        gi = act[:, 0 * Ch:1 * Ch]
        gf = act[:, 1 * Ch:2 * Ch]
        go = act[:, 2 * Ch:3 * Ch]
        gg = act[:, 3 * Ch:4 * Ch]

        c_new = c_ref[...] * gf + gi * gg
        h_new = go * jnp.tanh(c_new)

        # Persist recurrent state in VMEM; emit h for this step.
        c_ref[...] = c_new
        hpad_ref[pad:pad + H, pad:pad + W, :] = h_new.reshape(H, W, Ch)
        # TODO(synk): HBM-facing h output keeps last dim Ch=32 (not 128-lane
        # dense) to avoid a minor-dim-changing relayout reshape in-kernel.
        h_out_ref[0, 0] = h_new.reshape(H, W, Ch)

    return kernel


# ----------------------------------------------------------------------------
# One CLSTM layer over the full sequence: (B,T,H,W,Cin) f32 -> (B,T,H,W,Ch) f32
# ----------------------------------------------------------------------------
def _clstm_layer_pallas(seq, w_oihw, bias):
    B, T, H, W, Cin = seq.shape
    O, C, K, _ = w_oihw.shape
    Ch = O // 4
    assert C == Cin + Ch
    pad = (K - 1) // 2
    Hp, Wp = H + 2 * pad, W + 2 * pad
    HW = H * W

    # x-side im2col, built ONCE for the whole sequence (outside the recurrence).
    xp = jnp.pad(seq, ((0, 0), (0, 0), (pad, pad), (pad, pad), (0, 0)))
    cols = [xp[:, :, dy:dy + H, dx:dx + W, :]
            for dy in range(K) for dx in range(K)]
    x_cols = jnp.concatenate(cols, axis=-1).reshape(B, T, HW, K * K * Cin)
    x_cols = x_cols.astype(jnp.bfloat16)

    # Split conv weights into input / hidden parts, grouped for deep matmuls.
    #   wx: (K*K*Cin, 4*Ch)   rows ordered (dy, dx, c)  -> matches x_cols lanes
    #   wh: (K, K*Ch, 4*Ch)   per-dy rows ordered (dx, c) -> matches hrows lanes
    wx = jnp.transpose(w_oihw[:, :Cin], (2, 3, 1, 0)).reshape(
        K * K * Cin, 4 * Ch).astype(jnp.bfloat16)
    wh = jnp.transpose(w_oihw[:, Cin:], (2, 3, 1, 0)).reshape(
        K, K * Ch, 4 * Ch).astype(jnp.bfloat16)
    b2d = bias.reshape(1, 4 * Ch).astype(jnp.float32)

    kernel = _make_clstm_kernel(K=K, H=H, W=W, Ch=Ch, pad=pad)
    h_seq = pl.pallas_call(
        kernel,
        out_shape=jax.ShapeDtypeStruct((B, T, H, W, Ch), jnp.float32),
        grid_spec=pltpu.PrefetchScalarGridSpec(
            num_scalar_prefetch=0,
            grid=(B, T),
            in_specs=[
                pl.BlockSpec((1, 1, HW, K * K * Cin),
                             lambda b, t: (b, t, 0, 0)),
                pl.BlockSpec((K * K * Cin, 4 * Ch), lambda b, t: (0, 0)),
                pl.BlockSpec((K, K * Ch, 4 * Ch), lambda b, t: (0, 0, 0)),
                pl.BlockSpec((1, 4 * Ch), lambda b, t: (0, 0)),
            ],
            out_specs=pl.BlockSpec((1, 1, H, W, Ch),
                                   lambda b, t: (b, t, 0, 0, 0)),
            scratch_shapes=[
                pltpu.VMEM((Hp, Wp, Ch), jnp.float32),   # zero-padded recurrent h
                pltpu.VMEM((HW, Ch), jnp.float32),       # recurrent cell state c
            ],
        ),
        compiler_params=pltpu.CompilerParams(
            dimension_semantics=("parallel", "arbitrary")),
    )(x_cols, wx, wh, b2d)
    return h_seq


# ----------------------------------------------------------------------------
# Full CLSTM forward.  Layer-by-layer over the whole sequence is equivalent to
# the PyTorch step-major loop (layer l at step t only depends on layer l-1's
# step-t output and layer l's own past state).
# ----------------------------------------------------------------------------
@jax.jit
def clstm_forward(x_nchw_seq, params):
    # x_nchw_seq: (B, T, Cin, H, W) -- PyTorch convention.
    B, T, Cin, H, W = x_nchw_seq.shape
    seq = jnp.transpose(x_nchw_seq, (0, 1, 3, 4, 2)).astype(jnp.float32)
    for (w_oihw, bias) in params:
        seq = _clstm_layer_pallas(seq, w_oihw, bias)
    out_nchw = jnp.transpose(seq, (0, 1, 4, 2, 3))       # (B, T, Ch, H, W)
    return [out_nchw[:, t] for t in range(T)]


# ----------------------------------------------------------------------------
# Pure-JAX f32 reference (lax.conv) for correctness checking.
# ----------------------------------------------------------------------------
def clstm_forward_ref(x_nchw_seq, params):
    B, T, _, H, W = x_nchw_seq.shape
    seq = jnp.transpose(x_nchw_seq, (0, 1, 3, 4, 2)).astype(jnp.float32)
    num_layers = len(params)
    state = []
    outputs = []
    for step in range(T):
        inp = seq[:, step]
        for layer in range(num_layers):
            w_oihw, bias = params[layer]
            O, _, K, _ = w_oihw.shape
            Ch = O // 4
            pad = (K - 1) // 2
            if step == 0:
                state.append((jnp.zeros((B, H, W, Ch), jnp.float32),
                              jnp.zeros((B, H, W, Ch), jnp.float32)))
            h, c = state[layer]
            combined = jnp.concatenate([inp, h], axis=-1)
            w_hwio = jnp.transpose(w_oihw, (2, 3, 1, 0))
            A = lax.conv_general_dilated(
                combined, w_hwio, window_strides=(1, 1),
                padding=((pad, pad), (pad, pad)),
                dimension_numbers=("NHWC", "HWIO", "NHWC")) + bias
            ai, af, ao, ag = jnp.split(A, 4, axis=-1)
            i = jax.nn.sigmoid(ai)
            f = jax.nn.sigmoid(af)
            o = jax.nn.sigmoid(ao)
            g = jnp.tanh(ag)
            c = c * f + i * g
            inp = o * jnp.tanh(c)
            state[layer] = (inp, c)
        outputs.append(jnp.transpose(inp, (0, 3, 1, 2)))
    return outputs


if __name__ == "__main__":
    # Small shapes consistent with the module (channels-first sequence input).
    B, T, Cin, H, W = 2, 3, 4, 16, 16
    hidden_channels = [32]           # must be even (assert in CLSTMCell)
    K = 5

    key = jax.random.PRNGKey(0)
    kx, *kw = jax.random.split(key, 1 + 2 * len(hidden_channels))
    x = jax.random.normal(kx, (B, T, Cin, H, W), dtype=jnp.float32)

    # Parameters in torch Conv2d layout: weight (4*Ch, Cin+Ch, K, K), bias (4*Ch,)
    params = []
    in_chs = [Cin] + hidden_channels
    for layer, Ch in enumerate(hidden_channels):
        C = in_chs[layer] + Ch
        fan_in = C * K * K
        scale = 1.0 / np.sqrt(fan_in)
        wgt = scale * jax.random.normal(kw[2 * layer], (4 * Ch, C, K, K),
                                        dtype=jnp.float32)
        b = scale * jax.random.normal(kw[2 * layer + 1], (4 * Ch,),
                                      dtype=jnp.float32)
        params.append((wgt, b))

    outs = clstm_forward(x, params)
    outs = [jax.block_until_ready(o) for o in outs]

    # Validate against the f32 reference (tolerance loosened for bf16 MXU).
    refs = clstm_forward_ref(x, params)
    for o, r in zip(outs, refs):
        np.testing.assert_allclose(np.asarray(o), np.asarray(r),
                                   rtol=3e-2, atol=3e-2)

    print("KERNEL_OK")
</pallas_src>

<mosaic_0001>
module attributes {stable_mosaic.version = 11 : i64} {
  func.func @kernel(%arg0: i32, %arg1: i32, %arg2: memref<1x1x256x100xbf16, #tpu.memory_space<vmem>>, %arg3: memref<100x128xbf16, #tpu.memory_space<vmem>>, %arg4: memref<5x160x128xbf16, #tpu.memory_space<vmem>>, %arg5: memref<1x128xf32, #tpu.memory_space<vmem>>, %arg6: memref<1x1x16x16x32xf32, #tpu.memory_space<vmem>>, %arg7: memref<20x20x32xf32, #tpu.memory_space<vmem>>, %arg8: memref<256x32xf32, #tpu.memory_space<vmem>>) attributes {dimension_semantics = [#tpu.dimension_semantics<parallel>, #tpu.dimension_semantics<arbitrary>], iteration_bounds = array<i64: 2, 3>, scalar_prefetch = 0 : i64, scratch_operands = 2 : i64, tpu.core_type = #tpu.core_type<tc>, window_params = [{transform_indices = @transform_0, window_bounds = array<i64: 1, 1, 256, 100>}, {pipeline_mode = #tpu.pipeline_mode<synchronous>, transform_indices = @transform_1, window_bounds = array<i64: 100, 128>}, {pipeline_mode = #tpu.pipeline_mode<synchronous>, transform_indices = @transform_2, window_bounds = array<i64: 5, 160, 128>}, {pipeline_mode = #tpu.pipeline_mode<synchronous>, transform_indices = @transform_3, window_bounds = array<i64: 1, 128>}, {transform_indices = @transform_4, window_bounds = array<i64: 1, 1, 16, 16, 32>}]} {
    %c0_i32 = arith.constant 0 : i32
    %0 = arith.cmpi eq, %arg1, %c0_i32 : i32
    %1 = arith.extui %0 : i1 to i32
    %c0_i32_0 = arith.constant 0 : i32
    %2 = arith.cmpi ne, %1, %c0_i32_0 : i32
    scf.if %2 {
      %cst_43 = arith.constant 0.000000e+00 : f32
      %77 = vector.broadcast %cst_43 : f32 to vector<20x20x32xf32>
      %c0_44 = arith.constant 0 : index
      %c0_45 = arith.constant 0 : index
      %c0_46 = arith.constant 0 : index
      %78 = vector.load %arg7[%c0_44, %c0_45, %c0_46] : memref<20x20x32xf32, #tpu.memory_space<vmem>>, vector<20x20x32xf32>
      tpu.vector_store %arg7[%c0_44, %c0_45, %c0_46], %77 {strides = array<i32>} : memref<20x20x32xf32, #tpu.memory_space<vmem>>, vector<20x20x32xf32>,
      %cst_47 = arith.constant 0.000000e+00 : f32
      %79 = vector.broadcast %cst_47 : f32 to vector<256x32xf32>
      %c0_48 = arith.constant 0 : index
      %c0_49 = arith.constant 0 : index
      %80 = vector.load %arg8[%c0_48, %c0_49] : memref<256x32xf32, #tpu.memory_space<vmem>>, vector<256x32xf32>
      tpu.vector_store %arg8[%c0_48, %c0_49], %79 {strides = array<i32>} : memref<256x32xf32, #tpu.memory_space<vmem>>, vector<256x32xf32>,
    } else {
    }
    %c0 = arith.constant 0 : index
    %c0_1 = arith.constant 0 : index
    %c0_2 = arith.constant 0 : index
    %c0_3 = arith.constant 0 : index
    %3 = vector.load %arg2[%c0, %c0_1, %c0_2, %c0_3] : memref<1x1x256x100xbf16, #tpu.memory_space<vmem>>, vector<1x1x256x100xbf16>
    %4 = vector.shape_cast %3 : vector<1x1x256x100xbf16> to vector<256x100xbf16>
    %c0_4 = arith.constant 0 : index
    %c0_5 = arith.constant 0 : index
    %5 = vector.load %arg3[%c0_4, %c0_5] : memref<100x128xbf16, #tpu.memory_space<vmem>>, vector<100x128xbf16>
    %cst = arith.constant dense<0.000000e+00> : vector<256x128xf32>
    %6 = tpu.matmul %4, %5, %cst {dimension_numbers = #tpu.dot_dimension_numbers<[1], [0], [0], [1], [0, 0, 1, 1], [], []>} : vector<256x100xbf16>, vector<100x128xbf16>, vector<256x128xf32> -> vector<256x128xf32>
    %c0_6 = arith.constant 0 : index
    %c0_7 = arith.constant 0 : index
    %7 = vector.load %arg5[%c0_6, %c0_7] : memref<1x128xf32, #tpu.memory_space<vmem>>, vector<1x128xf32>
    %8 = vector.broadcast %7 : vector<1x128xf32> to vector<256x128xf32>
    %9 = arith.addf %6, %8 : vector<256x128xf32>
    %c0_8 = arith.constant 0 : index
    %c0_9 = arith.constant 0 : index
    %c0_10 = arith.constant 0 : index
    %10 = vector.load %arg7[%c0_8, %c0_9, %c0_10] : memref<20x20x32xf32, #tpu.memory_space<vmem>>, vector<20x20x32xf32>
    %11 = vector.extract_strided_slice %10 {offsets = [0, 0, 0], sizes = [20, 16, 32], strides = [1, 1, 1]} : vector<20x20x32xf32> to vector<20x16x32xf32>
    %12 = vector.extract_strided_slice %10 {offsets = [0, 1, 0], sizes = [20, 16, 32], strides = [1, 1, 1]} : vector<20x20x32xf32> to vector<20x16x32xf32>
    %13 = vector.extract_strided_slice %10 {offsets = [0, 2, 0], sizes = [20, 16, 32], strides = [1, 1, 1]} : vector<20x20x32xf32> to vector<20x16x32xf32>
    %14 = vector.extract_strided_slice %10 {offsets = [0, 3, 0], sizes = [20, 16, 32], strides = [1, 1, 1]} : vector<20x20x32xf32> to vector<20x16x32xf32>
    %15 = vector.extract_strided_slice %10 {offsets = [0, 4, 0], sizes = [20, 16, 32], strides = [1, 1, 1]} : vector<20x20x32xf32> to vector<20x16x32xf32>
    %16 = tpu.concatenate %11, %12, %13, %14, %15 in 2 : vector<20x16x32xf32>, vector<20x16x32xf32>, vector<20x16x32xf32>, vector<20x16x32xf32>, vector<20x16x32xf32> -> vector<20x16x160xf32>
    %17 = vector.shape_cast %16 : vector<20x16x160xf32> to vector<320x160xf32>
    %18 = arith.truncf %17 : vector<320x160xf32> to vector<320x160xbf16>
    %19 = vector.extract_strided_slice %18 {offsets = [0, 0], sizes = [256, 160], strides = [1, 1]} : vector<320x160xbf16> to vector<256x160xbf16>
    %c0_11 = arith.constant 0 : index
    %c0_12 = arith.constant 0 : index
    %c0_13 = arith.constant 0 : index
    %20 = vector.load %arg4[%c0_11, %c0_12, %c0_13] : memref<5x160x128xbf16, #tpu.memory_space<vmem>>, vector<1x160x128xbf16>
    %21 = vector.shape_cast %20 : vector<1x160x128xbf16> to vector<160x128xbf16>
    %cst_14 = arith.constant dense<0.000000e+00> : vector<256x128xf32>
    %22 = tpu.matmul %19, %21, %cst_14 {dimension_numbers = #tpu.dot_dimension_numbers<[1], [0], [0], [1], [0, 0, 1, 1], [], []>} : vector<256x160xbf16>, vector<160x128xbf16>, vector<256x128xf32> -> vector<256x128xf32>
    %23 = arith.addf %9, %22 : vector<256x128xf32>
    %24 = vector.extract_strided_slice %18 {offsets = [16, 0], sizes = [256, 160], strides = [1, 1]} : vector<320x160xbf16> to vector<256x160xbf16>
    %c1 = arith.constant 1 : index
    %c0_15 = arith.constant 0 : index
    %c0_16 = arith.constant 0 : index
    %25 = vector.load %arg4[%c1, %c0_15, %c0_16] : memref<5x160x128xbf16, #tpu.memory_space<vmem>>, vector<1x160x128xbf16>
    %26 = vector.shape_cast %25 : vector<1x160x128xbf16> to vector<160x128xbf16>
    %cst_17 = arith.constant dense<0.000000e+00> : vector<256x128xf32>
    %27 = tpu.matmul %24, %26, %cst_17 {dimension_numbers = #tpu.dot_dimension_numbers<[1], [0], [0], [1], [0, 0, 1, 1], [], []>} : vector<256x160xbf16>, vector<160x128xbf16>, vector<256x128xf32> -> vector<256x128xf32>
    %28 = arith.addf %23, %27 : vector<256x128xf32>
    %29 = vector.extract_strided_slice %18 {offsets = [32, 0], sizes = [256, 160], strides = [1, 1]} : vector<320x160xbf16> to vector<256x160xbf16>
    %c2 = arith.constant 2 : index
    %c0_18 = arith.constant 0 : index
    %c0_19 = arith.constant 0 : index
    %30 = vector.load %arg4[%c2, %c0_18, %c0_19] : memref<5x160x128xbf16, #tpu.memory_space<vmem>>, vector<1x160x128xbf16>
    %31 = vector.shape_cast %30 : vector<1x160x128xbf16> to vector<160x128xbf16>
    %cst_20 = arith.constant dense<0.000000e+00> : vector<256x128xf32>
    %32 = tpu.matmul %29, %31, %cst_20 {dimension_numbers = #tpu.dot_dimension_numbers<[1], [0], [0], [1], [0, 0, 1, 1], [], []>} : vector<256x160xbf16>, vector<160x128xbf16>, vector<256x128xf32> -> vector<256x128xf32>
    %33 = arith.addf %28, %32 : vector<256x128xf32>
    %34 = vector.extract_strided_slice %18 {offsets = [48, 0], sizes = [256, 160], strides = [1, 1]} : vector<320x160xbf16> to vector<256x160xbf16>
    %c3 = arith.constant 3 : index
    %c0_21 = arith.constant 0 : index
    %c0_22 = arith.constant 0 : index
    %35 = vector.load %arg4[%c3, %c0_21, %c0_22] : memref<5x160x128xbf16, #tpu.memory_space<vmem>>, vector<1x160x128xbf16>
    %36 = vector.shape_cast %35 : vector<1x160x128xbf16> to vector<160x128xbf16>
    %cst_23 = arith.constant dense<0.000000e+00> : vector<256x128xf32>
    %37 = tpu.matmul %34, %36, %cst_23 {dimension_numbers = #tpu.dot_dimension_numbers<[1], [0], [0], [1], [0, 0, 1, 1], [], []>} : vector<256x160xbf16>, vector<160x128xbf16>, vector<256x128xf32> -> vector<256x128xf32>
    %38 = arith.addf %33, %37 : vector<256x128xf32>
    %39 = vector.extract_strided_slice %18 {offsets = [64, 0], sizes = [256, 160], strides = [1, 1]} : vector<320x160xbf16> to vector<256x160xbf16>
    %c4 = arith.constant 4 : index
    %c0_24 = arith.constant 0 : index
    %c0_25 = arith.constant 0 : index
    %40 = vector.load %arg4[%c4, %c0_24, %c0_25] : memref<5x160x128xbf16, #tpu.memory_space<vmem>>, vector<1x160x128xbf16>
    %41 = vector.shape_cast %40 : vector<1x160x128xbf16> to vector<160x128xbf16>
    %cst_26 = arith.constant dense<0.000000e+00> : vector<256x128xf32>
    %42 = tpu.matmul %39, %41, %cst_26 {dimension_numbers = #tpu.dot_dimension_numbers<[1], [0], [0], [1], [0, 0, 1, 1], [], []>} : vector<256x160xbf16>, vector<160x128xbf16>, vector<256x128xf32> -> vector<256x128xf32>
    %43 = arith.addf %38, %42 : vector<256x128xf32>
    %44 = tpu.iota {dimensions = array<i32: 1>} : vector<256x128xi32>
    %c96_i32 = arith.constant 96 : i32
    %45 = vector.broadcast %c96_i32 : i32 to vector<256x128xi32>
    %46 = arith.cmpi sge, %44, %45 : vector<256x128xi32>
    %cst_27 = arith.constant 2.000000e+00 : f32
    %47 = vector.broadcast %cst_27 : f32 to vector<256x128xf32>
    %48 = arith.mulf %47, %43 : vector<256x128xf32>
    %49 = arith.select %46, %48, %43 : vector<256x128xi1>, vector<256x128xf32>
    %50 = arith.negf %49 : vector<256x128xf32>
    %51 = math.exp %50 : vector<256x128xf32>
    %cst_28 = arith.constant 1.000000e+00 : f32
    %52 = vector.broadcast %cst_28 : f32 to vector<256x128xf32>
    %53 = arith.addf %52, %51 : vector<256x128xf32>
    %54 = arith.divf %52, %53 : vector<256x128xf32>
    %cst_29 = arith.constant 2.000000e+00 : f32
    %55 = vector.broadcast %cst_29 : f32 to vector<256x128xf32>
    %56 = arith.mulf %55, %54 : vector<256x128xf32>
    %cst_30 = arith.constant 1.000000e+00 : f32
    %57 = vector.broadcast %cst_30 : f32 to vector<256x128xf32>
    %58 = arith.subf %56, %57 : vector<256x128xf32>
    %59 = arith.select %46, %58, %54 : vector<256x128xi1>, vector<256x128xf32>
    %60 = vector.extract_strided_slice %59 {offsets = [0, 0], sizes = [256, 32], strides = [1, 1]} : vector<256x128xf32> to vector<256x32xf32>
    %61 = vector.extract_strided_slice %59 {offsets = [0, 32], sizes = [256, 32], strides = [1, 1]} : vector<256x128xf32> to vector<256x32xf32>
    %62 = vector.extract_strided_slice %59 {offsets = [0, 64], sizes = [256, 32], strides = [1, 1]} : vector<256x128xf32> to vector<256x32xf32>
    %63 = vector.extract_strided_slice %59 {offsets = [0, 96], sizes = [256, 32], strides = [1, 1]} : vector<256x128xf32> to vector<256x32xf32>
    %c0_31 = arith.constant 0 : index
    %c0_32 = arith.constant 0 : index
    %64 = vector.load %arg8[%c0_31, %c0_32] : memref<256x32xf32, #tpu.memory_space<vmem>>, vector<256x32xf32>
    %65 = arith.mulf %64, %61 : vector<256x32xf32>
    %66 = arith.mulf %60, %63 : vector<256x32xf32>
    %67 = arith.addf %65, %66 : vector<256x32xf32>
    %68 = math.tanh %67 : vector<256x32xf32>
    %69 = arith.mulf %62, %68 : vector<256x32xf32>
    %c0_33 = arith.constant 0 : index
    %c0_34 = arith.constant 0 : index
    %70 = vector.load %arg8[%c0_33, %c0_34] : memref<256x32xf32, #tpu.memory_space<vmem>>, vector<256x32xf32>
    tpu.vector_store %arg8[%c0_33, %c0_34], %67 {strides = array<i32>} : memref<256x32xf32, #tpu.memory_space<vmem>>, vector<256x32xf32>,
    %71 = vector.shape_cast %69 : vector<256x32xf32> to vector<16x16x32xf32>
    %c2_35 = arith.constant 2 : index
    %c2_36 = arith.constant 2 : index
    %c0_37 = arith.constant 0 : index
    %72 = vector.load %arg7[%c2_35, %c2_36, %c0_37] : memref<20x20x32xf32, #tpu.memory_space<vmem>>, vector<16x16x32xf32>
    tpu.vector_store %arg7[%c2_35, %c2_36, %c0_37], %71 {strides = array<i32>} : memref<20x20x32xf32, #tpu.memory_space<vmem>>, vector<16x16x32xf32>,
    %73 = vector.shape_cast %69 : vector<256x32xf32> to vector<16x16x32xf32>
    %c0_38 = arith.constant 0 : index
    %c0_39 = arith.constant 0 : index
    %c0_40 = arith.constant 0 : index
    %c0_41 = arith.constant 0 : index
    %c0_42 = arith.constant 0 : index
    %74 = vector.load %arg6[%c0_38, %c0_39, %c0_40, %c0_41, %c0_42] : memref<1x1x16x16x32xf32, #tpu.memory_space<vmem>>, vector<1x1x16x16x32xf32>
    %75 = vector.shape_cast %74 : vector<1x1x16x16x32xf32> to vector<16x16x32xf32>
    %76 = vector.shape_cast %73 : vector<16x16x32xf32> to vector<1x1x16x16x32xf32>
    tpu.vector_store %arg6[%c0_38, %c0_39, %c0_40, %c0_41, %c0_42], %76 {strides = array<i32>} : memref<1x1x16x16x32xf32, #tpu.memory_space<vmem>>, vector<1x1x16x16x32xf32>,
    return
  }
  func.func @transform_0(%arg0: i32, %arg1: i32) -> (i32, i32, i32, i32) {
    %c0_i32 = arith.constant 0 : i32
    %c0_i32_0 = arith.constant 0 : i32
    %c0_i32_1 = arith.constant 0 : i32
    return %arg0, %arg1, %c0_i32, %c0_i32_0 : i32, i32, i32, i32
  }
  func.func @transform_1(%arg0: i32, %arg1: i32) -> (i32, i32) {
    %c0_i32 = arith.constant 0 : i32
    %c0_i32_0 = arith.constant 0 : i32
    %c0_i32_1 = arith.constant 0 : i32
    return %c0_i32, %c0_i32_0 : i32, i32
  }
  func.func @transform_2(%arg0: i32, %arg1: i32) -> (i32, i32, i32) {
    %c0_i32 = arith.constant 0 : i32
    %c0_i32_0 = arith.constant 0 : i32
    %c0_i32_1 = arith.constant 0 : i32
    %c0_i32_2 = arith.constant 0 : i32
    return %c0_i32, %c0_i32_0, %c0_i32_1 : i32, i32, i32
  }
  func.func @transform_3(%arg0: i32, %arg1: i32) -> (i32, i32) {
    %c0_i32 = arith.constant 0 : i32
    %c0_i32_0 = arith.constant 0 : i32
    %c0_i32_1 = arith.constant 0 : i32
    return %c0_i32, %c0_i32_0 : i32, i32
  }
  func.func @transform_4(%arg0: i32, %arg1: i32) -> (i32, i32, i32, i32, i32) {
    %c0_i32 = arith.constant 0 : i32
    %c0_i32_0 = arith.constant 0 : i32
    %c0_i32_1 = arith.constant 0 : i32
    %c0_i32_2 = arith.constant 0 : i32
    return %arg0, %arg1, %c0_i32, %c0_i32_0, %c0_i32_1 : i32, i32, i32, i32, i32
  }
}

</mosaic_0001>

<llo_original>
// kernel: clstm_forward.1
$region0: #{clstm_forward.1}
  #allocation0 [shape = 'u32[]', space=smem, size = 0x4, offset = 0x4, fixed_abs, tag = 'smem constant byte address 0x4 - core index']
  #allocation1 [shape = 'u32[72,128]{1,0:T(1,128)}', space=vmem, size = 0x9000, scoped, tag = 'internal scratch']
  #allocation2 [shape = 'f32[20,20,32]{2,1,0:T(8,128)}', space=vmem, size = 0x3c000, scoped, tag = 'scratch operand']
  #allocation3 [shape = 'f32[256,32]{1,0:T(8,128)}', space=vmem, size = 0x20000, scoped, tag = 'scratch operand']
  %s0 = inlined_call_operand.vmem [shape: bf16[2,3,256,100], index: 0, kind: input, shape index: {}]
  %s1 = inlined_call_operand.vmem [shape: bf16[100,128], index: 1, kind: input, shape index: {}]
  %s2 = inlined_call_operand.vmem [shape: bf16[5,160,128], index: 2, kind: input, shape index: {}]
  %s3 = inlined_call_operand.vmem [shape: f32[1,128], index: 3, kind: input, shape index: {}]
  %s4 = inlined_call_operand.vmem [shape: f32[2,3,16,16,32], index: 4, kind: output, shape index: {}]
  %s5 = sld [smem:[#allocation0]]
  $region53: #{clstm_forward.1} parent=0
    _
  %s7 = ssub.s32 1, %s5
  %s8 = scalar_select 0, %s7, %s5
  loop: start=0, step=1, limit=8
  $region2: #{clstm_forward.1} parent=0 // loop_pre_header
    _
  $region3: #{clstm_forward.1} parent=0 // loop_header
    %s10 = sphi 0, %s14
    %p11 = scmp.ge.s32.totalorder %s10, 8
    %s17 = sphi 0, %s29
    %s18 = sphi 0, %s25
    %s19 = sphi 0, %s17
    %s20 = sphi 0, %s18
    %s21 = sphi 0, %s19
    %s22 = sphi 0, %s20
    %s34 = sphi 0, %s36
    %s37 = sphi 0, %s34
    %s38 = sphi 0, %s37
    %s54 = sphi 0, %s38
    %s58 = sphi 0, %s58
    %s60 = sphi 0, %s58
    %s61 = sphi 0, %s60
    %s75 = sphi 0, %s61
    %s79 = sphi 0, %s79
    %s81 = sphi 0, %s79
    %s82 = sphi 0, %s81
    %s96 = sphi 0, %s82
    %s100 = sphi 0, %s100
    %s102 = sphi 0, %s100
    %s103 = sphi 0, %s102
    %s117 = sphi 0, %s103
    %s125 = sphi 0, %s127
    %s128 = sphi 0, %s125
    %s129 = sphi 0, %s128
    %s145 = sphi 0, %s129
  $region4: #{clstm_forward.1} parent=0 // loop_header_branch
    %13 = sbr.rel (%p11) target = $region8
  $region5: #{clstm_forward.1} parent=0 // loop_body
    %s15 = ssub.s32 %s10, 1
    %s16 = ssub.s32 %s10, 2
    %s23 = sadd.s32 1, %s18
    %p24 = scmp.ge.s32.totalorder %s23, 3
    %s25 = scalar_select %p24, 0, %s23
    %s26 = sadd.s32 1, %s17
    %s27 = scalar_select %p24, %s26, %s17
    %p28 = scmp.ge.s32.totalorder %s27, 2
    %s29 = scalar_select %p28, 0, %s27
    %s30 = ssub.s32 %s17, %s29
    %s31 = ssub.s32 %s18, %s25
    %s32 = sor.u32 %s30, %s31
    %p33 = scmp.eq.s32.totalorder %s32, 0
    %s35 = sadd.s32 %s34, 1
    %s36 = scalar_select %p33, %s34, %s35
    %p39 = pneg %p33
    %p40 = scmp.eq.s32.totalorder %s10, 5
    %p41 = por %p39, %p40
    %p42 = scmp.ne.s32.totalorder %s34, %s37
    %p43 = scmp.eq.s32.totalorder %s10, 0
    %p44 = por %p42, %p43
    %p45 = scmp.ne.s32.totalorder %s34, %s37
    %p46 = scmp.eq.s32.totalorder %s15, 5
    %p47 = por %p45, %p46
    %p48 = scmp.ne.s32.totalorder %s37, %s38
    %p49 = scmp.eq.s32.totalorder %s15, 0
    %p50 = por %p48, %p49
    %p51 = scmp.ne.s32.totalorder %s37, %s38
    %p52 = scmp.eq.s32.totalorder %s16, 5
    %p53 = por %p51, %p52
    %p55 = scmp.ne.s32.totalorder %s38, %s54
    %p56 = scmp.eq.s32.totalorder %s16, 0
    %p57 = por %p55, %p56
    %s59 = sadd.s32 %s58, 1
    %p62 = scmp.eq.s32.totalorder %s10, 5
    %p63 = scmp.ne.s32.totalorder %s58, %s60
    %p64 = scmp.eq.s32.totalorder %s10, 0
    %p65 = por %p63, %p64
    %p66 = scmp.ne.s32.totalorder %s58, %s60
    %p67 = scmp.eq.s32.totalorder %s15, 5
    %p68 = por %p66, %p67
    %p69 = scmp.ne.s32.totalorder %s60, %s61
    %p70 = scmp.eq.s32.totalorder %s15, 0
    %p71 = por %p69, %p70
    %p72 = scmp.ne.s32.totalorder %s60, %s61
    %p73 = scmp.eq.s32.totalorder %s16, 5
    %p74 = por %p72, %p73
    %p76 = scmp.ne.s32.totalorder %s61, %s75
    %p77 = scmp.eq.s32.totalorder %s16, 0
    %p78 = por %p76, %p77
    %s80 = sadd.s32 %s79, 1
    %p83 = scmp.eq.s32.totalorder %s10, 5
    %p84 = scmp.ne.s32.totalorder %s79, %s81
    %p85 = scmp.eq.s32.totalorder %s10, 0
    %p86 = por %p84, %p85
    %p87 = scmp.ne.s32.totalorder %s79, %s81
    %p88 = scmp.eq.s32.totalorder %s15, 5
    %p89 = por %p87, %p88
    %p90 = scmp.ne.s32.totalorder %s81, %s82
    %p91 = scmp.eq.s32.totalorder %s15, 0
    %p92 = por %p90, %p91
    %p93 = scmp.ne.s32.totalorder %s81, %s82
    %p94 = scmp.eq.s32.totalorder %s16, 5
    %p95 = por %p93, %p94
    %p97 = scmp.ne.s32.totalorder %s82, %s96
    %p98 = scmp.eq.s32.totalorder %s16, 0
    %p99 = por %p97, %p98
    %s101 = sadd.s32 %s100, 1
    %p104 = scmp.eq.s32.totalorder %s10, 5
    %p105 = scmp.ne.s32.totalorder %s100, %s102
    %p106 = scmp.eq.s32.totalorder %s10, 0
    %p107 = por %p105, %p106
    %p108 = scmp.ne.s32.totalorder %s100, %s102
    %p109 = scmp.eq.s32.totalorder %s15, 5
    %p110 = por %p108, %p109
    %p111 = scmp.ne.s32.totalorder %s102, %s103
    %p112 = scmp.eq.s32.totalorder %s15, 0
    %p113 = por %p111, %p112
    %p114 = scmp.ne.s32.totalorder %s102, %s103
    %p115 = scmp.eq.s32.totalorder %s16, 5
    %p116 = por %p114, %p115
    %p118 = scmp.ne.s32.totalorder %s103, %s117
    %p119 = scmp.eq.s32.totalorder %s16, 0
    %p120 = por %p118, %p119
    %s121 = ssub.s32 %s17, %s29
    %s122 = ssub.s32 %s18, %s25
    %s123 = sor.u32 %s121, %s122
    %p124 = scmp.eq.s32.totalorder %s123, 0
    %s126 = sadd.s32 %s125, 1
    %s127 = scalar_select %p124, %s125, %s126
    %p130 = pneg %p124
    %p131 = scmp.eq.s32.totalorder %s10, 5
    %p132 = por %p130, %p131
    %p133 = scmp.ne.s32.totalorder %s125, %s128
    %p134 = scmp.eq.s32.totalorder %s10, 0
    %p135 = por %p133, %p134
    %p136 = scmp.ne.s32.totalorder %s125, %s128
    %p137 = scmp.eq.s32.totalorder %s15, 5
    %p138 = por %p136, %p137
    %p139 = scmp.ne.s32.totalorder %s128, %s129
    %p140 = scmp.eq.s32.totalorder %s15, 0
    %p141 = por %p139, %p140
    %p142 = scmp.ne.s32.totalorder %s128, %s129
    %p143 = scmp.eq.s32.totalorder %s16, 5
    %p144 = por %p142, %p143
    %p146 = scmp.ne.s32.totalorder %s129, %s145
    %p147 = scmp.eq.s32.totalorder %s16, 0
    %p148 = por %p146, %p147
    %p149 = scmp.le.s32.totalorder 1, %s10
    %p150 = scmp.lt.s32.totalorder %s10, 7
    %p151 = pnand %p149, %p150
    %p152 = pneg %p151
    // Predicated region
    $region9: #{clstm_forward.1} parent=5 // pred_check
      _
    $region10: #{clstm_forward.1} parent=5 // pred_check_branch
      %154 = sbr.rel (%p151) target = $region12
    $region11: #{clstm_forward.1} parent=5 // pred_region
      %s155 = ssub.s32 %s10, 1
      // Predicated region
      $region13: #{clstm_forward.1} parent=11 // pred_check
        %p156 = pneg %p71
      $region14: #{clstm_forward.1} parent=11 // pred_check_branch
        %158 = sbr.rel (%p156) target = $region16
      $region15: #{clstm_forward.1} parent=11 // pred_region
        _
      $region16: #{clstm_forward.1} parent=11 // pred_fallthru
        _
      // Predicated region
      $region17: #{clstm_forward.1} parent=11 // pred_check
        %p159 = pneg %p92
      $region18: #{clstm_forward.1} parent=11 // pred_check_branch
        %161 = sbr.rel (%p159) target = $region20
      $region19: #{clstm_forward.1} parent=11 // pred_region
        _
      $region20: #{clstm_forward.1} parent=11 // pred_fallthru
        _
      // Predicated region
      $region21: #{clstm_forward.1} parent=11 // pred_check
        %p162 = pneg %p113
      $region22: #{clstm_forward.1} parent=11 // pred_check_branch
        %164 = sbr.rel (%p162) target = $region24
      $region23: #{clstm_forward.1} parent=11 // pred_region
        _
      $region24: #{clstm_forward.1} parent=11 // pred_fallthru
        _
    $region12: #{clstm_forward.1} parent=5 // pred_fallthru
      _
    %p165 = scmp.lt.s32.totalorder %s10, 6
    // Predicated region
    $region25: #{clstm_forward.1} parent=5 // pred_check
      %p166 = pneg %p165
    $region26: #{clstm_forward.1} parent=5 // pred_check_branch
      %168 = sbr.rel (%p166) target = $region28
    $region27: #{clstm_forward.1} parent=5 // pred_region
      // Predicated region
      $region29: #{clstm_forward.1} parent=27 // pred_check
        %p169 = pneg %p44
      $region30: #{clstm_forward.1} parent=27 // pred_check_branch
        %171 = sbr.rel (%p169) target = $region32
      $region31: #{clstm_forward.1} parent=27 // pred_region
        %p172 = scmp.lt.s32.totalorder %s17, 1
        %s173 = scalar_select %p172, %s17, 1
        %p174 = scmp.lt.s32.totalorder %s18, 2
        %s175 = scalar_select %p174, %s18, 2
        %s176 = smul.addr %s175, 32
        %s177 = smul.addr %s173, 96
        %s178 = sadd.s32 %s176, %s177
        %s179 = smul.addr %s178, 4
        %s180 = scalar_lea.vmem %s0, %s179
      $region32: #{clstm_forward.1} parent=27 // pred_fallthru
        _
    $region28: #{clstm_forward.1} parent=5 // pred_fallthru
      _
    %p181 = scmp.le.s32.totalorder 1, %s10
    %p182 = scmp.lt.s32.totalorder %s10, 7
    %p183 = pnand %p181, %p182
    %p184 = pneg %p183
    // Predicated region
    $region33: #{clstm_forward.1} parent=5 // pred_check
      _
    $region34: #{clstm_forward.1} parent=5 // pred_check_branch
      %186 = sbr.rel (%p183) target = $region36
    $region35: #{clstm_forward.1} parent=5 // pred_region
      %s187 = ssub.s32 %s10, 1
      %p188 = scmp.lt.s32.totalorder %s19, 1
      %s189 = scalar_select %p188, %s19, 1
      %p190 = scmp.lt.s32.totalorder %s20, 2
      %s191 = scalar_select %p190, %s20, 2
      %s192 = smul.addr %s191, 32
      %s193 = smul.addr %s189, 96
      %s194 = sadd.s32 %s192, %s193
      %s195 = smul.addr %s194, 4
      %s196 = scalar_lea.vmem %s0, %s195
      %p197 = pneg %p50
      %p198 = pneg %p47
      %p199 = pneg %p71
      %p200 = pneg %p68
      %p201 = pneg %p92
      %p202 = pneg %p89
      %p203 = pneg %p113
      %p204 = pneg %p110
      %p205 = pneg %p141
      %p206 = pneg %p138
      %p207 = scmp.lt.s32.totalorder %s19, 1
      %s208 = scalar_select %p207, %s19, 1
      %p209 = scmp.lt.s32.totalorder %s20, 2
      %s210 = scalar_select %p209, %s20, 2
      %s211 = smul.addr %s210, 32
      %s212 = smul.addr %s208, 96
      %s213 = sadd.s32 %s211, %s212
      %s214 = smul.addr %s213, 8
      %s215 = scalar_lea.vmem %s4, %s214
      %p216 = scmp.lt.s32.totalorder %s19, 1
      %s217 = scalar_select %p216, %s19, 1
      %p218 = scmp.lt.s32.totalorder %s20, 2
      %s219 = scalar_select %p218, %s20, 2
      %s220 = smul.addr %s219, 32
      %s221 = smul.addr %s217, 96
      %s222 = sadd.s32 %s220, %s221
      %s223 = smul.addr %s222, 4
      %s224 = scalar_lea.vmem %s0, %s223
      %p225 = scmp.lt.s32.totalorder %s19, 1
      %s226 = scalar_select %p225, %s19, 1
      %p227 = scmp.lt.s32.totalorder %s20, 2
      %s228 = scalar_select %p227, %s20, 2
      %s229 = smul.addr %s228, 32
      %s230 = smul.addr %s226, 96
      %s231 = sadd.s32 %s229, %s230
      %s232 = smul.addr %s231, 8
      %s233 = scalar_lea.vmem %s4, %s232
      %p235 = scmp.eq.s32.totalorder %s20, 0
      // Predicated region
      $region37: #{clstm_forward.1} parent=35 // pred_check
        %p236 = pneg %p235
      $region38: #{clstm_forward.1} parent=35 // pred_check_branch
        %238 = sbr.rel (%p236) target = $region40
      $region39: #{clstm_forward.1} parent=35 // pred_region
        %vm239 = vcmask 261120
        %240 = vst.msk [vmem:[#allocation2] sm:$0xff] %vm239, 0.0
        %241 = vst.msk [vmem:[#allocation2 + $0x8] sm:$0xff] %vm239, 0.0
        %vm242 = vcmask 257024
        %243 = vst.msk [vmem:[#allocation2 + $0x10] sm:$0xf] %vm242, 0.0
        %244 = vst.msk [vmem:[#allocation2 + $0x18] sm:$0xff] %vm239, 0.0
        %245 = vst.msk [vmem:[#allocation2 + $0x20] sm:$0xff] %vm239, 0.0
        %246 = vst.msk [vmem:[#allocation2 + $0x28] sm:$0xf] %vm242, 0.0
        %247 = vst.msk [vmem:[#allocation2 + $0x30] sm:$0xff] %vm239, 0.0
        %248 = vst.msk [vmem:[#allocation2 + $0x38] sm:$0xff] %vm239, 0.0
        %249 = vst.msk [vmem:[#allocation2 + $0x40] sm:$0xf] %vm242, 0.0
        %250 = vst.msk [vmem:[#allocation2 + $0x48] sm:$0xff] %vm239, 0.0
        %251 = vst.msk [vmem:[#allocation2 + $0x50] sm:$0xff] %vm239, 0.0
        %252 = vst.msk [vmem:[#allocation2 + $0x58] sm:$0xf] %vm242, 0.0
        %253 = vst.msk [vmem:[#allocation2 + $0x60] sm:$0xff] %vm239, 0.0
        %254 = vst.msk [vmem:[#allocation2 + $0x68] sm:$0xff] %vm239, 0.0
        %255 = vst.msk [vmem:[#allocation2 + $0x70] sm:$0xf] %vm242, 0.0
        %256 = vst.msk [vmem:[#allocation2 + $0x78] sm:$0xff] %vm239, 0.0
        %257 = vst.msk [vmem:[#allocation2 + $0x80] sm:$0xff] %vm239, 0.0
        %258 = vst.msk [vmem:[#allocation2 + $0x88] sm:$0xf] %vm242, 0.0
        %259 = vst.msk [vmem:[#allocation2 + $0x90] sm:$0xff] %vm239, 0.0
        %260 = vst.msk [vmem:[#allocation2 + $0x98] sm:$0xff] %vm239, 0.0
        %261 = vst.msk [vmem:[#allocation2 + $0xa0] sm:$0xf] %vm242, 0.0
        %262 = vst.msk [vmem:[#allocation2 + $0xa8] sm:$0xff] %vm239, 0.0
        %263 = vst.msk [vmem:[#allocation2 + $0xb0] sm:$0xff] %vm239, 0.0
        %264 = vst.msk [vmem:[#allocation2 + $0xb8] sm:$0xf] %vm242, 0.0
        %265 = vst.msk [vmem:[#allocation2 + $0xc0] sm:$0xff] %vm239, 0.0
        %266 = vst.msk [vmem:[#allocation2 + $0xc8] sm:$0xff] %vm239, 0.0
        %267 = vst.msk [vmem:[#allocation2 + $0xd0] sm:$0xf] %vm242, 0.0
        %268 = vst.msk [vmem:[#allocation2 + $0xd8] sm:$0xff] %vm239, 0.0
        %269 = vst.msk [vmem:[#allocation2 + $0xe0] sm:$0xff] %vm239, 0.0
        %270 = vst.msk [vmem:[#allocation2 + $0xe8] sm:$0xf] %vm242, 0.0
        %271 = vst.msk [vmem:[#allocation2 + $0xf0] sm:$0xff] %vm239, 0.0
        %272 = vst.msk [vmem:[#allocation2 + $0xf8] sm:$0xff] %vm239, 0.0
        %273 = vst.msk [vmem:[#allocation2 + $0x100] sm:$0xf] %vm242, 0.0
        %274 = vst.msk [vmem:[#allocation2 + $0x108] sm:$0xff] %vm239, 0.0
        %275 = vst.msk [vmem:[#allocation2 + $0x110] sm:$0xff] %vm239, 0.0
        %276 = vst.msk [vmem:[#allocation2 + $0x118] sm:$0xf] %vm242, 0.0
        %277 = vst.msk [vmem:[#allocation2 + $0x120] sm:$0xff] %vm239, 0.0
        %278 = vst.msk [vmem:[#allocation2 + $0x128] sm:$0xff] %vm239, 0.0
        %279 = vst.msk [vmem:[#allocation2 + $0x130] sm:$0xf] %vm242, 0.0
        %280 = vst.msk [vmem:[#allocation2 + $0x138] sm:$0xff] %vm239, 0.0
        %281 = vst.msk [vmem:[#allocation2 + $0x140] sm:$0xff] %vm239, 0.0
        %282 = vst.msk [vmem:[#allocation2 + $0x148] sm:$0xf] %vm242, 0.0
        %283 = vst.msk [vmem:[#allocation2 + $0x150] sm:$0xff] %vm239, 0.0
        %284 = vst.msk [vmem:[#allocation2 + $0x158] sm:$0xff] %vm239, 0.0
        %285 = vst.msk [vmem:[#allocation2 + $0x160] sm:$0xf] %vm242, 0.0
        %286 = vst.msk [vmem:[#allocation2 + $0x168] sm:$0xff] %vm239, 0.0
        %287 = vst.msk [vmem:[#allocation2 + $0x170] sm:$0xff] %vm239, 0.0
        %288 = vst.msk [vmem:[#allocation2 + $0x178] sm:$0xf] %vm242, 0.0
        %289 = vst.msk [vmem:[#allocation2 + $0x180] sm:$0xff] %vm239, 0.0
        %290 = vst.msk [vmem:[#allocation2 + $0x188] sm:$0xff] %vm239, 0.0
        %291 = vst.msk [vmem:[#allocation2 + $0x190] sm:$0xf] %vm242, 0.0
        %292 = vst.msk [vmem:[#allocation2 + $0x198] sm:$0xff] %vm239, 0.0
        %293 = vst.msk [vmem:[#allocation2 + $0x1a0] sm:$0xff] %vm239, 0.0
        %294 = vst.msk [vmem:[#allocation2 + $0x1a8] sm:$0xf] %vm242, 0.0
        %295 = vst.msk [vmem:[#allocation2 + $0x1b0] sm:$0xff] %vm239, 0.0
        %296 = vst.msk [vmem:[#allocation2 + $0x1b8] sm:$0xff] %vm239, 0.0
        %297 = vst.msk [vmem:[#allocation2 + $0x1c0] sm:$0xf] %vm242, 0.0
        %298 = vst.msk [vmem:[#allocation2 + $0x1c8] sm:$0xff] %vm239, 0.0
        %299 = vst.msk [vmem:[#allocation2 + $0x1d0] sm:$0xff] %vm239, 0.0
        %300 = vst.msk [vmem:[#allocation2 + $0x1d8] sm:$0xf] %vm242, 0.0
        %301 = vst.msk [vmem:[#allocation3] sm:$0xff] %vm239, 0.0
        %302 = vst.msk [vmem:[#allocation3 + $0x8] sm:$0xff] %vm239, 0.0
        %303 = vst.msk [vmem:[#allocation3 + $0x10] sm:$0xff] %vm239, 0.0
        %304 = vst.msk [vmem:[#allocation3 + $0x18] sm:$0xff] %vm239, 0.0
        %305 = vst.msk [vmem:[#allocation3 + $0x20] sm:$0xff] %vm239, 0.0
        %306 = vst.msk [vmem:[#allocation3 + $0x28] sm:$0xff] %vm239, 0.0
        %307 = vst.msk [vmem:[#allocation3 + $0x30] sm:$0xff] %vm239, 0.0
        %308 = vst.msk [vmem:[#allocation3 + $0x38] sm:$0xff] %vm239, 0.0
        %309 = vst.msk [vmem:[#allocation3 + $0x40] sm:$0xff] %vm239, 0.0
        %310 = vst.msk [vmem:[#allocation3 + $0x48] sm:$0xff] %vm239, 0.0
        %311 = vst.msk [vmem:[#allocation3 + $0x50] sm:$0xff] %vm239, 0.0
        %312 = vst.msk [vmem:[#allocation3 + $0x58] sm:$0xff] %vm239, 0.0
        %313 = vst.msk [vmem:[#allocation3 + $0x60] sm:$0xff] %vm239, 0.0
        %314 = vst.msk [vmem:[#allocation3 + $0x68] sm:$0xff] %vm239, 0.0
        %315 = vst.msk [vmem:[#allocation3 + $0x70] sm:$0xff] %vm239, 0.0
        %316 = vst.msk [vmem:[#allocation3 + $0x78] sm:$0xff] %vm239, 0.0
        %317 = vst.msk [vmem:[#allocation3 + $0x80] sm:$0xff] %vm239, 0.0
        %318 = vst.msk [vmem:[#allocation3 + $0x88] sm:$0xff] %vm239, 0.0
        %319 = vst.msk [vmem:[#allocation3 + $0x90] sm:$0xff] %vm239, 0.0
        %320 = vst.msk [vmem:[#allocation3 + $0x98] sm:$0xff] %vm239, 0.0
        %321 = vst.msk [vmem:[#allocation3 + $0xa0] sm:$0xff] %vm239, 0.0
        %322 = vst.msk [vmem:[#allocation3 + $0xa8] sm:$0xff] %vm239, 0.0
        %323 = vst.msk [vmem:[#allocation3 + $0xb0] sm:$0xff] %vm239, 0.0
        %324 = vst.msk [vmem:[#allocation3 + $0xb8] sm:$0xff] %vm239, 0.0
        %325 = vst.msk [vmem:[#allocation3 + $0xc0] sm:$0xff] %vm239, 0.0
        %326 = vst.msk [vmem:[#allocation3 + $0xc8] sm:$0xff] %vm239, 0.0
        %327 = vst.msk [vmem:[#allocation3 + $0xd0] sm:$0xff] %vm239, 0.0
        %328 = vst.msk [vmem:[#allocation3 + $0xd8] sm:$0xff] %vm239, 0.0
        %329 = vst.msk [vmem:[#allocation3 + $0xe0] sm:$0xff] %vm239, 0.0
        %330 = vst.msk [vmem:[#allocation3 + $0xe8] sm:$0xff] %vm239, 0.0
        %331 = vst.msk [vmem:[#allocation3 + $0xf0] sm:$0xff] %vm239, 0.0
        %332 = vst.msk [vmem:[#allocation3 + $0xf8] sm:$0xff] %vm239, 0.0
      $region40: #{clstm_forward.1} parent=35 // pred_fallthru
        _
      %v333 = vld [vmem:[%s224] sm:$0xf]
      %v334 = vld [vmem:[%s224 + $0x4] sm:$0xf]
      %v335 = vld [vmem:[%s224 + $0x8] sm:$0xf]
      %v336 = vld [vmem:[%s224 + $0xc] sm:$0xf]
      %v337 = vld [vmem:[%s224 + $0x10] sm:$0xf]
      %v338 = vld [vmem:[%s224 + $0x14] sm:$0xf]
      %v339 = vld [vmem:[%s224 + $0x18] sm:$0xf]
      %v340 = vld [vmem:[%s224 + $0x1c] sm:$0xf]
      %v341 = vld [vmem:[%s224 + $0x20] sm:$0xf]
      %v342 = vld [vmem:[%s224 + $0x24] sm:$0xf]
      %v343 = vld [vmem:[%s224 + $0x28] sm:$0xf]
      %v344 = vld [vmem:[%s224 + $0x2c] sm:$0xf]
      %v345 = vld [vmem:[%s224 + $0x30] sm:$0xf]
      %v346 = vld [vmem:[%s224 + $0x34] sm:$0xf]
      %v347 = vld [vmem:[%s224 + $0x38] sm:$0xf]
      %v348 = vld [vmem:[%s224 + $0x3c] sm:$0xf]
      %v349 = vld [vmem:[%s224 + $0x40] sm:$0xf]
      %v350 = vld [vmem:[%s224 + $0x44] sm:$0xf]
      %v351 = vld [vmem:[%s224 + $0x48] sm:$0xf]
      %v352 = vld [vmem:[%s224 + $0x4c] sm:$0xf]
      %v353 = vld [vmem:[%s224 + $0x50] sm:$0xf]
      %v354 = vld [vmem:[%s224 + $0x54] sm:$0xf]
      %v355 = vld [vmem:[%s224 + $0x58] sm:$0xf]
      %v356 = vld [vmem:[%s224 + $0x5c] sm:$0xf]
      %v357 = vld [vmem:[%s224 + $0x60] sm:$0xf]
      %v358 = vld [vmem:[%s224 + $0x64] sm:$0xf]
      %v359 = vld [vmem:[%s224 + $0x68] sm:$0xf]
      %v360 = vld [vmem:[%s224 + $0x6c] sm:$0xf]
      %v361 = vld [vmem:[%s224 + $0x70] sm:$0xf]
      %v362 = vld [vmem:[%s224 + $0x74] sm:$0xf]
      %v363 = vld [vmem:[%s224 + $0x78] sm:$0xf]
      %v364 = vld [vmem:[%s224 + $0x7c] sm:$0xf]
      %v365 = vld [vmem:[%s1] sm:$0xf]
      %v366 = vld [vmem:[%s1 + $0x4] sm:$0xf]
      %v367 = vld [vmem:[%s1 + $0x8] sm:$0xf]
      %v368 = vld [vmem:[%s1 + $0xc] sm:$0xf]
      %v369 = vld [vmem:[%s1 + $0x10] sm:$0xf]
      %v370 = vld [vmem:[%s1 + $0x14] sm:$0xf]
      %v371 = vld [vmem:[%s1 + $0x18] sm:$0xf]
      %v372 = vld [vmem:[%s1 + $0x1c] sm:$0xf]
      %v373 = vld [vmem:[%s1 + $0x20] sm:$0xf]
      %v374 = vld [vmem:[%s1 + $0x24] sm:$0xf]
      %v375 = vld [vmem:[%s1 + $0x28] sm:$0xf]
      %v376 = vld [vmem:[%s1 + $0x2c] sm:$0xf]
      %v377 = vld [vmem:[%s1 + $0x30] sm:$0x3]
      %v378 = vld [vmem:[%s3] sm:$0x1]
      %v380 = vperm.slane %v378, 0
      %v414 = vunpack.c.l.b16 %v333
      %v415 = vunpack.c.l.b16 %v334
      %v416 = vunpack.c.l.b16 %v335
      %v417 = vunpack.c.l.b16 %v336
      %v418 = vunpack.c.l.b16 %v337
      %v419 = vunpack.c.l.b16 %v338
      %v420 = vunpack.c.l.b16 %v339
      %v421 = vunpack.c.l.b16 %v340
      %v422 = vunpack.c.l.b16 %v341
      %v423 = vunpack.c.l.b16 %v342
      %v424 = vunpack.c.l.b16 %v343
      %v425 = vunpack.c.l.b16 %v344
      %v426 = vunpack.c.l.b16 %v345
      %v427 = vunpack.c.l.b16 %v346
      %v428 = vunpack.c.l.b16 %v347
      %v429 = vunpack.c.l.b16 %v348
      %v430 = vunpack.c.l.b16 %v349
      %v431 = vunpack.c.l.b16 %v350
      %v432 = vunpack.c.l.b16 %v351
      %v433 = vunpack.c.l.b16 %v352
      %v434 = vunpack.c.l.b16 %v353
      %v435 = vunpack.c.l.b16 %v354
      %v436 = vunpack.c.l.b16 %v355
      %v437 = vunpack.c.l.b16 %v356
      %v438 = vunpack.c.l.b16 %v357
      %v439 = vunpack.c.l.b16 %v358
      %v440 = vunpack.c.l.b16 %v359
      %v441 = vunpack.c.l.b16 %v360
      %v442 = vunpack.c.l.b16 %v361
      %v443 = vunpack.c.l.b16 %v362
      %v444 = vunpack.c.l.b16 %v363
      %v445 = vunpack.c.l.b16 %v364
      %v446 = vpack.c.b16 %v415, %v414
      %v447 = vpack.c.b16 %v417, %v416
      %v448 = vpack.c.b16 %v419, %v418
      %v449 = vpack.c.b16 %v421, %v420
      %v450 = vpack.c.b16 %v423, %v422
      %v451 = vpack.c.b16 %v425, %v424
      %v452 = vpack.c.b16 %v427, %v426
      %v453 = vpack.c.b16 %v429, %v428
      %v454 = vpack.c.b16 %v431, %v430
      %v455 = vpack.c.b16 %v433, %v432
      %v456 = vpack.c.b16 %v435, %v434
      %v457 = vpack.c.b16 %v437, %v436
      %v458 = vpack.c.b16 %v439, %v438
      %v459 = vpack.c.b16 %v441, %v440
      %v460 = vpack.c.b16 %v443, %v442
      %v461 = vpack.c.b16 %v445, %v444
      %v475 = vunpack.c.l.b16 %v365
      %v476 = vunpack.c.l.b16 %v366
      %v477 = vunpack.c.l.b16 %v367
      %v478 = vunpack.c.l.b16 %v368
      %v479 = vunpack.c.l.b16 %v369
      %v480 = vunpack.c.l.b16 %v370
      %v481 = vunpack.c.l.b16 %v371
      %v482 = vunpack.c.l.b16 %v372
      %v483 = vunpack.c.l.b16 %v373
      %v484 = vunpack.c.l.b16 %v374
      %v485 = vunpack.c.l.b16 %v375
      %v486 = vunpack.c.l.b16 %v376
      %v487 = vunpack.c.l.b16 %v377
      %v488 = vpack.c.b16 %v476, %v475
      %v489 = vpack.c.b16 %v478, %v477
      %v490 = vpack.c.b16 %v480, %v479
      %v491 = vpack.c.b16 %v482, %v481
      %v492 = vpack.c.b16 %v484, %v483
      %v493 = vpack.c.b16 %v486, %v485
      %v494 = vpack.c.b16 %v487, %v487
      %vm501 = vcmask 818176
      %v503 = vsel %vm501, %v446, 0
      %v506 = vsel %vm501, %v447, 0
      %v509 = vsel %vm501, %v448, 0
      %v512 = vsel %vm501, %v449, 0
      %v515 = vsel %vm501, %v450, 0
      %v518 = vsel %vm501, %v451, 0
      %v521 = vsel %vm501, %v452, 0
      %v524 = vsel %vm501, %v453, 0
      %v527 = vsel %vm501, %v454, 0
      %v530 = vsel %vm501, %v455, 0
      %v533 = vsel %vm501, %v456, 0
      %v536 = vsel %vm501, %v457, 0
      %v539 = vsel %vm501, %v458, 0
      %v542 = vsel %vm501, %v459, 0
      %v545 = vsel %vm501, %v460, 0
      %v548 = vsel %vm501, %v461, 0
      %vm550 = vcmask 1041408
      %v552 = vsel %vm550, %v494, 0
      %554 = vmatpush.bf16.msra.mxu0 0
      %555 = vmatpush.bf16.msra.mxu0 %v552
      %556 = vmatpush.bf16.msra.mxu0 %v493
      %557 = vmatpush.bf16.msra.mxu0 %v492
      %558 = vmatpush.bf16.msra.mxu0 %v491
      %559 = vmatpush.bf16.msra.mxu0 %v490
      %560 = vmatpush.bf16.msra.mxu0 %v489
      %561 = vmatpush.bf16.msra.mxu0 %v488
      %562 = vmatmul.bf16.gmra.mxu0 %v503
      %v563 = vpop.f32.mrf.mxu0
      %v564 = vadd.f32 %v380, %v563
      %v565 = vpop.f32.mrf.mxu0
      %v566 = vadd.f32 %v380, %v565
      %567 = vmatmul.bf16.gmra.mxu0 %v506
      %v568 = vpop.f32.mrf.mxu0
      %v569 = vadd.f32 %v380, %v568
      %v570 = vpop.f32.mrf.mxu0
      %v571 = vadd.f32 %v380, %v570
      %572 = vmatmul.bf16.gmra.mxu0 %v509
      %v573 = vpop.f32.mrf.mxu0
      %v574 = vadd.f32 %v380, %v573
      %v575 = vpop.f32.mrf.mxu0
      %v576 = vadd.f32 %v380, %v575
      %577 = vmatmul.bf16.gmra.mxu0 %v512
      %v578 = vpop.f32.mrf.mxu0
      %v579 = vadd.f32 %v380, %v578
      %v580 = vpop.f32.mrf.mxu0
      %v581 = vadd.f32 %v380, %v580
      %582 = vmatmul.bf16.gmra.mxu0 %v515
      %v583 = vpop.f32.mrf.mxu0
      %v584 = vadd.f32 %v380, %v583
      %v585 = vpop.f32.mrf.mxu0
      %v586 = vadd.f32 %v380, %v585
      %587 = vmatmul.bf16.gmra.mxu0 %v518
      %v588 = vpop.f32.mrf.mxu0
      %v589 = vadd.f32 %v380, %v588
      %v590 = vpop.f32.mrf.mxu0
      %v591 = vadd.f32 %v380, %v590
      %592 = vmatmul.bf16.gmra.mxu0 %v521
      %v593 = vpop.f32.mrf.mxu0
      %v594 = vadd.f32 %v380, %v593
      %v595 = vpop.f32.mrf.mxu0
      %v596 = vadd.f32 %v380, %v595
      %597 = vmatmul.bf16.gmra.mxu0 %v524
      %v598 = vpop.f32.mrf.mxu0
      %v599 = vadd.f32 %v380, %v598
      %v600 = vpop.f32.mrf.mxu0
      %v601 = vadd.f32 %v380, %v600
      %602 = vmatmul.bf16.gmra.mxu0 %v527
      %v603 = vpop.f32.mrf.mxu0
      %v604 = vadd.f32 %v380, %v603
      %v605 = vpop.f32.mrf.mxu0
      %v606 = vadd.f32 %v380, %v605
      %607 = vmatmul.bf16.gmra.mxu0 %v530
      %v608 = vpop.f32.mrf.mxu0
      %v609 = vadd.f32 %v380, %v608
      %v610 = vpop.f32.mrf.mxu0
      %v611 = vadd.f32 %v380, %v610
      %612 = vmatmul.bf16.gmra.mxu0 %v533
      %v613 = vpop.f32.mrf.mxu0
      %v614 = vadd.f32 %v380, %v613
      %v615 = vpop.f32.mrf.mxu0
      %v616 = vadd.f32 %v380, %v615
      %617 = vmatmul.bf16.gmra.mxu0 %v536
      %v618 = vpop.f32.mrf.mxu0
      %v619 = vadd.f32 %v380, %v618
      %v620 = vpop.f32.mrf.mxu0
      %v621 = vadd.f32 %v380, %v620
      %622 = vmatmul.bf16.gmra.mxu0 %v539
      %v623 = vpop.f32.mrf.mxu0
      %v624 = vadd.f32 %v380, %v623
      %v625 = vpop.f32.mrf.mxu0
      %v626 = vadd.f32 %v380, %v625
      %627 = vmatmul.bf16.gmra.mxu0 %v542
      %v628 = vpop.f32.mrf.mxu0
      %v629 = vadd.f32 %v380, %v628
      %v630 = vpop.f32.mrf.mxu0
      %v631 = vadd.f32 %v380, %v630
      %632 = vmatmul.bf16.gmra.mxu0 %v545
      %v633 = vpop.f32.mrf.mxu0
      %v634 = vadd.f32 %v380, %v633
      %v635 = vpop.f32.mrf.mxu0
      %v636 = vadd.f32 %v380, %v635
      %637 = vmatmul.bf16.gmra.mxu0 %v548
      %v638 = vpop.f32.mrf.mxu0
      %v639 = vadd.f32 %v380, %v638
      %v640 = vpop.f32.mrf.mxu0
      %v641 = vadd.f32 %v380, %v640
      %642 = vdwg.mxu0
      %v643 = vld [vmem:[#allocation2] sm:$0xff]
      %v644 = vld [vmem:[#allocation2 + $0x8] sm:$0xff]
      %v645 = vld [vmem:[#allocation2 + $0x10] sm:$0xf]
      %v646 = vld [vmem:[#allocation2 + $0x18] sm:$0xff]
      %v647 = vld [vmem:[#allocation2 + $0x20] sm:$0xff]
      %v648 = vld [vmem:[#allocation2 + $0x28] sm:$0xf]
      %v649 = vld [vmem:[#allocation2 + $0x30] sm:$0xff]
      %v650 = vld [vmem:[#allocation2 + $0x38] sm:$0xff]
      %v651 = vld [vmem:[#allocation2 + $0x40] sm:$0xf]
      %v652 = vld [vmem:[#allocation2 + $0x48] sm:$0xff]
      %v653 = vld [vmem:[#allocation2 + $0x50] sm:$0xff]
      %v654 = vld [vmem:[#allocation2 + $0x58] sm:$0xf]
      %v655 = vld [vmem:[#allocation2 + $0x60] sm:$0xff]
      %v656 = vld [vmem:[#allocation2 + $0x68] sm:$0xff]
      %v657 = vld [vmem:[#allocation2 + $0x70] sm:$0xf]
      %v658 = vld [vmem:[#allocation2 + $0x78] sm:$0xff]
      %v659 = vld [vmem:[#allocation2 + $0x80] sm:$0xff]
      %v660 = vld [vmem:[#allocation2 + $0x88] sm:$0xf]
      %v661 = vld [vmem:[#allocation2 + $0x90] sm:$0xff]
      %v662 = vld [vmem:[#allocation2 + $0x98] sm:$0xff]
      %v663 = vld [vmem:[#allocation2 + $0xa0] sm:$0xf]
      %v664 = vld [vmem:[#allocation2 + $0xa8] sm:$0xff]
      %v665 = vld [vmem:[#allocation2 + $0xb0] sm:$0xff]
      %v666 = vld [vmem:[#allocation2 + $0xb8] sm:$0xf]
      %v667 = vld [vmem:[#allocation2 + $0xc0] sm:$0xff]
      %v668 = vld [vmem:[#allocation2 + $0xc8] sm:$0xff]
      %v669 = vld [vmem:[#allocation2 + $0xd0] sm:$0xf]
      %v670 = vld [vmem:[#allocation2 + $0xd8] sm:$0xff]
      %v671 = vld [vmem:[#allocation2 + $0xe0] sm:$0xff]
      %v672 = vld [vmem:[#allocation2 + $0xe8] sm:$0xf]
      %v673 = vld [vmem:[#allocation2 + $0xf0] sm:$0xff]
      %v674 = vld [vmem:[#allocation2 + $0xf8] sm:$0xff]
      %v675 = vld [vmem:[#allocation2 + $0x100] sm:$0xf]
      %v676 = vld [vmem:[#allocation2 + $0x108] sm:$0xff]
      %v677 = vld [vmem:[#allocation2 + $0x110] sm:$0xff]
      %v678 = vld [vmem:[#allocation2 + $0x118] sm:$0xf]
      %v679 = vld [vmem:[#allocation2 + $0x120] sm:$0xff]
      %v680 = vld [vmem:[#allocation2 + $0x128] sm:$0xff]
      %v681 = vld [vmem:[#allocation2 + $0x130] sm:$0xf]
      %v682 = vld [vmem:[#allocation2 + $0x138] sm:$0xff]
      %v683 = vld [vmem:[#allocation2 + $0x140] sm:$0xff]
      %v684 = vld [vmem:[#allocation2 + $0x148] sm:$0xf]
      %v685 = vld [vmem:[#allocation2 + $0x150] sm:$0xff]
      %v686 = vld [vmem:[#allocation2 + $0x158] sm:$0xff]
      %v687 = vld [vmem:[#allocation2 + $0x160] sm:$0xf]
      %v688 = vld [vmem:[#allocation2 + $0x168] sm:$0xff]
      %v689 = vld [vmem:[#allocation2 + $0x170] sm:$0xff]
      %v690 = vld [vmem:[#allocation2 + $0x178] sm:$0xf]
      %v691 = vld [vmem:[#allocation2 + $0x180] sm:$0xff]
      %v692 = vld [vmem:[#allocation2 + $0x188] sm:$0xff]
      %v693 = vld [vmem:[#allocation2 + $0x190] sm:$0xf]
      %v694 = vld [vmem:[#allocation2 + $0x198] sm:$0xff]
      %v695 = vld [vmem:[#allocation2 + $0x1a0] sm:$0xff]
      %v696 = vld [vmem:[#allocation2 + $0x1a8] sm:$0xf]
      %v697 = vld [vmem:[#allocation2 + $0x1b0] sm:$0xff]
      %v698 = vld [vmem:[#allocation2 + $0x1b8] sm:$0xff]
      %v699 = vld [vmem:[#allocation2 + $0x1c0] sm:$0xf]
      %v700 = vld [vmem:[#allocation2 + $0x1c8] sm:$0xff]
      %v701 = vld [vmem:[#allocation2 + $0x1d0] sm:$0xff]
      %v702 = vld [vmem:[#allocation2 + $0x1d8] sm:$0xf]
      %vm763 = vcmask 1046528
      %v764 = vrot.slane %v643, 1
      %v765 = vrot.slane %v644, 1
      %v766 = vsel %vm763, %v764, %v765
      %v767 = vrot.slane %v645, 1
      %v768 = vsel %vm763, %v765, %v767
      %v769 = vrot.slane %v646, 1
      %v770 = vrot.slane %v647, 1
      %v771 = vsel %vm763, %v769, %v770
      %v772 = vrot.slane %v648, 1
      %v773 = vsel %vm763, %v770, %v772
      %v774 = vrot.slane %v649, 1
      %v775 = vrot.slane %v650, 1
      %v776 = vsel %vm763, %v774, %v775
      %v777 = vrot.slane %v651, 1
      %v778 = vsel %vm763, %v775, %v777
      %v779 = vrot.slane %v652, 1
      %v780 = vrot.slane %v653, 1
      %v781 = vsel %vm763, %v779, %v780
      %v782 = vrot.slane %v654, 1
      %v783 = vsel %vm763, %v780, %v782
      %v784 = vrot.slane %v655, 1
      %v785 = vrot.slane %v656, 1
      %v786 = vsel %vm763, %v784, %v785
      %v787 = vrot.slane %v657, 1
      %v788 = vsel %vm763, %v785, %v787
      %v789 = vrot.slane %v658, 1
      %v790 = vrot.slane %v659, 1
      %v791 = vsel %vm763, %v789, %v790
      %v792 = vrot.slane %v660, 1
      %v793 = vsel %vm763, %v790, %v792
      %v794 = vrot.slane %v661, 1
      %v795 = vrot.slane %v662, 1
      %v796 = vsel %vm763, %v794, %v795
      %v797 = vrot.slane %v663, 1
      %v798 = vsel %vm763, %v795, %v797
      %v799 = vrot.slane %v664, 1
      %v800 = vrot.slane %v665, 1
      %v801 = vsel %vm763, %v799, %v800
      %v802 = vrot.slane %v666, 1
      %v803 = vsel %vm763, %v800, %v802
      %v804 = vrot.slane %v667, 1
      %v805 = vrot.slane %v668, 1
      %v806 = vsel %vm763, %v804, %v805
      %v807 = vrot.slane %v669, 1
      %v808 = vsel %vm763, %v805, %v807
      %v809 = vrot.slane %v670, 1
      %v810 = vrot.slane %v671, 1
      %v811 = vsel %vm763, %v809, %v810
      %v812 = vrot.slane %v672, 1
      %v813 = vsel %vm763, %v810, %v812
      %v814 = vrot.slane %v673, 1
      %v815 = vrot.slane %v674, 1
      %v816 = vsel %vm763, %v814, %v815
      %v817 = vrot.slane %v675, 1
      %v818 = vsel %vm763, %v815, %v817
      %v819 = vrot.slane %v676, 1
      %v820 = vrot.slane %v677, 1
      %v821 = vsel %vm763, %v819, %v820
      %v822 = vrot.slane %v678, 1
      %v823 = vsel %vm763, %v820, %v822
      %v824 = vrot.slane %v679, 1
      %v825 = vrot.slane %v680, 1
      %v826 = vsel %vm763, %v824, %v825
      %v827 = vrot.slane %v681, 1
      %v828 = vsel %vm763, %v825, %v827
      %v829 = vrot.slane %v682, 1
      %v830 = vrot.slane %v683, 1
      %v831 = vsel %vm763, %v829, %v830
      %v832 = vrot.slane %v684, 1
      %v833 = vsel %vm763, %v830, %v832
      %v834 = vrot.slane %v685, 1
      %v835 = vrot.slane %v686, 1
      %v836 = vsel %vm763, %v834, %v835
      %v837 = vrot.slane %v687, 1
      %v838 = vsel %vm763, %v835, %v837
      %v839 = vrot.slane %v688, 1
      %v840 = vrot.slane %v689, 1
      %v841 = vsel %vm763, %v839, %v840
      %v842 = vrot.slane %v690, 1
      %v843 = vsel %vm763, %v840, %v842
      %v844 = vrot.slane %v691, 1
      %v845 = vrot.slane %v692, 1
      %v846 = vsel %vm763, %v844, %v845
      %v847 = vrot.slane %v693, 1
      %v848 = vsel %vm763, %v845, %v847
      %v849 = vrot.slane %v694, 1
      %v850 = vrot.slane %v695, 1
      %v851 = vsel %vm763, %v849, %v850
      %v852 = vrot.slane %v696, 1
      %v853 = vsel %vm763, %v850, %v852
      %v854 = vrot.slane %v697, 1
      %v855 = vrot.slane %v698, 1
      %v856 = vsel %vm763, %v854, %v855
      %v857 = vrot.slane %v699, 1
      %v858 = vsel %vm763, %v855, %v857
      %v859 = vrot.slane %v700, 1
      %v860 = vrot.slane %v701, 1
      %v861 = vsel %vm763, %v859, %v860
      %v862 = vrot.slane %v702, 1
      %v863 = vsel %vm763, %v860, %v862
      %864 = vrot.lane.b32.xlu0 %v766, 32
      %v865 = vpop.permute.xlu0 %864
      %866 = vrot.lane.b32.xlu0 %v768, 32
      %v867 = vpop.permute.xlu0 %866
      %868 = vrot.lane.b32.xlu0 %v771, 32
      %v869 = vpop.permute.xlu0 %868
      %870 = vrot.lane.b32.xlu0 %v773, 32
      %v871 = vpop.permute.xlu0 %870
      %872 = vrot.lane.b32.xlu0 %v776, 32
      %v873 = vpop.permute.xlu0 %872
      %874 = vrot.lane.b32.xlu0 %v778, 32
      %v875 = vpop.permute.xlu0 %874
      %876 = vrot.lane.b32.xlu0 %v781, 32
      %v877 = vpop.permute.xlu0 %876
      %878 = vrot.lane.b32.xlu0 %v783, 32
      %v879 = vpop.permute.xlu0 %878
      %880 = vrot.lane.b32.xlu0 %v786, 32
      %v881 = vpop.permute.xlu0 %880
      %882 = vrot.lane.b32.xlu0 %v788, 32
      %v883 = vpop.permute.xlu0 %882
      %884 = vrot.lane.b32.xlu0 %v791, 32
      %v885 = vpop.permute.xlu0 %884
      %886 = vrot.lane.b32.xlu0 %v793, 32
      %v887 = vpop.permute.xlu0 %886
      %888 = vrot.lane.b32.xlu0 %v796, 32
      %v889 = vpop.permute.xlu0 %888
      %890 = vrot.lane.b32.xlu0 %v798, 32
      %v891 = vpop.permute.xlu0 %890
      %892 = vrot.lane.b32.xlu0 %v801, 32
      %v893 = vpop.permute.xlu0 %892
      %894 = vrot.lane.b32.xlu0 %v803, 32
      %v895 = vpop.permute.xlu0 %894
      %896 = vrot.lane.b32.xlu0 %v806, 32
      %v897 = vpop.permute.xlu0 %896
      %898 = vrot.lane.b32.xlu0 %v808, 32
      %v899 = vpop.permute.xlu0 %898
      %900 = vrot.lane.b32.xlu0 %v811, 32
      %v901 = vpop.permute.xlu0 %900
      %902 = vrot.lane.b32.xlu0 %v813, 32
      %v903 = vpop.permute.xlu0 %902
      %904 = vrot.lane.b32.xlu0 %v816, 32
      %v905 = vpop.permute.xlu0 %904
      %906 = vrot.lane.b32.xlu0 %v818, 32
      %v907 = vpop.permute.xlu0 %906
      %908 = vrot.lane.b32.xlu0 %v821, 32
      %v909 = vpop.permute.xlu0 %908
      %910 = vrot.lane.b32.xlu0 %v823, 32
      %v911 = vpop.permute.xlu0 %910
      %912 = vrot.lane.b32.xlu0 %v826, 32
      %v913 = vpop.permute.xlu0 %912
      %914 = vrot.lane.b32.xlu0 %v828, 32
      %v915 = vpop.permute.xlu0 %914
      %916 = vrot.lane.b32.xlu0 %v831, 32
      %v917 = vpop.permute.xlu0 %916
      %918 = vrot.lane.b32.xlu0 %v833, 32
      %v919 = vpop.permute.xlu0 %918
      %920 = vrot.lane.b32.xlu0 %v836, 32
      %v921 = vpop.permute.xlu0 %920
      %922 = vrot.lane.b32.xlu0 %v838, 32
      %v923 = vpop.permute.xlu0 %922
      %924 = vrot.lane.b32.xlu0 %v841, 32
      %v925 = vpop.permute.xlu0 %924
      %926 = vrot.lane.b32.xlu0 %v843, 32
      %v927 = vpop.permute.xlu0 %926
      %928 = vrot.lane.b32.xlu0 %v846, 32
      %v929 = vpop.permute.xlu0 %928
      %930 = vrot.lane.b32.xlu0 %v848, 32
      %v931 = vpop.permute.xlu0 %930
      %932 = vrot.lane.b32.xlu0 %v851, 32
      %v933 = vpop.permute.xlu0 %932
      %934 = vrot.lane.b32.xlu0 %v853, 32
      %v935 = vpop.permute.xlu0 %934
      %936 = vrot.lane.b32.xlu0 %v856, 32
      %v937 = vpop.permute.xlu0 %936
      %938 = vrot.lane.b32.xlu0 %v858, 32
      %v939 = vpop.permute.xlu0 %938
      %940 = vrot.lane.b32.xlu0 %v861, 32
      %v941 = vpop.permute.xlu0 %940
      %942 = vrot.lane.b32.xlu0 %v863, 32
      %v943 = vpop.permute.xlu0 %942
      %vm984 = vcmask 1045504
      %v985 = vrot.slane %v643, 2
      %v986 = vrot.slane %v644, 2
      %v987 = vsel %vm984, %v985, %v986
      %v988 = vrot.slane %v645, 2
      %v989 = vsel %vm984, %v986, %v988
      %v990 = vrot.slane %v646, 2
      %v991 = vrot.slane %v647, 2
      %v992 = vsel %vm984, %v990, %v991
      %v993 = vrot.slane %v648, 2
      %v994 = vsel %vm984, %v991, %v993
      %v995 = vrot.slane %v649, 2
      %v996 = vrot.slane %v650, 2
      %v997 = vsel %vm984, %v995, %v996
      %v998 = vrot.slane %v651, 2
      %v999 = vsel %vm984, %v996, %v998
      %v1000 = vrot.slane %v652, 2
      %v1001 = vrot.slane %v653, 2
      %v1002 = vsel %vm984, %v1000, %v1001
      %v1003 = vrot.slane %v654, 2
      %v1004 = vsel %vm984, %v1001, %v1003
      %v1005 = vrot.slane %v655, 2
      %v1006 = vrot.slane %v656, 2
      %v1007 = vsel %vm984, %v1005, %v1006
      %v1008 = vrot.slane %v657, 2
      %v1009 = vsel %vm984, %v1006, %v1008
      %v1010 = vrot.slane %v658, 2
      %v1011 = vrot.slane %v659, 2
      %v1012 = vsel %vm984, %v1010, %v1011
      %v1013 = vrot.slane %v660, 2
      %v1014 = vsel %vm984, %v1011, %v1013
      %v1015 = vrot.slane %v661, 2
      %v1016 = vrot.slane %v662, 2
      %v1017 = vsel %vm984, %v1015, %v1016
      %v1018 = vrot.slane %v663, 2
      %v1019 = vsel %vm984, %v1016, %v1018
      %v1020 = vrot.slane %v664, 2
      %v1021 = vrot.slane %v665, 2
      %v1022 = vsel %vm984, %v1020, %v1021
      %v1023 = vrot.slane %v666, 2
      %v1024 = vsel %vm984, %v1021, %v1023
      %v1025 = vrot.slane %v667, 2
      %v1026 = vrot.slane %v668, 2
      %v1027 = vsel %vm984, %v1025, %v1026
      %v1028 = vrot.slane %v669, 2
      %v1029 = vsel %vm984, %v1026, %v1028
      %v1030 = vrot.slane %v670, 2
      %v1031 = vrot.slane %v671, 2
      %v1032 = vsel %vm984, %v1030, %v1031
      %v1033 = vrot.slane %v672, 2
      %v1034 = vsel %vm984, %v1031, %v1033
      %v1035 = vrot.slane %v673, 2
      %v1036 = vrot.slane %v674, 2
      %v1037 = vsel %vm984, %v1035, %v1036
      %v1038 = vrot.slane %v675, 2
      %v1039 = vsel %vm984, %v1036, %v1038
      %v1040 = vrot.slane %v676, 2
      %v1041 = vrot.slane %v677, 2
      %v1042 = vsel %vm984, %v1040, %v1041
      %v1043 = vrot.slane %v678, 2
      %v1044 = vsel %vm984, %v1041, %v1043
      %v1045 = vrot.slane %v679, 2
      %v1046 = vrot.slane %v680, 2
      %v1047 = vsel %vm984, %v1045, %v1046
      %v1048 = vrot.slane %v681, 2
      %v1049 = vsel %vm984, %v1046, %v1048
      %v1050 = vrot.slane %v682, 2
      %v1051 = vrot.slane %v683, 2
      %v1052 = vsel %vm984, %v1050, %v1051
      %v1053 = vrot.slane %v684, 2
      %v1054 = vsel %vm984, %v1051, %v1053
      %v1055 = vrot.slane %v685, 2
      %v1056 = vrot.slane %v686, 2
      %v1057 = vsel %vm984, %v1055, %v1056
      %v1058 = vrot.slane %v687, 2
      %v1059 = vsel %vm984, %v1056, %v1058
      %v1060 = vrot.slane %v688, 2
      %v1061 = vrot.slane %v689, 2
      %v1062 = vsel %vm984, %v1060, %v1061
      %v1063 = vrot.slane %v690, 2
      %v1064 = vsel %vm984, %v1061, %v1063
      %v1065 = vrot.slane %v691, 2
      %v1066 = vrot.slane %v692, 2
      %v1067 = vsel %vm984, %v1065, %v1066
      %v1068 = vrot.slane %v693, 2
      %v1069 = vsel %vm984, %v1066, %v1068
      %v1070 = vrot.slane %v694, 2
      %v1071 = vrot.slane %v695, 2
      %v1072 = vsel %vm984, %v1070, %v1071
      %v1073 = vrot.slane %v696, 2
      %v1074 = vsel %vm984, %v1071, %v1073
      %v1075 = vrot.slane %v697, 2
      %v1076 = vrot.slane %v698, 2
      %v1077 = vsel %vm984, %v1075, %v1076
      %v1078 = vrot.slane %v699, 2
      %v1079 = vsel %vm984, %v1076, %v1078
      %v1080 = vrot.slane %v700, 2
      %v1081 = vrot.slane %v701, 2
      %v1082 = vsel %vm984, %v1080, %v1081
      %v1083 = vrot.slane %v702, 2
      %v1084 = vsel %vm984, %v1081, %v1083
      %1085 = vrot.lane.b32.xlu0 %v987, 64
      %v1086 = vpop.permute.xlu0 %1085
      %1087 = vrot.lane.b32.xlu0 %v989, 64
      %v1088 = vpop.permute.xlu0 %1087
      %1089 = vrot.lane.b32.xlu0 %v992, 64
      %v1090 = vpop.permute.xlu0 %1089
      %1091 = vrot.lane.b32.xlu0 %v994, 64
      %v1092 = vpop.permute.xlu0 %1091
      %1093 = vrot.lane.b32.xlu0 %v997, 64
      %v1094 = vpop.permute.xlu0 %1093
      %1095 = vrot.lane.b32.xlu0 %v999, 64
      %v1096 = vpop.permute.xlu0 %1095
      %1097 = vrot.lane.b32.xlu0 %v1002, 64
      %v1098 = vpop.permute.xlu0 %1097
      %1099 = vrot.lane.b32.xlu0 %v1004, 64
      %v1100 = vpop.permute.xlu0 %1099
      %1101 = vrot.lane.b32.xlu0 %v1007, 64
      %v1102 = vpop.permute.xlu0 %1101
      %1103 = vrot.lane.b32.xlu0 %v1009, 64
      %v1104 = vpop.permute.xlu0 %1103
      %1105 = vrot.lane.b32.xlu0 %v1012, 64
      %v1106 = vpop.permute.xlu0 %1105
      %1107 = vrot.lane.b32.xlu0 %v1014, 64
      %v1108 = vpop.permute.xlu0 %1107
      %1109 = vrot.lane.b32.xlu0 %v1017, 64
      %v1110 = vpop.permute.xlu0 %1109
      %1111 = vrot.lane.b32.xlu0 %v1019, 64
      %v1112 = vpop.permute.xlu0 %1111
      %1113 = vrot.lane.b32.xlu0 %v1022, 64
      %v1114 = vpop.permute.xlu0 %1113
      %1115 = vrot.lane.b32.xlu0 %v1024, 64
      %v1116 = vpop.permute.xlu0 %1115
      %1117 = vrot.lane.b32.xlu0 %v1027, 64
      %v1118 = vpop.permute.xlu0 %1117
      %1119 = vrot.lane.b32.xlu0 %v1029, 64
      %v1120 = vpop.permute.xlu0 %1119
      %1121 = vrot.lane.b32.xlu0 %v1032, 64
      %v1122 = vpop.permute.xlu0 %1121
      %1123 = vrot.lane.b32.xlu0 %v1034, 64
      %v1124 = vpop.permute.xlu0 %1123
      %1125 = vrot.lane.b32.xlu0 %v1037, 64
      %v1126 = vpop.permute.xlu0 %1125
      %1127 = vrot.lane.b32.xlu0 %v1039, 64
      %v1128 = vpop.permute.xlu0 %1127
      %1129 = vrot.lane.b32.xlu0 %v1042, 64
      %v1130 = vpop.permute.xlu0 %1129
      %1131 = vrot.lane.b32.xlu0 %v1044, 64
      %v1132 = vpop.permute.xlu0 %1131
      %1133 = vrot.lane.b32.xlu0 %v1047, 64
      %v1134 = vpop.permute.xlu0 %1133
      %1135 = vrot.lane.b32.xlu0 %v1049, 64
      %v1136 = vpop.permute.xlu0 %1135
      %1137 = vrot.lane.b32.xlu0 %v1052, 64
      %v1138 = vpop.permute.xlu0 %1137
      %1139 = vrot.lane.b32.xlu0 %v1054, 64
      %v1140 = vpop.permute.xlu0 %1139
      %1141 = vrot.lane.b32.xlu0 %v1057, 64
      %v1142 = vpop.permute.xlu0 %1141
      %1143 = vrot.lane.b32.xlu0 %v1059, 64
      %v1144 = vpop.permute.xlu0 %1143
      %1145 = vrot.lane.b32.xlu0 %v1062, 64
      %v1146 = vpop.permute.xlu0 %1145
      %1147 = vrot.lane.b32.xlu0 %v1064, 64
      %v1148 = vpop.permute.xlu0 %1147
      %1149 = vrot.lane.b32.xlu0 %v1067, 64
      %v1150 = vpop.permute.xlu0 %1149
      %1151 = vrot.lane.b32.xlu0 %v1069, 64
      %v1152 = vpop.permute.xlu0 %1151
      %1153 = vrot.lane.b32.xlu0 %v1072, 64
      %v1154 = vpop.permute.xlu0 %1153
      %1155 = vrot.lane.b32.xlu0 %v1074, 64
      %v1156 = vpop.permute.xlu0 %1155
      %1157 = vrot.lane.b32.xlu0 %v1077, 64
      %v1158 = vpop.permute.xlu0 %1157
      %1159 = vrot.lane.b32.xlu0 %v1079, 64
      %v1160 = vpop.permute.xlu0 %1159
      %1161 = vrot.lane.b32.xlu0 %v1082, 64
      %v1162 = vpop.permute.xlu0 %1161
      %1163 = vrot.lane.b32.xlu0 %v1084, 64
      %v1164 = vpop.permute.xlu0 %1163
      %vm1205 = vcmask 1044480
      %v1206 = vrot.slane %v643, 3
      %v1207 = vrot.slane %v644, 3
      %v1208 = vsel %vm1205, %v1206, %v1207
      %v1209 = vrot.slane %v645, 3
      %v1210 = vsel %vm1205, %v1207, %v1209
      %v1211 = vrot.slane %v646, 3
      %v1212 = vrot.slane %v647, 3
      %v1213 = vsel %vm1205, %v1211, %v1212
      %v1214 = vrot.slane %v648, 3
      %v1215 = vsel %vm1205, %v1212, %v1214
      %v1216 = vrot.slane %v649, 3
      %v1217 = vrot.slane %v650, 3
      %v1218 = vsel %vm1205, %v1216, %v1217
      %v1219 = vrot.slane %v651, 3
      %v1220 = vsel %vm1205, %v1217, %v1219
      %v1221 = vrot.slane %v652, 3
      %v1222 = vrot.slane %v653, 3
      %v1223 = vsel %vm1205, %v1221, %v1222
      %v1224 = vrot.slane %v654, 3
      %v1225 = vsel %vm1205, %v1222, %v1224
      %v1226 = vrot.slane %v655, 3
      %v1227 = vrot.slane %v656, 3
      %v1228 = vsel %vm1205, %v1226, %v1227
      %v1229 = vrot.slane %v657, 3
      %v1230 = vsel %vm1205, %v1227, %v1229
      %v1231 = vrot.slane %v658, 3
      %v1232 = vrot.slane %v659, 3
      %v1233 = vsel %vm1205, %v1231, %v1232
      %v1234 = vrot.slane %v660, 3
      %v1235 = vsel %vm1205, %v1232, %v1234
      %v1236 = vrot.slane %v661, 3
      %v1237 = vrot.slane %v662, 3
      %v1238 = vsel %vm1205, %v1236, %v1237
      %v1239 = vrot.slane %v663, 3
      %v1240 = vsel %vm1205, %v1237, %v1239
      %v1241 = vrot.slane %v664, 3
      %v1242 = vrot.slane %v665, 3
      %v1243 = vsel %vm1205, %v1241, %v1242
      %v1244 = vrot.slane %v666, 3
      %v1245 = vsel %vm1205, %v1242, %v1244
      %v1246 = vrot.slane %v667, 3
      %v1247 = vrot.slane %v668, 3
      %v1248 = vsel %vm1205, %v1246, %v1247
      %v1249 = vrot.slane %v669, 3
      %v1250 = vsel %vm1205, %v1247, %v1249
      %v1251 = vrot.slane %v670, 3
      %v1252 = vrot.slane %v671, 3
      %v1253 = vsel %vm1205, %v1251, %v1252
      %v1254 = vrot.slane %v672, 3
      %v1255 = vsel %vm1205, %v1252, %v1254
      %v1256 = vrot.slane %v673, 3
      %v1257 = vrot.slane %v674, 3
      %v1258 = vsel %vm1205, %v1256, %v1257
      %v1259 = vrot.slane %v675, 3
      %v1260 = vsel %vm1205, %v1257, %v1259
      %v1261 = vrot.slane %v676, 3
      %v1262 = vrot.slane %v677, 3
      %v1263 = vsel %vm1205, %v1261, %v1262
      %v1264 = vrot.slane %v678, 3
      %v1265 = vsel %vm1205, %v1262, %v1264
      %v1266 = vrot.slane %v679, 3
      %v1267 = vrot.slane %v680, 3
      %v1268 = vsel %vm1205, %v1266, %v1267
      %v1269 = vrot.slane %v681, 3
      %v1270 = vsel %vm1205, %v1267, %v1269
      %v1271 = vrot.slane %v682, 3
      %v1272 = vrot.slane %v683, 3
      %v1273 = vsel %vm1205, %v1271, %v1272
      %v1274 = vrot.slane %v684, 3
      %v1275 = vsel %vm1205, %v1272, %v1274
      %v1276 = vrot.slane %v685, 3
      %v1277 = vrot.slane %v686, 3
      %v1278 = vsel %vm1205, %v1276, %v1277
      %v1279 = vrot.slane %v687, 3
      %v1280 = vsel %vm1205, %v1277, %v1279
      %v1281 = vrot.slane %v688, 3
      %v1282 = vrot.slane %v689, 3
      %v1283 = vsel %vm1205, %v1281, %v1282
      %v1284 = vrot.slane %v690, 3
      %v1285 = vsel %vm1205, %v1282, %v1284
      %v1286 = vrot.slane %v691, 3
      %v1287 = vrot.slane %v692, 3
      %v1288 = vsel %vm1205, %v1286, %v1287
      %v1289 = vrot.slane %v693, 3
      %v1290 = vsel %vm1205, %v1287, %v1289
      %v1291 = vrot.slane %v694, 3
      %v1292 = vrot.slane %v695, 3
      %v1293 = vsel %vm1205, %v1291, %v1292
      %v1294 = vrot.slane %v696, 3
      %v1295 = vsel %vm1205, %v1292, %v1294
      %v1296 = vrot.slane %v697, 3
      %v1297 = vrot.slane %v698, 3
      %v1298 = vsel %vm1205, %v1296, %v1297
      %v1299 = vrot.slane %v699, 3
      %v1300 = vsel %vm1205, %v1297, %v1299
      %v1301 = vrot.slane %v700, 3
      %v1302 = vrot.slane %v701, 3
      %v1303 = vsel %vm1205, %v1301, %v1302
      %v1304 = vrot.slane %v702, 3
      %v1305 = vsel %vm1205, %v1302, %v1304
      %1306 = vrot.lane.b32.xlu0 %v1208, 96
      %v1307 = vpop.permute.xlu0 %1306
      %1308 = vrot.lane.b32.xlu0 %v1210, 96
      %v1309 = vpop.permute.xlu0 %1308
      %1310 = vrot.lane.b32.xlu0 %v1213, 96
      %v1311 = vpop.permute.xlu0 %1310
      %1312 = vrot.lane.b32.xlu0 %v1215, 96
      %v1313 = vpop.permute.xlu0 %1312
      %1314 = vrot.lane.b32.xlu0 %v1218, 96
      %v1315 = vpop.permute.xlu0 %1314
      %1316 = vrot.lane.b32.xlu0 %v1220, 96
      %v1317 = vpop.permute.xlu0 %1316
      %1318 = vrot.lane.b32.xlu0 %v1223, 96
      %v1319 = vpop.permute.xlu0 %1318
      %1320 = vrot.lane.b32.xlu0 %v1225, 96
      %v1321 = vpop.permute.xlu0 %1320
      %1322 = vrot.lane.b32.xlu0 %v1228, 96
      %v1323 = vpop.permute.xlu0 %1322
      %1324 = vrot.lane.b32.xlu0 %v1230, 96
      %v1325 = vpop.permute.xlu0 %1324
      %1326 = vrot.lane.b32.xlu0 %v1233, 96
      %v1327 = vpop.permute.xlu0 %1326
      %1328 = vrot.lane.b32.xlu0 %v1235, 96
      %v1329 = vpop.permute.xlu0 %1328
      %1330 = vrot.lane.b32.xlu0 %v1238, 96
      %v1331 = vpop.permute.xlu0 %1330
      %1332 = vrot.lane.b32.xlu0 %v1240, 96
      %v1333 = vpop.permute.xlu0 %1332
      %1334 = vrot.lane.b32.xlu0 %v1243, 96
      %v1335 = vpop.permute.xlu0 %1334
      %1336 = vrot.lane.b32.xlu0 %v1245, 96
      %v1337 = vpop.permute.xlu0 %1336
      %1338 = vrot.lane.b32.xlu0 %v1248, 96
      %v1339 = vpop.permute.xlu0 %1338
      %1340 = vrot.lane.b32.xlu0 %v1250, 96
      %v1341 = vpop.permute.xlu0 %1340
      %1342 = vrot.lane.b32.xlu0 %v1253, 96
      %v1343 = vpop.permute.xlu0 %1342
      %1344 = vrot.lane.b32.xlu0 %v1255, 96
      %v1345 = vpop.permute.xlu0 %1344
      %1346 = vrot.lane.b32.xlu0 %v1258, 96
      %v1347 = vpop.permute.xlu0 %1346
      %1348 = vrot.lane.b32.xlu0 %v1260, 96
      %v1349 = vpop.permute.xlu0 %1348
      %1350 = vrot.lane.b32.xlu0 %v1263, 96
      %v1351 = vpop.permute.xlu0 %1350
      %1352 = vrot.lane.b32.xlu0 %v1265, 96
      %v1353 = vpop.permute.xlu0 %1352
      %1354 = vrot.lane.b32.xlu0 %v1268, 96
      %v1355 = vpop.permute.xlu0 %1354
      %1356 = vrot.lane.b32.xlu0 %v1270, 96
      %v1357 = vpop.permute.xlu0 %1356
      %1358 = vrot.lane.b32.xlu0 %v1273, 96
      %v1359 = vpop.permute.xlu0 %1358
      %1360 = vrot.lane.b32.xlu0 %v1275, 96
      %v1361 = vpop.permute.xlu0 %1360
      %1362 = vrot.lane.b32.xlu0 %v1278, 96
      %v1363 = vpop.permute.xlu0 %1362
      %1364 = vrot.lane.b32.xlu0 %v1280, 96
      %v1365 = vpop.permute.xlu0 %1364
      %1366 = vrot.lane.b32.xlu0 %v1283, 96
      %v1367 = vpop.permute.xlu0 %1366
      %1368 = vrot.lane.b32.xlu0 %v1285, 96
      %v1369 = vpop.permute.xlu0 %1368
      %1370 = vrot.lane.b32.xlu0 %v1288, 96
      %v1371 = vpop.permute.xlu0 %1370
      %1372 = vrot.lane.b32.xlu0 %v1290, 96
      %v1373 = vpop.permute.xlu0 %1372
      %1374 = vrot.lane.b32.xlu0 %v1293, 96
      %v1375 = vpop.permute.xlu0 %1374
      %1376 = vrot.lane.b32.xlu0 %v1295, 96
      %v1377 = vpop.permute.xlu0 %1376
      %1378 = vrot.lane.b32.xlu0 %v1298, 96
      %v1379 = vpop.permute.xlu0 %1378
      %1380 = vrot.lane.b32.xlu0 %v1300, 96
      %v1381 = vpop.permute.xlu0 %1380
      %1382 = vrot.lane.b32.xlu0 %v1303, 96
      %v1383 = vpop.permute.xlu0 %1382
      %1384 = vrot.lane.b32.xlu0 %v1305, 96
      %v1385 = vpop.permute.xlu0 %1384
      %vm1426 = vcmask 1043456
      %v1427 = vrot.slane %v643, 4
      %v1428 = vrot.slane %v644, 4
      %v1429 = vsel %vm1426, %v1427, %v1428
      %v1430 = vrot.slane %v645, 4
      %v1431 = vsel %vm1426, %v1428, %v1430
      %v1432 = vrot.slane %v646, 4
      %v1433 = vrot.slane %v647, 4
      %v1434 = vsel %vm1426, %v1432, %v1433
      %v1435 = vrot.slane %v648, 4
      %v1436 = vsel %vm1426, %v1433, %v1435
      %v1437 = vrot.slane %v649, 4
      %v1438 = vrot.slane %v650, 4
      %v1439 = vsel %vm1426, %v1437, %v1438
      %v1440 = vrot.slane %v651, 4
      %v1441 = vsel %vm1426, %v1438, %v1440
      %v1442 = vrot.slane %v652, 4
      %v1443 = vrot.slane %v653, 4
      %v1444 = vsel %vm1426, %v1442, %v1443
      %v1445 = vrot.slane %v654, 4
      %v1446 = vsel %vm1426, %v1443, %v1445
      %v1447 = vrot.slane %v655, 4
      %v1448 = vrot.slane %v656, 4
      %v1449 = vsel %vm1426, %v1447, %v1448
      %v1450 = vrot.slane %v657, 4
      %v1451 = vsel %vm1426, %v1448, %v1450
      %v1452 = vrot.slane %v658, 4
      %v1453 = vrot.slane %v659, 4
      %v1454 = vsel %vm1426, %v1452, %v1453
      %v1455 = vrot.slane %v660, 4
      %v1456 = vsel %vm1426, %v1453, %v1455
      %v1457 = vrot.slane %v661, 4
      %v1458 = vrot.slane %v662, 4
      %v1459 = vsel %vm1426, %v1457, %v1458
      %v1460 = vrot.slane %v663, 4
      %v1461 = vsel %vm1426, %v1458, %v1460
      %v1462 = vrot.slane %v664, 4
      %v1463 = vrot.slane %v665, 4
      %v1464 = vsel %vm1426, %v1462, %v1463
      %v1465 = vrot.slane %v666, 4
      %v1466 = vsel %vm1426, %v1463, %v1465
      %v1467 = vrot.slane %v667, 4
      %v1468 = vrot.slane %v668, 4
      %v1469 = vsel %vm1426, %v1467, %v1468
      %v1470 = vrot.slane %v669, 4
      %v1471 = vsel %vm1426, %v1468, %v1470
      %v1472 = vrot.slane %v670, 4
      %v1473 = vrot.slane %v671, 4
      %v1474 = vsel %vm1426, %v1472, %v1473
      %v1475 = vrot.slane %v672, 4
      %v1476 = vsel %vm1426, %v1473, %v1475
      %v1477 = vrot.slane %v673, 4
      %v1478 = vrot.slane %v674, 4
      %v1479 = vsel %vm1426, %v1477, %v1478
      %v1480 = vrot.slane %v675, 4
      %v1481 = vsel %vm1426, %v1478, %v1480
      %v1482 = vrot.slane %v676, 4
      %v1483 = vrot.slane %v677, 4
      %v1484 = vsel %vm1426, %v1482, %v1483
      %v1485 = vrot.slane %v678, 4
      %v1486 = vsel %vm1426, %v1483, %v1485
      %v1487 = vrot.slane %v679, 4
      %v1488 = vrot.slane %v680, 4
      %v1489 = vsel %vm1426, %v1487, %v1488
      %v1490 = vrot.slane %v681, 4
      %v1491 = vsel %vm1426, %v1488, %v1490
      %v1492 = vrot.slane %v682, 4
      %v1493 = vrot.slane %v683, 4
      %v1494 = vsel %vm1426, %v1492, %v1493
      %v1495 = vrot.slane %v684, 4
      %v1496 = vsel %vm1426, %v1493, %v1495
      %v1497 = vrot.slane %v685, 4
      %v1498 = vrot.slane %v686, 4
      %v1499 = vsel %vm1426, %v1497, %v1498
      %v1500 = vrot.slane %v687, 4
      %v1501 = vsel %vm1426, %v1498, %v1500
      %v1502 = vrot.slane %v688, 4
      %v1503 = vrot.slane %v689, 4
      %v1504 = vsel %vm1426, %v1502, %v1503
      %v1505 = vrot.slane %v690, 4
      %v1506 = vsel %vm1426, %v1503, %v1505
      %v1507 = vrot.slane %v691, 4
      %v1508 = vrot.slane %v692, 4
      %v1509 = vsel %vm1426, %v1507, %v1508
      %v1510 = vrot.slane %v693, 4
      %v1511 = vsel %vm1426, %v1508, %v1510
      %v1512 = vrot.slane %v694, 4
      %v1513 = vrot.slane %v695, 4
      %v1514 = vsel %vm1426, %v1512, %v1513
      %v1515 = vrot.slane %v696, 4
      %v1516 = vsel %vm1426, %v1513, %v1515
      %v1517 = vrot.slane %v697, 4
      %v1518 = vrot.slane %v698, 4
      %v1519 = vsel %vm1426, %v1517, %v1518
      %v1520 = vrot.slane %v699, 4
      %v1521 = vsel %vm1426, %v1518, %v1520
      %v1522 = vrot.slane %v700, 4
      %v1523 = vrot.slane %v701, 4
      %v1524 = vsel %vm1426, %v1522, %v1523
      %v1525 = vrot.slane %v702, 4
      %v1526 = vsel %vm1426, %v1523, %v1525
      %vm1567 = vcmask 261120
      %v1568 = vsel %vm1567, %v643, %v865
      %v1569 = vsel %vm1567, %v644, %v867
      %v1570 = vsel %vm1567, %v646, %v869
      %v1571 = vsel %vm1567, %v647, %v871
      %v1572 = vsel %vm1567, %v649, %v873
      %v1573 = vsel %vm1567, %v650, %v875
      %v1574 = vsel %vm1567, %v652, %v877
      %v1575 = vsel %vm1567, %v653, %v879
      %v1576 = vsel %vm1567, %v655, %v881
      %v1577 = vsel %vm1567, %v656, %v883
      %v1578 = vsel %vm1567, %v658, %v885
      %v1579 = vsel %vm1567, %v659, %v887
      %v1580 = vsel %vm1567, %v661, %v889
      %v1581 = vsel %vm1567, %v662, %v891
      %v1582 = vsel %vm1567, %v664, %v893
      %v1583 = vsel %vm1567, %v665, %v895
      %v1584 = vsel %vm1567, %v667, %v897
      %v1585 = vsel %vm1567, %v668, %v899
      %v1586 = vsel %vm1567, %v670, %v901
      %v1587 = vsel %vm1567, %v671, %v903
      %v1588 = vsel %vm1567, %v673, %v905
      %v1589 = vsel %vm1567, %v674, %v907
      %v1590 = vsel %vm1567, %v676, %v909
      %v1591 = vsel %vm1567, %v677, %v911
      %v1592 = vsel %vm1567, %v679, %v913
      %v1593 = vsel %vm1567, %v680, %v915
      %v1594 = vsel %vm1567, %v682, %v917
      %v1595 = vsel %vm1567, %v683, %v919
      %v1596 = vsel %vm1567, %v685, %v921
      %v1597 = vsel %vm1567, %v686, %v923
      %v1598 = vsel %vm1567, %v688, %v925
      %v1599 = vsel %vm1567, %v689, %v927
      %v1600 = vsel %vm1567, %v691, %v929
      %v1601 = vsel %vm1567, %v692, %v931
      %v1602 = vsel %vm1567, %v694, %v933
      %v1603 = vsel %vm1567, %v695, %v935
      %v1604 = vsel %vm1567, %v697, %v937
      %v1605 = vsel %vm1567, %v698, %v939
      %v1606 = vsel %vm1567, %v700, %v941
      %v1607 = vsel %vm1567, %v701, %v943
      %vm1608 = vcmask 523264
      %v1609 = vsel %vm1608, %v1568, %v1086
      %v1610 = vsel %vm1608, %v1569, %v1088
      %v1611 = vsel %vm1608, %v1570, %v1090
      %v1612 = vsel %vm1608, %v1571, %v1092
      %v1613 = vsel %vm1608, %v1572, %v1094
      %v1614 = vsel %vm1608, %v1573, %v1096
      %v1615 = vsel %vm1608, %v1574, %v1098
      %v1616 = vsel %vm1608, %v1575, %v1100
      %v1617 = vsel %vm1608, %v1576, %v1102
      %v1618 = vsel %vm1608, %v1577, %v1104
      %v1619 = vsel %vm1608, %v1578, %v1106
      %v1620 = vsel %vm1608, %v1579, %v1108
      %v1621 = vsel %vm1608, %v1580, %v1110
      %v1622 = vsel %vm1608, %v1581, %v1112
      %v1623 = vsel %vm1608, %v1582, %v1114
      %v1624 = vsel %vm1608, %v1583, %v1116
      %v1625 = vsel %vm1608, %v1584, %v1118
      %v1626 = vsel %vm1608, %v1585, %v1120
      %v1627 = vsel %vm1608, %v1586, %v1122
      %v1628 = vsel %vm1608, %v1587, %v1124
      %v1629 = vsel %vm1608, %v1588, %v1126
      %v1630 = vsel %vm1608, %v1589, %v1128
      %v1631 = vsel %vm1608, %v1590, %v1130
      %v1632 = vsel %vm1608, %v1591, %v1132
      %v1633 = vsel %vm1608, %v1592, %v1134
      %v1634 = vsel %vm1608, %v1593, %v1136
      %v1635 = vsel %vm1608, %v1594, %v1138
      %v1636 = vsel %vm1608, %v1595, %v1140
      %v1637 = vsel %vm1608, %v1596, %v1142
      %v1638 = vsel %vm1608, %v1597, %v1144
      %v1639 = vsel %vm1608, %v1598, %v1146
      %v1640 = vsel %vm1608, %v1599, %v1148
      %v1641 = vsel %vm1608, %v1600, %v1150
      %v1642 = vsel %vm1608, %v1601, %v1152
      %v1643 = vsel %vm1608, %v1602, %v1154
      %v1644 = vsel %vm1608, %v1603, %v1156
      %v1645 = vsel %vm1608, %v1604, %v1158
      %v1646 = vsel %vm1608, %v1605, %v1160
      %v1647 = vsel %vm1608, %v1606, %v1162
      %v1648 = vsel %vm1608, %v1607, %v1164
      %vm1649 = vcmask 785408
      %v1650 = vsel %vm1649, %v1609, %v1307
      %v1651 = vsel %vm1649, %v1610, %v1309
      %v1652 = vsel %vm1649, %v1611, %v1311
      %v1653 = vsel %vm1649, %v1612, %v1313
      %v1654 = vsel %vm1649, %v1613, %v1315
      %v1655 = vsel %vm1649, %v1614, %v1317
      %v1656 = vsel %vm1649, %v1615, %v1319
      %v1657 = vsel %vm1649, %v1616, %v1321
      %v1658 = vsel %vm1649, %v1617, %v1323
      %v1659 = vsel %vm1649, %v1618, %v1325
      %v1660 = vsel %vm1649, %v1619, %v1327
      %v1661 = vsel %vm1649, %v1620, %v1329
      %v1662 = vsel %vm1649, %v1621, %v1331
      %v1663 = vsel %vm1649, %v1622, %v1333
      %v1664 = vsel %vm1649, %v1623, %v1335
      %v1665 = vsel %vm1649, %v1624, %v1337
      %v1666 = vsel %vm1649, %v1625, %v1339
      %v1667 = vsel %vm1649, %v1626, %v1341
      %v1668 = vsel %vm1649, %v1627, %v1343
      %v1669 = vsel %vm1649, %v1628, %v1345
      %v1670 = vsel %vm1649, %v1629, %v1347
      %v1671 = vsel %vm1649, %v1630, %v1349
      %v1672 = vsel %vm1649, %v1631, %v1351
      %v1673 = vsel %vm1649, %v1632, %v1353
      %v1674 = vsel %vm1649, %v1633, %v1355
      %v1675 = vsel %vm1649, %v1634, %v1357
      %v1676 = vsel %vm1649, %v1635, %v1359
      %v1677 = vsel %vm1649, %v1636, %v1361
      %v1678 = vsel %vm1649, %v1637, %v1363
      %v1679 = vsel %vm1649, %v1638, %v1365
      %v1680 = vsel %vm1649, %v1639, %v1367
      %v1681 = vsel %vm1649, %v1640, %v1369
      %v1682 = vsel %vm1649, %v1641, %v1371
      %v1683 = vsel %vm1649, %v1642, %v1373
      %v1684 = vsel %vm1649, %v1643, %v1375
      %v1685 = vsel %vm1649, %v1644, %v1377
      %v1686 = vsel %vm1649, %v1645, %v1379
      %v1687 = vsel %vm1649, %v1646, %v1381
      %v1688 = vsel %vm1649, %v1647, %v1383
      %v1689 = vsel %vm1649, %v1648, %v1385
      %v1690 = vpack.c.bf16 %v1429, %v1650
      %v1691 = vpack.c.bf16 %v1431, %v1651
      %v1692 = vpack.c.bf16 %v1434, %v1652
      %v1693 = vpack.c.bf16 %v1436, %v1653
      %v1694 = vpack.c.bf16 %v1439, %v1654
      %v1695 = vpack.c.bf16 %v1441, %v1655
      %v1696 = vpack.c.bf16 %v1444, %v1656
      %v1697 = vpack.c.bf16 %v1446, %v1657
      %v1698 = vpack.c.bf16 %v1449, %v1658
      %v1699 = vpack.c.bf16 %v1451, %v1659
      %v1700 = vpack.c.bf16 %v1454, %v1660
      %v1701 = vpack.c.bf16 %v1456, %v1661
      %v1702 = vpack.c.bf16 %v1459, %v1662
      %v1703 = vpack.c.bf16 %v1461, %v1663
      %v1704 = vpack.c.bf16 %v1464, %v1664
      %v1705 = vpack.c.bf16 %v1466, %v1665
      %v1706 = vpack.c.bf16 %v1469, %v1666
      %v1707 = vpack.c.bf16 %v1471, %v1667
      %v1708 = vpack.c.bf16 %v1474, %v1668
      %v1709 = vpack.c.bf16 %v1476, %v1669
      %v1710 = vpack.c.bf16 %v1479, %v1670
      %v1711 = vpack.c.bf16 %v1481, %v1671
      %v1712 = vpack.c.bf16 %v1484, %v1672
      %v1713 = vpack.c.bf16 %v1486, %v1673
      %v1714 = vpack.c.bf16 %v1489, %v1674
      %v1715 = vpack.c.bf16 %v1491, %v1675
      %v1716 = vpack.c.bf16 %v1494, %v1676
      %v1717 = vpack.c.bf16 %v1496, %v1677
      %v1718 = vpack.c.bf16 %v1499, %v1678
      %v1719 = vpack.c.bf16 %v1501, %v1679
      %v1720 = vpack.c.bf16 %v1504, %v1680
      %v1721 = vpack.c.bf16 %v1506, %v1681
      %v1722 = vpack.c.bf16 %v1509, %v1682
      %v1723 = vpack.c.bf16 %v1511, %v1683
      %v1724 = vpack.c.bf16 %v1514, %v1684
      %v1725 = vpack.c.bf16 %v1516, %v1685
      %v1726 = vpack.c.bf16 %v1519, %v1686
      %v1727 = vpack.c.bf16 %v1521, %v1687
      %v1728 = vpack.c.bf16 %v1524, %v1688
      %v1729 = vpack.c.bf16 %v1526, %v1689
      %v1730 = vld [vmem:[%s2] sm:$0xf]
      %v1731 = vld [vmem:[%s2 + $0x4] sm:$0xf]
      %v1732 = vld [vmem:[%s2 + $0x8] sm:$0xf]
      %v1733 = vld [vmem:[%s2 + $0xc] sm:$0xf]
      %v1734 = vld [vmem:[%s2 + $0x10] sm:$0xf]
      %v1735 = vld [vmem:[%s2 + $0x14] sm:$0xf]
      %v1736 = vld [vmem:[%s2 + $0x18] sm:$0xf]
      %v1737 = vld [vmem:[%s2 + $0x1c] sm:$0xf]
      %v1738 = vld [vmem:[%s2 + $0x20] sm:$0xf]
      %v1739 = vld [vmem:[%s2 + $0x24] sm:$0xf]
      %v1740 = vld [vmem:[%s2 + $0x28] sm:$0xf]
      %v1741 = vld [vmem:[%s2 + $0x2c] sm:$0xf]
      %v1742 = vld [vmem:[%s2 + $0x30] sm:$0xf]
      %v1743 = vld [vmem:[%s2 + $0x34] sm:$0xf]
      %v1744 = vld [vmem:[%s2 + $0x38] sm:$0xf]
      %v1745 = vld [vmem:[%s2 + $0x3c] sm:$0xf]
      %v1746 = vld [vmem:[%s2 + $0x40] sm:$0xf]
      %v1747 = vld [vmem:[%s2 + $0x44] sm:$0xf]
      %v1748 = vld [vmem:[%s2 + $0x48] sm:$0xf]
      %v1749 = vld [vmem:[%s2 + $0x4c] sm:$0xf]
      %v1782 = vunpack.c.l.b16 %v1690
      %v1783 = vunpack.c.h.b16 %v1690
      %v1784 = vunpack.c.l.b16 %v1691
      %v1785 = vunpack.c.h.b16 %v1691
      %v1786 = vunpack.c.l.b16 %v1692
      %v1787 = vunpack.c.h.b16 %v1692
      %v1788 = vunpack.c.l.b16 %v1693
      %v1789 = vunpack.c.h.b16 %v1693
      %v1790 = vunpack.c.l.b16 %v1694
      %v1791 = vunpack.c.h.b16 %v1694
      %v1792 = vunpack.c.l.b16 %v1695
      %v1793 = vunpack.c.h.b16 %v1695
      %v1794 = vunpack.c.l.b16 %v1696
      %v1795 = vunpack.c.h.b16 %v1696
      %v1796 = vunpack.c.l.b16 %v1697
      %v1797 = vunpack.c.h.b16 %v1697
      %v1798 = vunpack.c.l.b16 %v1698
      %v1799 = vunpack.c.h.b16 %v1698
      %v1800 = vunpack.c.l.b16 %v1699
      %v1801 = vunpack.c.h.b16 %v1699
      %v1802 = vunpack.c.l.b16 %v1700
      %v1803 = vunpack.c.h.b16 %v1700
      %v1804 = vunpack.c.l.b16 %v1701
      %v1805 = vunpack.c.h.b16 %v1701
      %v1806 = vunpack.c.l.b16 %v1702
      %v1807 = vunpack.c.h.b16 %v1702
      %v1808 = vunpack.c.l.b16 %v1703
      %v1809 = vunpack.c.h.b16 %v1703
      %v1810 = vunpack.c.l.b16 %v1704
      %v1811 = vunpack.c.h.b16 %v1704
      %v1812 = vunpack.c.l.b16 %v1705
      %v1813 = vunpack.c.h.b16 %v1705
      %v1814 = vunpack.c.l.b16 %v1706
      %v1815 = vunpack.c.h.b16 %v1706
      %v1816 = vunpack.c.l.b16 %v1707
      %v1817 = vunpack.c.h.b16 %v1707
      %v1818 = vunpack.c.l.b16 %v1708
      %v1819 = vunpack.c.h.b16 %v1708
      %v1820 = vunpack.c.l.b16 %v1709
      %v1821 = vunpack.c.h.b16 %v1709
      %v1822 = vunpack.c.l.b16 %v1710
      %v1823 = vunpack.c.h.b16 %v1710
      %v1824 = vunpack.c.l.b16 %v1711
      %v1825 = vunpack.c.h.b16 %v1711
      %v1826 = vunpack.c.l.b16 %v1712
      %v1827 = vunpack.c.h.b16 %v1712
      %v1828 = vunpack.c.l.b16 %v1713
      %v1829 = vunpack.c.h.b16 %v1713
      %v1830 = vunpack.c.l.b16 %v1714
      %v1831 = vunpack.c.h.b16 %v1714
      %v1832 = vunpack.c.l.b16 %v1715
      %v1833 = vunpack.c.h.b16 %v1715
      %v1834 = vunpack.c.l.b16 %v1716
      %v1835 = vunpack.c.h.b16 %v1716
      %v1836 = vunpack.c.l.b16 %v1717
      %v1837 = vunpack.c.h.b16 %v1717
      %v1838 = vunpack.c.l.b16 %v1718
      %v1839 = vunpack.c.h.b16 %v1718
      %v1840 = vunpack.c.l.b16 %v1719
      %v1841 = vunpack.c.h.b16 %v1719
      %v1842 = vunpack.c.l.b16 %v1720
      %v1843 = vunpack.c.h.b16 %v1720
      %v1844 = vunpack.c.l.b16 %v1721
      %v1845 = vunpack.c.h.b16 %v1721
      %v1846 = vpack.c.b16 %v1784, %v1782
      %v1847 = vpack.c.b16 %v1785, %v1783
      %v1848 = vpack.c.b16 %v1788, %v1786
      %v1849 = vpack.c.b16 %v1789, %v1787
      %v1850 = vpack.c.b16 %v1792, %v1790
      %v1851 = vpack.c.b16 %v1793, %v1791
      %v1852 = vpack.c.b16 %v1796, %v1794
      %v1853 = vpack.c.b16 %v1797, %v1795
      %v1854 = vpack.c.b16 %v1800, %v1798
      %v1855 = vpack.c.b16 %v1801, %v1799
      %v1856 = vpack.c.b16 %v1804, %v1802
      %v1857 = vpack.c.b16 %v1805, %v1803
      %v1858 = vpack.c.b16 %v1808, %v1806
      %v1859 = vpack.c.b16 %v1809, %v1807
      %v1860 = vpack.c.b16 %v1812, %v1810
      %v1861 = vpack.c.b16 %v1813, %v1811
      %v1862 = vpack.c.b16 %v1816, %v1814
      %v1863 = vpack.c.b16 %v1817, %v1815
      %v1864 = vpack.c.b16 %v1820, %v1818
      %v1865 = vpack.c.b16 %v1821, %v1819
      %v1866 = vpack.c.b16 %v1824, %v1822
      %v1867 = vpack.c.b16 %v1825, %v1823
      %v1868 = vpack.c.b16 %v1828, %v1826
      %v1869 = vpack.c.b16 %v1829, %v1827
      %v1870 = vpack.c.b16 %v1832, %v1830
      %v1871 = vpack.c.b16 %v1833, %v1831
      %v1872 = vpack.c.b16 %v1836, %v1834
      %v1873 = vpack.c.b16 %v1837, %v1835
      %v1874 = vpack.c.b16 %v1840, %v1838
      %v1875 = vpack.c.b16 %v1841, %v1839
      %v1876 = vpack.c.b16 %v1844, %v1842
      %v1877 = vpack.c.b16 %v1845, %v1843
      %v1914 = vunpack.c.l.b16 %v1730
      %v1915 = vunpack.c.l.b16 %v1731
      %v1916 = vunpack.c.l.b16 %v1732
      %v1917 = vunpack.c.l.b16 %v1733
      %v1918 = vunpack.c.l.b16 %v1734
      %v1919 = vunpack.c.l.b16 %v1735
      %v1920 = vunpack.c.l.b16 %v1736
      %v1921 = vunpack.c.l.b16 %v1737
      %v1922 = vunpack.c.l.b16 %v1738
      %v1923 = vunpack.c.l.b16 %v1739
      %v1924 = vunpack.c.l.b16 %v1740
      %v1925 = vunpack.c.l.b16 %v1741
      %v1926 = vunpack.c.l.b16 %v1742
      %v1927 = vunpack.c.l.b16 %v1743
      %v1928 = vunpack.c.l.b16 %v1744
      %v1929 = vunpack.c.l.b16 %v1745
      %v1930 = vunpack.c.l.b16 %v1746
      %v1931 = vunpack.c.l.b16 %v1747
      %v1932 = vunpack.c.l.b16 %v1748
      %v1933 = vunpack.c.l.b16 %v1749
      %v1934 = vpack.c.b16 %v1915, %v1914
      %v1935 = vpack.c.b16 %v1917, %v1916
      %v1936 = vpack.c.b16 %v1919, %v1918
      %v1937 = vpack.c.b16 %v1921, %v1920
      %v1938 = vpack.c.b16 %v1923, %v1922
      %v1939 = vpack.c.b16 %v1925, %v1924
      %v1940 = vpack.c.b16 %v1927, %v1926
      %v1941 = vpack.c.b16 %v1929, %v1928
      %v1942 = vpack.c.b16 %v1931, %v1930
      %v1943 = vpack.c.b16 %v1933, %v1932
      %v1955 = vsel %vm1567, %v1847, 0
      %v1958 = vsel %vm1567, %v1849, 0
      %v1961 = vsel %vm1567, %v1851, 0
      %v1964 = vsel %vm1567, %v1853, 0
      %v1967 = vsel %vm1567, %v1855, 0
      %v1970 = vsel %vm1567, %v1857, 0
      %v1973 = vsel %vm1567, %v1859, 0
      %v1976 = vsel %vm1567, %v1861, 0
      %v1979 = vsel %vm1567, %v1863, 0
      %v1982 = vsel %vm1567, %v1865, 0
      %v1985 = vsel %vm1567, %v1867, 0
      %v1988 = vsel %vm1567, %v1869, 0
      %v1991 = vsel %vm1567, %v1871, 0
      %v1994 = vsel %vm1567, %v1873, 0
      %v1997 = vsel %vm1567, %v1875, 0
      %v2000 = vsel %vm1567, %v1877, 0
      %2002 = vmatpush.bf16.msra.mxu0 %v1941
      %2003 = vmatpush.bf16.msra.mxu0 %v1940
      %2004 = vmatpush.bf16.msra.mxu0 %v1939
      %2005 = vmatpush.bf16.msra.mxu0 %v1938
      %2006 = vmatpush.bf16.msra.mxu0 %v1937
      %2007 = vmatpush.bf16.msra.mxu0 %v1936
      %2008 = vmatpush.bf16.msra.mxu0 %v1935
      %2009 = vmatpush.bf16.msra.mxu0 %v1934
      %2010 = vmatmul.bf16.gmra.mxu0 %v1846
      %v2011 = vpop.f32.mrf.mxu0
      %v2012 = vadd.f32 0.0, %v2011
      %v2013 = vpop.f32.mrf.mxu0
      %v2014 = vadd.f32 0.0, %v2013
      %2015 = vmatmul.bf16.gmra.mxu0 %v1848
      %v2016 = vpop.f32.mrf.mxu0
      %v2017 = vadd.f32 0.0, %v2016
      %v2018 = vpop.f32.mrf.mxu0
      %v2019 = vadd.f32 0.0, %v2018
      %2020 = vmatmul.bf16.gmra.mxu0 %v1850
      %v2021 = vpop.f32.mrf.mxu0
      %v2022 = vadd.f32 0.0, %v2021
      %v2023 = vpop.f32.mrf.mxu0
      %v2024 = vadd.f32 0.0, %v2023
      %2025 = vmatmul.bf16.gmra.mxu0 %v1852
      %v2026 = vpop.f32.mrf.mxu0
      %v2027 = vadd.f32 0.0, %v2026
      %v2028 = vpop.f32.mrf.mxu0
      %v2029 = vadd.f32 0.0, %v2028
      %2030 = vmatmul.bf16.gmra.mxu0 %v1854
      %v2031 = vpop.f32.mrf.mxu0
      %v2032 = vadd.f32 0.0, %v2031
      %v2033 = vpop.f32.mrf.mxu0
      %v2034 = vadd.f32 0.0, %v2033
      %2035 = vmatmul.bf16.gmra.mxu0 %v1856
      %v2036 = vpop.f32.mrf.mxu0
      %v2037 = vadd.f32 0.0, %v2036
      %v2038 = vpop.f32.mrf.mxu0
      %v2039 = vadd.f32 0.0, %v2038
      %2040 = vmatmul.bf16.gmra.mxu0 %v1858
      %v2041 = vpop.f32.mrf.mxu0
      %v2042 = vadd.f32 0.0, %v2041
      %v2043 = vpop.f32.mrf.mxu0
      %v2044 = vadd.f32 0.0, %v2043
      %2045 = vmatmul.bf16.gmra.mxu0 %v1860
      %v2046 = vpop.f32.mrf.mxu0
      %v2047 = vadd.f32 0.0, %v2046
      %v2048 = vpop.f32.mrf.mxu0
      %v2049 = vadd.f32 0.0, %v2048
      %2050 = vmatmul.bf16.gmra.mxu0 %v1862
      %v2051 = vpop.f32.mrf.mxu0
      %v2052 = vadd.f32 0.0, %v2051
      %v2053 = vpop.f32.mrf.mxu0
      %v2054 = vadd.f32 0.0, %v2053
      %2055 = vmatmul.bf16.gmra.mxu0 %v1864
      %v2056 = vpop.f32.mrf.mxu0
      %v2057 = vadd.f32 0.0, %v2056
      %v2058 = vpop.f32.mrf.mxu0
      %v2059 = vadd.f32 0.0, %v2058
      %2060 = vmatmul.bf16.gmra.mxu0 %v1866
      %v2061 = vpop.f32.mrf.mxu0
      %v2062 = vadd.f32 0.0, %v2061
      %v2063 = vpop.f32.mrf.mxu0
      %v2064 = vadd.f32 0.0, %v2063
      %2065 = vmatmul.bf16.gmra.mxu0 %v1868
      %v2066 = vpop.f32.mrf.mxu0
      %v2067 = vadd.f32 0.0, %v2066
      %v2068 = vpop.f32.mrf.mxu0
      %v2069 = vadd.f32 0.0, %v2068
      %2070 = vmatmul.bf16.gmra.mxu0 %v1870
      %v2071 = vpop.f32.mrf.mxu0
      %v2072 = vadd.f32 0.0, %v2071
      %v2073 = vpop.f32.mrf.mxu0
      %v2074 = vadd.f32 0.0, %v2073
      %2075 = vmatmul.bf16.gmra.mxu0 %v1872
      %v2076 = vpop.f32.mrf.mxu0
      %v2077 = vadd.f32 0.0, %v2076
      %v2078 = vpop.f32.mrf.mxu0
      %v2079 = vadd.f32 0.0, %v2078
      %2080 = vmatmul.bf16.gmra.mxu0 %v1874
      %v2081 = vpop.f32.mrf.mxu0
      %v2082 = vadd.f32 0.0, %v2081
      %v2083 = vpop.f32.mrf.mxu0
      %v2084 = vadd.f32 0.0, %v2083
      %2085 = vmatmul.bf16.gmra.mxu0 %v1876
      %v2086 = vpop.f32.mrf.mxu0
      %v2087 = vadd.f32 0.0, %v2086
      %v2088 = vpop.f32.mrf.mxu0
      %v2089 = vadd.f32 0.0, %v2088
      %2090 = vdwg.mxu0
      %2091 = vmatpush.bf16.msra.mxu0 0
      %2092 = vmatpush.bf16.msra.mxu0 0
      %2093 = vmatpush.bf16.msra.mxu0 0
      %2094 = vmatpush.bf16.msra.mxu0 0
      %2095 = vmatpush.bf16.msra.mxu0 0
      %2096 = vmatpush.bf16.msra.mxu0 0
      %2097 = vmatpush.bf16.msra.mxu0 %v1943
      %2098 = vmatpush.bf16.msra.mxu0 %v1942
      %2099 = vmatmul.bf16.gmra.mxu0 %v1955
      %v2100 = vpop.f32.mrf.mxu0
      %v2101 = vadd.f32 %v2012, %v2100
      %v2102 = vpop.f32.mrf.mxu0
      %v2103 = vadd.f32 %v2014, %v2102
      %2104 = vmatmul.bf16.gmra.mxu0 %v1958
      %v2105 = vpop.f32.mrf.mxu0
      %v2106 = vadd.f32 %v2017, %v2105
      %v2107 = vpop.f32.mrf.mxu0
      %v2108 = vadd.f32 %v2019, %v2107
      %2109 = vmatmul.bf16.gmra.mxu0 %v1961
      %v2110 = vpop.f32.mrf.mxu0
      %v2111 = vadd.f32 %v2022, %v2110
      %v2112 = vpop.f32.mrf.mxu0
      %v2113 = vadd.f32 %v2024, %v2112
      %2114 = vmatmul.bf16.gmra.mxu0 %v1964
      %v2115 = vpop.f32.mrf.mxu0
      %v2116 = vadd.f32 %v2027, %v2115
      %v2117 = vpop.f32.mrf.mxu0
      %v2118 = vadd.f32 %v2029, %v2117
      %2119 = vmatmul.bf16.gmra.mxu0 %v1967
      %v2120 = vpop.f32.mrf.mxu0
      %v2121 = vadd.f32 %v2032, %v2120
      %v2122 = vpop.f32.mrf.mxu0
      %v2123 = vadd.f32 %v2034, %v2122
      %2124 = vmatmul.bf16.gmra.mxu0 %v1970
      %v2125 = vpop.f32.mrf.mxu0
      %v2126 = vadd.f32 %v2037, %v2125
      %v2127 = vpop.f32.mrf.mxu0
      %v2128 = vadd.f32 %v2039, %v2127
      %2129 = vmatmul.bf16.gmra.mxu0 %v1973
      %v2130 = vpop.f32.mrf.mxu0
      %v2131 = vadd.f32 %v2042, %v2130
      %v2132 = vpop.f32.mrf.mxu0
      %v2133 = vadd.f32 %v2044, %v2132
      %2134 = vmatmul.bf16.gmra.mxu0 %v1976
      %v2135 = vpop.f32.mrf.mxu0
      %v2136 = vadd.f32 %v2047, %v2135
      %v2137 = vpop.f32.mrf.mxu0
      %v2138 = vadd.f32 %v2049, %v2137
      %2139 = vmatmul.bf16.gmra.mxu0 %v1979
      %v2140 = vpop.f32.mrf.mxu0
      %v2141 = vadd.f32 %v2052, %v2140
      %v2142 = vpop.f32.mrf.mxu0
      %v2143 = vadd.f32 %v2054, %v2142
      %2144 = vmatmul.bf16.gmra.mxu0 %v1982
      %v2145 = vpop.f32.mrf.mxu0
      %v2146 = vadd.f32 %v2057, %v2145
      %v2147 = vpop.f32.mrf.mxu0
      %v2148 = vadd.f32 %v2059, %v2147
      %2149 = vmatmul.bf16.gmra.mxu0 %v1985
      %v2150 = vpop.f32.mrf.mxu0
      %v2151 = vadd.f32 %v2062, %v2150
      %v2152 = vpop.f32.mrf.mxu0
      %v2153 = vadd.f32 %v2064, %v2152
      %2154 = vmatmul.bf16.gmra.mxu0 %v1988
      %v2155 = vpop.f32.mrf.mxu0
      %v2156 = vadd.f32 %v2067, %v2155
      %v2157 = vpop.f32.mrf.mxu0
      %v2158 = vadd.f32 %v2069, %v2157
      %2159 = vmatmul.bf16.gmra.mxu0 %v1991
      %v2160 = vpop.f32.mrf.mxu0
      %v2161 = vadd.f32 %v2072, %v2160
      %v2162 = vpop.f32.mrf.mxu0
      %v2163 = vadd.f32 %v2074, %v2162
      %2164 = vmatmul.bf16.gmra.mxu0 %v1994
      %v2165 = vpop.f32.mrf.mxu0
      %v2166 = vadd.f32 %v2077, %v2165
      %v2167 = vpop.f32.mrf.mxu0
      %v2168 = vadd.f32 %v2079, %v2167
      %2169 = vmatmul.bf16.gmra.mxu0 %v1997
      %v2170 = vpop.f32.mrf.mxu0
      %v2171 = vadd.f32 %v2082, %v2170
      %v2172 = vpop.f32.mrf.mxu0
      %v2173 = vadd.f32 %v2084, %v2172
      %2174 = vmatmul.bf16.gmra.mxu0 %v2000
      %v2175 = vpop.f32.mrf.mxu0
      %v2176 = vadd.f32 %v2087, %v2175
      %v2177 = vpop.f32.mrf.mxu0
      %v2178 = vadd.f32 %v2089, %v2177
      %2179 = vdwg.mxu0
      %v2180 = vadd.f32 %v564, %v2101
      %v2181 = vadd.f32 %v566, %v2103
      %v2182 = vadd.f32 %v569, %v2106
      %v2183 = vadd.f32 %v571, %v2108
      %v2184 = vadd.f32 %v574, %v2111
      %v2185 = vadd.f32 %v576, %v2113
      %v2186 = vadd.f32 %v579, %v2116
      %v2187 = vadd.f32 %v581, %v2118
      %v2188 = vadd.f32 %v584, %v2121
      %v2189 = vadd.f32 %v586, %v2123
      %v2190 = vadd.f32 %v589, %v2126
      %v2191 = vadd.f32 %v591, %v2128
      %v2192 = vadd.f32 %v594, %v2131
      %v2193 = vadd.f32 %v596, %v2133
      %v2194 = vadd.f32 %v599, %v2136
      %v2195 = vadd.f32 %v601, %v2138
      %v2196 = vadd.f32 %v604, %v2141
      %v2197 = vadd.f32 %v606, %v2143
      %v2198 = vadd.f32 %v609, %v2146
      %v2199 = vadd.f32 %v611, %v2148
      %v2200 = vadd.f32 %v614, %v2151
      %v2201 = vadd.f32 %v616, %v2153
      %v2202 = vadd.f32 %v619, %v2156
      %v2203 = vadd.f32 %v621, %v2158
      %v2204 = vadd.f32 %v624, %v2161
      %v2205 = vadd.f32 %v626, %v2163
      %v2206 = vadd.f32 %v629, %v2166
      %v2207 = vadd.f32 %v631, %v2168
      %v2208 = vadd.f32 %v634, %v2171
      %v2209 = vadd.f32 %v636, %v2173
      %v2210 = vadd.f32 %v639, %v2176
      %v2211 = vadd.f32 %v641, %v2178
      %s2212 = scalar_lea.vmem %s2, 80
      %v2213 = vld [vmem:[%s2212] sm:$0xf]
      %v2214 = vld [vmem:[%s2212 + $0x4] sm:$0xf]
      %v2215 = vld [vmem:[%s2212 + $0x8] sm:$0xf]
      %v2216 = vld [vmem:[%s2212 + $0xc] sm:$0xf]
      %v2217 = vld [vmem:[%s2212 + $0x10] sm:$0xf]
      %v2218 = vld [vmem:[%s2212 + $0x14] sm:$0xf]
      %v2219 = vld [vmem:[%s2212 + $0x18] sm:$0xf]
      %v2220 = vld [vmem:[%s2212 + $0x1c] sm:$0xf]
      %v2221 = vld [vmem:[%s2212 + $0x20] sm:$0xf]
      %v2222 = vld [vmem:[%s2212 + $0x24] sm:$0xf]
      %v2223 = vld [vmem:[%s2212 + $0x28] sm:$0xf]
      %v2224 = vld [vmem:[%s2212 + $0x2c] sm:$0xf]
      %v2225 = vld [vmem:[%s2212 + $0x30] sm:$0xf]
      %v2226 = vld [vmem:[%s2212 + $0x34] sm:$0xf]
      %v2227 = vld [vmem:[%s2212 + $0x38] sm:$0xf]
      %v2228 = vld [vmem:[%s2212 + $0x3c] sm:$0xf]
      %v2229 = vld [vmem:[%s2212 + $0x40] sm:$0xf]
      %v2230 = vld [vmem:[%s2212 + $0x44] sm:$0xf]
      %v2231 = vld [vmem:[%s2212 + $0x48] sm:$0xf]
      %v2232 = vld [vmem:[%s2212 + $0x4c] sm:$0xf]
      %v2235 = vunpack.c.l.b16 %v1722
      %v2236 = vunpack.c.h.b16 %v1722
      %v2237 = vunpack.c.l.b16 %v1723
      %v2238 = vunpack.c.h.b16 %v1723
      %v2239 = vpack.c.b16 %v2237, %v2235
      %v2240 = vpack.c.b16 %v2238, %v2236
      %v2262 = vunpack.c.l.b16 %v2213
      %v2263 = vunpack.c.l.b16 %v2214
      %v2264 = vunpack.c.l.b16 %v2215
      %v2265 = vunpack.c.l.b16 %v2216
      %v2266 = vunpack.c.l.b16 %v2217
      %v2267 = vunpack.c.l.b16 %v2218
      %v2268 = vunpack.c.l.b16 %v2219
      %v2269 = vunpack.c.l.b16 %v2220
      %v2270 = vunpack.c.l.b16 %v2221
      %v2271 = vunpack.c.l.b16 %v2222
      %v2272 = vunpack.c.l.b16 %v2223
      %v2273 = vunpack.c.l.b16 %v2224
      %v2274 = vunpack.c.l.b16 %v2225
      %v2275 = vunpack.c.l.b16 %v2226
      %v2276 = vunpack.c.l.b16 %v2227
      %v2277 = vunpack.c.l.b16 %v2228
      %v2278 = vunpack.c.l.b16 %v2229
      %v2279 = vunpack.c.l.b16 %v2230
      %v2280 = vunpack.c.l.b16 %v2231
      %v2281 = vunpack.c.l.b16 %v2232
      %v2282 = vpack.c.b16 %v2263, %v2262
      %v2283 = vpack.c.b16 %v2265, %v2264
      %v2284 = vpack.c.b16 %v2267, %v2266
      %v2285 = vpack.c.b16 %v2269, %v2268
      %v2286 = vpack.c.b16 %v2271, %v2270
      %v2287 = vpack.c.b16 %v2273, %v2272
      %v2288 = vpack.c.b16 %v2275, %v2274
      %v2289 = vpack.c.b16 %v2277, %v2276
      %v2290 = vpack.c.b16 %v2279, %v2278
      %v2291 = vpack.c.b16 %v2281, %v2280
      %v2303 = vsel %vm1567, %v2240, 0
      %2305 = vmatpush.bf16.msra.mxu0 %v2289
      %2306 = vmatpush.bf16.msra.mxu0 %v2288
      %2307 = vmatpush.bf16.msra.mxu0 %v2287
      %2308 = vmatpush.bf16.msra.mxu0 %v2286
      %2309 = vmatpush.bf16.msra.mxu0 %v2285
      %2310 = vmatpush.bf16.msra.mxu0 %v2284
      %2311 = vmatpush.bf16.msra.mxu0 %v2283
      %2312 = vmatpush.bf16.msra.mxu0 %v2282
      %2313 = vmatmul.bf16.gmra.mxu0 %v1848
      %v2314 = vpop.f32.mrf.mxu0
      %v2315 = vadd.f32 0.0, %v2314
      %v2316 = vpop.f32.mrf.mxu0
      %v2317 = vadd.f32 0.0, %v2316
      %2318 = vmatmul.bf16.gmra.mxu0 %v1850
      %v2319 = vpop.f32.mrf.mxu0
      %v2320 = vadd.f32 0.0, %v2319
      %v2321 = vpop.f32.mrf.mxu0
      %v2322 = vadd.f32 0.0, %v2321
      %2323 = vmatmul.bf16.gmra.mxu0 %v1852
      %v2324 = vpop.f32.mrf.mxu0
      %v2325 = vadd.f32 0.0, %v2324
      %v2326 = vpop.f32.mrf.mxu0
      %v2327 = vadd.f32 0.0, %v2326
      %2328 = vmatmul.bf16.gmra.mxu0 %v1854
      %v2329 = vpop.f32.mrf.mxu0
      %v2330 = vadd.f32 0.0, %v2329
      %v2331 = vpop.f32.mrf.mxu0
      %v2332 = vadd.f32 0.0, %v2331
      %2333 = vmatmul.bf16.gmra.mxu0 %v1856
      %v2334 = vpop.f32.mrf.mxu0
      %v2335 = vadd.f32 0.0, %v2334
      %v2336 = vpop.f32.mrf.mxu0
      %v2337 = vadd.f32 0.0, %v2336
      %2338 = vmatmul.bf16.gmra.mxu0 %v1858
      %v2339 = vpop.f32.mrf.mxu0
      %v2340 = vadd.f32 0.0, %v2339
      %v2341 = vpop.f32.mrf.mxu0
      %v2342 = vadd.f32 0.0, %v2341
      %2343 = vmatmul.bf16.gmra.mxu0 %v1860
      %v2344 = vpop.f32.mrf.mxu0
      %v2345 = vadd.f32 0.0, %v2344
      %v2346 = vpop.f32.mrf.mxu0
      %v2347 = vadd.f32 0.0, %v2346
      %2348 = vmatmul.bf16.gmra.mxu0 %v1862
      %v2349 = vpop.f32.mrf.mxu0
      %v2350 = vadd.f32 0.0, %v2349
      %v2351 = vpop.f32.mrf.mxu0
      %v2352 = vadd.f32 0.0, %v2351
      %2353 = vmatmul.bf16.gmra.mxu0 %v1864
      %v2354 = vpop.f32.mrf.mxu0
      %v2355 = vadd.f32 0.0, %v2354
      %v2356 = vpop.f32.mrf.mxu0
      %v2357 = vadd.f32 0.0, %v2356
      %2358 = vmatmul.bf16.gmra.mxu0 %v1866
      %v2359 = vpop.f32.mrf.mxu0
      %v2360 = vadd.f32 0.0, %v2359
      %v2361 = vpop.f32.mrf.mxu0
      %v2362 = vadd.f32 0.0, %v2361
      %2363 = vmatmul.bf16.gmra.mxu0 %v1868
      %v2364 = vpop.f32.mrf.mxu0
      %v2365 = vadd.f32 0.0, %v2364
      %v2366 = vpop.f32.mrf.mxu0
      %v2367 = vadd.f32 0.0, %v2366
      %2368 = vmatmul.bf16.gmra.mxu0 %v1870
      %v2369 = vpop.f32.mrf.mxu0
      %v2370 = vadd.f32 0.0, %v2369
      %v2371 = vpop.f32.mrf.mxu0
      %v2372 = vadd.f32 0.0, %v2371
      %2373 = vmatmul.bf16.gmra.mxu0 %v1872
      %v2374 = vpop.f32.mrf.mxu0
      %v2375 = vadd.f32 0.0, %v2374
      %v2376 = vpop.f32.mrf.mxu0
      %v2377 = vadd.f32 0.0, %v2376
      %2378 = vmatmul.bf16.gmra.mxu0 %v1874
      %v2379 = vpop.f32.mrf.mxu0
      %v2380 = vadd.f32 0.0, %v2379
      %v2381 = vpop.f32.mrf.mxu0
      %v2382 = vadd.f32 0.0, %v2381
      %2383 = vmatmul.bf16.gmra.mxu0 %v1876
      %v2384 = vpop.f32.mrf.mxu0
      %v2385 = vadd.f32 0.0, %v2384
      %v2386 = vpop.f32.mrf.mxu0
      %v2387 = vadd.f32 0.0, %v2386
      %2388 = vmatmul.bf16.gmra.mxu0 %v2239
      %v2389 = vpop.f32.mrf.mxu0
      %v2390 = vadd.f32 0.0, %v2389
      %v2391 = vpop.f32.mrf.mxu0
      %v2392 = vadd.f32 0.0, %v2391
      %2393 = vdwg.mxu0
      %2394 = vmatpush.bf16.msra.mxu0 0
      %2395 = vmatpush.bf16.msra.mxu0 0
      %2396 = vmatpush.bf16.msra.mxu0 0
      %2397 = vmatpush.bf16.msra.mxu0 0
      %2398 = vmatpush.bf16.msra.mxu0 0
      %2399 = vmatpush.bf16.msra.mxu0 0
      %2400 = vmatpush.bf16.msra.mxu0 %v2291
      %2401 = vmatpush.bf16.msra.mxu0 %v2290
      %2402 = vmatmul.bf16.gmra.mxu0 %v1958
      %v2403 = vpop.f32.mrf.mxu0
      %v2404 = vadd.f32 %v2315, %v2403
      %v2405 = vpop.f32.mrf.mxu0
      %v2406 = vadd.f32 %v2317, %v2405
      %2407 = vmatmul.bf16.gmra.mxu0 %v1961
      %v2408 = vpop.f32.mrf.mxu0
      %v2409 = vadd.f32 %v2320, %v2408
      %v2410 = vpop.f32.mrf.mxu0
      %v2411 = vadd.f32 %v2322, %v2410
      %2412 = vmatmul.bf16.gmra.mxu0 %v1964
      %v2413 = vpop.f32.mrf.mxu0
      %v2414 = vadd.f32 %v2325, %v2413
      %v2415 = vpop.f32.mrf.mxu0
      %v2416 = vadd.f32 %v2327, %v2415
      %2417 = vmatmul.bf16.gmra.mxu0 %v1967
      %v2418 = vpop.f32.mrf.mxu0
      %v2419 = vadd.f32 %v2330, %v2418
      %v2420 = vpop.f32.mrf.mxu0
      %v2421 = vadd.f32 %v2332, %v2420
      %2422 = vmatmul.bf16.gmra.mxu0 %v1970
      %v2423 = vpop.f32.mrf.mxu0
      %v2424 = vadd.f32 %v2335, %v2423
      %v2425 = vpop.f32.mrf.mxu0
      %v2426 = vadd.f32 %v2337, %v2425
      %2427 = vmatmul.bf16.gmra.mxu0 %v1973
      %v2428 = vpop.f32.mrf.mxu0
      %v2429 = vadd.f32 %v2340, %v2428
      %v2430 = vpop.f32.mrf.mxu0
      %v2431 = vadd.f32 %v2342, %v2430
      %2432 = vmatmul.bf16.gmra.mxu0 %v1976
      %v2433 = vpop.f32.mrf.mxu0
      %v2434 = vadd.f32 %v2345, %v2433
      %v2435 = vpop.f32.mrf.mxu0
      %v2436 = vadd.f32 %v2347, %v2435
      %2437 = vmatmul.bf16.gmra.mxu0 %v1979
      %v2438 = vpop.f32.mrf.mxu0
      %v2439 = vadd.f32 %v2350, %v2438
      %v2440 = vpop.f32.mrf.mxu0
      %v2441 = vadd.f32 %v2352, %v2440
      %2442 = vmatmul.bf16.gmra.mxu0 %v1982
      %v2443 = vpop.f32.mrf.mxu0
      %v2444 = vadd.f32 %v2355, %v2443
      %v2445 = vpop.f32.mrf.mxu0
      %v2446 = vadd.f32 %v2357, %v2445
      %2447 = vmatmul.bf16.gmra.mxu0 %v1985
      %v2448 = vpop.f32.mrf.mxu0
      %v2449 = vadd.f32 %v2360, %v2448
      %v2450 = vpop.f32.mrf.mxu0
      %v2451 = vadd.f32 %v2362, %v2450
      %2452 = vmatmul.bf16.gmra.mxu0 %v1988
      %v2453 = vpop.f32.mrf.mxu0
      %v2454 = vadd.f32 %v2365, %v2453
      %v2455 = vpop.f32.mrf.mxu0
      %v2456 = vadd.f32 %v2367, %v2455
      %2457 = vmatmul.bf16.gmra.mxu0 %v1991
      %v2458 = vpop.f32.mrf.mxu0
      %v2459 = vadd.f32 %v2370, %v2458
      %v2460 = vpop.f32.mrf.mxu0
      %v2461 = vadd.f32 %v2372, %v2460
      %2462 = vmatmul.bf16.gmra.mxu0 %v1994
      %v2463 = vpop.f32.mrf.mxu0
      %v2464 = vadd.f32 %v2375, %v2463
      %v2465 = vpop.f32.mrf.mxu0
      %v2466 = vadd.f32 %v2377, %v2465
      %2467 = vmatmul.bf16.gmra.mxu0 %v1997
      %v2468 = vpop.f32.mrf.mxu0
      %v2469 = vadd.f32 %v2380, %v2468
      %v2470 = vpop.f32.mrf.mxu0
      %v2471 = vadd.f32 %v2382, %v2470
      %2472 = vmatmul.bf16.gmra.mxu0 %v2000
      %v2473 = vpop.f32.mrf.mxu0
      %v2474 = vadd.f32 %v2385, %v2473
      %v2475 = vpop.f32.mrf.mxu0
      %v2476 = vadd.f32 %v2387, %v2475
      %2477 = vmatmul.bf16.gmra.mxu0 %v2303
      %v2478 = vpop.f32.mrf.mxu0
      %v2479 = vadd.f32 %v2390, %v2478
      %v2480 = vpop.f32.mrf.mxu0
      %v2481 = vadd.f32 %v2392, %v2480
      %2482 = vdwg.mxu0
      %v2483 = vadd.f32 %v2180, %v2404
      %v2484 = vadd.f32 %v2181, %v2406
      %v2485 = vadd.f32 %v2182, %v2409
      %v2486 = vadd.f32 %v2183, %v2411
      %v2487 = vadd.f32 %v2184, %v2414
      %v2488 = vadd.f32 %v2185, %v2416
      %v2489 = vadd.f32 %v2186, %v2419
      %v2490 = vadd.f32 %v2187, %v2421
      %v2491 = vadd.f32 %v2188, %v2424
      %v2492 = vadd.f32 %v2189, %v2426
      %v2493 = vadd.f32 %v2190, %v2429
      %v2494 = vadd.f32 %v2191, %v2431
      %v2495 = vadd.f32 %v2192, %v2434
      %v2496 = vadd.f32 %v2193, %v2436
      %v2497 = vadd.f32 %v2194, %v2439
      %v2498 = vadd.f32 %v2195, %v2441
      %v2499 = vadd.f32 %v2196, %v2444
      %v2500 = vadd.f32 %v2197, %v2446
      %v2501 = vadd.f32 %v2198, %v2449
      %v2502 = vadd.f32 %v2199, %v2451
      %v2503 = vadd.f32 %v2200, %v2454
      %v2504 = vadd.f32 %v2201, %v2456
      %v2505 = vadd.f32 %v2202, %v2459
      %v2506 = vadd.f32 %v2203, %v2461
      %v2507 = vadd.f32 %v2204, %v2464
      %v2508 = vadd.f32 %v2205, %v2466
      %v2509 = vadd.f32 %v2206, %v2469
      %v2510 = vadd.f32 %v2207, %v2471
      %v2511 = vadd.f32 %v2208, %v2474
      %v2512 = vadd.f32 %v2209, %v2476
      %v2513 = vadd.f32 %v2210, %v2479
      %v2514 = vadd.f32 %v2211, %v2481
      %s2515 = scalar_lea.vmem %s2, 160
      %v2516 = vld [vmem:[%s2515] sm:$0xf]
      %v2517 = vld [vmem:[%s2515 + $0x4] sm:$0xf]
      %v2518 = vld [vmem:[%s2515 + $0x8] sm:$0xf]
      %v2519 = vld [vmem:[%s2515 + $0xc] sm:$0xf]
      %v2520 = vld [vmem:[%s2515 + $0x10] sm:$0xf]
      %v2521 = vld [vmem:[%s2515 + $0x14] sm:$0xf]
      %v2522 = vld [vmem:[%s2515 + $0x18] sm:$0xf]
      %v2523 = vld [vmem:[%s2515 + $0x1c] sm:$0xf]
      %v2524 = vld [vmem:[%s2515 + $0x20] sm:$0xf]
      %v2525 = vld [vmem:[%s2515 + $0x24] sm:$0xf]
      %v2526 = vld [vmem:[%s2515 + $0x28] sm:$0xf]
      %v2527 = vld [vmem:[%s2515 + $0x2c] sm:$0xf]
      %v2528 = vld [vmem:[%s2515 + $0x30] sm:$0xf]
      %v2529 = vld [vmem:[%s2515 + $0x34] sm:$0xf]
      %v2530 = vld [vmem:[%s2515 + $0x38] sm:$0xf]
      %v2531 = vld [vmem:[%s2515 + $0x3c] sm:$0xf]
      %v2532 = vld [vmem:[%s2515 + $0x40] sm:$0xf]
      %v2533 = vld [vmem:[%s2515 + $0x44] sm:$0xf]
      %v2534 = vld [vmem:[%s2515 + $0x48] sm:$0xf]
      %v2535 = vld [vmem:[%s2515 + $0x4c] sm:$0xf]
      %v2538 = vunpack.c.l.b16 %v1724
      %v2539 = vunpack.c.h.b16 %v1724
      %v2540 = vunpack.c.l.b16 %v1725
      %v2541 = vunpack.c.h.b16 %v1725
      %v2542 = vpack.c.b16 %v2540, %v2538
      %v2543 = vpack.c.b16 %v2541, %v2539
      %v2565 = vunpack.c.l.b16 %v2516
      %v2566 = vunpack.c.l.b16 %v2517
      %v2567 = vunpack.c.l.b16 %v2518
      %v2568 = vunpack.c.l.b16 %v2519
      %v2569 = vunpack.c.l.b16 %v2520
      %v2570 = vunpack.c.l.b16 %v2521
      %v2571 = vunpack.c.l.b16 %v2522
      %v2572 = vunpack.c.l.b16 %v2523
      %v2573 = vunpack.c.l.b16 %v2524
      %v2574 = vunpack.c.l.b16 %v2525
      %v2575 = vunpack.c.l.b16 %v2526
      %v2576 = vunpack.c.l.b16 %v2527
      %v2577 = vunpack.c.l.b16 %v2528
      %v2578 = vunpack.c.l.b16 %v2529
      %v2579 = vunpack.c.l.b16 %v2530
      %v2580 = vunpack.c.l.b16 %v2531
      %v2581 = vunpack.c.l.b16 %v2532
      %v2582 = vunpack.c.l.b16 %v2533
      %v2583 = vunpack.c.l.b16 %v2534
      %v2584 = vunpack.c.l.b16 %v2535
      %v2585 = vpack.c.b16 %v2566, %v2565
      %v2586 = vpack.c.b16 %v2568, %v2567
      %v2587 = vpack.c.b16 %v2570, %v2569
      %v2588 = vpack.c.b16 %v2572, %v2571
      %v2589 = vpack.c.b16 %v2574, %v2573
      %v2590 = vpack.c.b16 %v2576, %v2575
      %v2591 = vpack.c.b16 %v2578, %v2577
      %v2592 = vpack.c.b16 %v2580, %v2579
      %v2593 = vpack.c.b16 %v2582, %v2581
      %v2594 = vpack.c.b16 %v2584, %v2583
      %v2606 = vsel %vm1567, %v2543, 0
      %2608 = vmatpush.bf16.msra.mxu0 %v2592
      %2609 = vmatpush.bf16.msra.mxu0 %v2591
      %2610 = vmatpush.bf16.msra.mxu0 %v2590
      %2611 = vmatpush.bf16.msra.mxu0 %v2589
      %2612 = vmatpush.bf16.msra.mxu0 %v2588
      %2613 = vmatpush.bf16.msra.mxu0 %v2587
      %2614 = vmatpush.bf16.msra.mxu0 %v2586
      %2615 = vmatpush.bf16.msra.mxu0 %v2585
      %2616 = vmatmul.bf16.gmra.mxu0 %v1850
      %v2617 = vpop.f32.mrf.mxu0
      %v2618 = vadd.f32 0.0, %v2617
      %v2619 = vpop.f32.mrf.mxu0
      %v2620 = vadd.f32 0.0, %v2619
      %2621 = vmatmul.bf16.gmra.mxu0 %v1852
      %v2622 = vpop.f32.mrf.mxu0
      %v2623 = vadd.f32 0.0, %v2622
      %v2624 = vpop.f32.mrf.mxu0
      %v2625 = vadd.f32 0.0, %v2624
      %2626 = vmatmul.bf16.gmra.mxu0 %v1854
      %v2627 = vpop.f32.mrf.mxu0
      %v2628 = vadd.f32 0.0, %v2627
      %v2629 = vpop.f32.mrf.mxu0
      %v2630 = vadd.f32 0.0, %v2629
      %2631 = vmatmul.bf16.gmra.mxu0 %v1856
      %v2632 = vpop.f32.mrf.mxu0
      %v2633 = vadd.f32 0.0, %v2632
      %v2634 = vpop.f32.mrf.mxu0
      %v2635 = vadd.f32 0.0, %v2634
      %2636 = vmatmul.bf16.gmra.mxu0 %v1858
      %v2637 = vpop.f32.mrf.mxu0
      %v2638 = vadd.f32 0.0, %v2637
      %v2639 = vpop.f32.mrf.mxu0
      %v2640 = vadd.f32 0.0, %v2639
      %2641 = vmatmul.bf16.gmra.mxu0 %v1860
      %v2642 = vpop.f32.mrf.mxu0
      %v2643 = vadd.f32 0.0, %v2642
      %v2644 = vpop.f32.mrf.mxu0
      %v2645 = vadd.f32 0.0, %v2644
      %2646 = vmatmul.bf16.gmra.mxu0 %v1862
      %v2647 = vpop.f32.mrf.mxu0
      %v2648 = vadd.f32 0.0, %v2647
      %v2649 = vpop.f32.mrf.mxu0
      %v2650 = vadd.f32 0.0, %v2649
      %2651 = vmatmul.bf16.gmra.mxu0 %v1864
      %v2652 = vpop.f32.mrf.mxu0
      %v2653 = vadd.f32 0.0, %v2652
      %v2654 = vpop.f32.mrf.mxu0
      %v2655 = vadd.f32 0.0, %v2654
      %2656 = vmatmul.bf16.gmra.mxu0 %v1866
      %v2657 = vpop.f32.mrf.mxu0
      %v2658 = vadd.f32 0.0, %v2657
      %v2659 = vpop.f32.mrf.mxu0
      %v2660 = vadd.f32 0.0, %v2659
      %2661 = vmatmul.bf16.gmra.mxu0 %v1868
      %v2662 = vpop.f32.mrf.mxu0
      %v2663 = vadd.f32 0.0, %v2662
      %v2664 = vpop.f32.mrf.mxu0
      %v2665 = vadd.f32 0.0, %v2664
      %2666 = vmatmul.bf16.gmra.mxu0 %v1870
      %v2667 = vpop.f32.mrf.mxu0
      %v2668 = vadd.f32 0.0, %v2667
      %v2669 = vpop.f32.mrf.mxu0
      %v2670 = vadd.f32 0.0, %v2669
      %2671 = vmatmul.bf16.gmra.mxu0 %v1872
      %v2672 = vpop.f32.mrf.mxu0
      %v2673 = vadd.f32 0.0, %v2672
      %v2674 = vpop.f32.mrf.mxu0
      %v2675 = vadd.f32 0.0, %v2674
      %2676 = vmatmul.bf16.gmra.mxu0 %v1874
      %v2677 = vpop.f32.mrf.mxu0
      %v2678 = vadd.f32 0.0, %v2677
      %v2679 = vpop.f32.mrf.mxu0
      %v2680 = vadd.f32 0.0, %v2679
      %2681 = vmatmul.bf16.gmra.mxu0 %v1876
      %v2682 = vpop.f32.mrf.mxu0
      %v2683 = vadd.f32 0.0, %v2682
      %v2684 = vpop.f32.mrf.mxu0
      %v2685 = vadd.f32 0.0, %v2684
      %2686 = vmatmul.bf16.gmra.mxu0 %v2239
      %v2687 = vpop.f32.mrf.mxu0
      %v2688 = vadd.f32 0.0, %v2687
      %v2689 = vpop.f32.mrf.mxu0
      %v2690 = vadd.f32 0.0, %v2689
      %2691 = vmatmul.bf16.gmra.mxu0 %v2542
      %v2692 = vpop.f32.mrf.mxu0
      %v2693 = vadd.f32 0.0, %v2692
      %v2694 = vpop.f32.mrf.mxu0
      %v2695 = vadd.f32 0.0, %v2694
      %2696 = vdwg.mxu0
      %2697 = vmatpush.bf16.msra.mxu0 0
      %2698 = vmatpush.bf16.msra.mxu0 0
      %2699 = vmatpush.bf16.msra.mxu0 0
      %2700 = vmatpush.bf16.msra.mxu0 0
      %2701 = vmatpush.bf16.msra.mxu0 0
      %2702 = vmatpush.bf16.msra.mxu0 0
      %2703 = vmatpush.bf16.msra.mxu0 %v2594
      %2704 = vmatpush.bf16.msra.mxu0 %v2593
      %2705 = vmatmul.bf16.gmra.mxu0 %v1961
      %v2706 = vpop.f32.mrf.mxu0
      %v2707 = vadd.f32 %v2618, %v2706
      %v2708 = vpop.f32.mrf.mxu0
      %v2709 = vadd.f32 %v2620, %v2708
      %2710 = vmatmul.bf16.gmra.mxu0 %v1964
      %v2711 = vpop.f32.mrf.mxu0
      %v2712 = vadd.f32 %v2623, %v2711
      %v2713 = vpop.f32.mrf.mxu0
      %v2714 = vadd.f32 %v2625, %v2713
      %2715 = vmatmul.bf16.gmra.mxu0 %v1967
      %v2716 = vpop.f32.mrf.mxu0
      %v2717 = vadd.f32 %v2628, %v2716
      %v2718 = vpop.f32.mrf.mxu0
      %v2719 = vadd.f32 %v2630, %v2718
      %2720 = vmatmul.bf16.gmra.mxu0 %v1970
      %v2721 = vpop.f32.mrf.mxu0
      %v2722 = vadd.f32 %v2633, %v2721
      %v2723 = vpop.f32.mrf.mxu0
      %v2724 = vadd.f32 %v2635, %v2723
      %2725 = vmatmul.bf16.gmra.mxu0 %v1973
      %v2726 = vpop.f32.mrf.mxu0
      %v2727 = vadd.f32 %v2638, %v2726
      %v2728 = vpop.f32.mrf.mxu0
      %v2729 = vadd.f32 %v2640, %v2728
      %2730 = vmatmul.bf16.gmra.mxu0 %v1976
      %v2731 = vpop.f32.mrf.mxu0
      %v2732 = vadd.f32 %v2643, %v2731
      %v2733 = vpop.f32.mrf.mxu0
      %v2734 = vadd.f32 %v2645, %v2733
      %2735 = vmatmul.bf16.gmra.mxu0 %v1979
      %v2736 = vpop.f32.mrf.mxu0
      %v2737 = vadd.f32 %v2648, %v2736
      %v2738 = vpop.f32.mrf.mxu0
      %v2739 = vadd.f32 %v2650, %v2738
      %2740 = vmatmul.bf16.gmra.mxu0 %v1982
      %v2741 = vpop.f32.mrf.mxu0
      %v2742 = vadd.f32 %v2653, %v2741
      %v2743 = vpop.f32.mrf.mxu0
      %v2744 = vadd.f32 %v2655, %v2743
      %2745 = vmatmul.bf16.gmra.mxu0 %v1985
      %v2746 = vpop.f32.mrf.mxu0
      %v2747 = vadd.f32 %v2658, %v2746
      %v2748 = vpop.f32.mrf.mxu0
      %v2749 = vadd.f32 %v2660, %v2748
      %2750 = vmatmul.bf16.gmra.mxu0 %v1988
      %v2751 = vpop.f32.mrf.mxu0
      %v2752 = vadd.f32 %v2663, %v2751
      %v2753 = vpop.f32.mrf.mxu0
      %v2754 = vadd.f32 %v2665, %v2753
      %2755 = vmatmul.bf16.gmra.mxu0 %v1991
      %v2756 = vpop.f32.mrf.mxu0
      %v2757 = vadd.f32 %v2668, %v2756
      %v2758 = vpop.f32.mrf.mxu0
      %v2759 = vadd.f32 %v2670, %v2758
      %2760 = vmatmul.bf16.gmra.mxu0 %v1994
      %v2761 = vpop.f32.mrf.mxu0
      %v2762 = vadd.f32 %v2673, %v2761
      %v2763 = vpop.f32.mrf.mxu0
      %v2764 = vadd.f32 %v2675, %v2763
      %2765 = vmatmul.bf16.gmra.mxu0 %v1997
      %v2766 = vpop.f32.mrf.mxu0
      %v2767 = vadd.f32 %v2678, %v2766
      %v2768 = vpop.f32.mrf.mxu0
      %v2769 = vadd.f32 %v2680, %v2768
      %2770 = vmatmul.bf16.gmra.mxu0 %v2000
      %v2771 = vpop.f32.mrf.mxu0
      %v2772 = vadd.f32 %v2683, %v2771
      %v2773 = vpop.f32.mrf.mxu0
      %v2774 = vadd.f32 %v2685, %v2773
      %2775 = vmatmul.bf16.gmra.mxu0 %v2303
      %v2776 = vpop.f32.mrf.mxu0
      %v2777 = vadd.f32 %v2688, %v2776
      %v2778 = vpop.f32.mrf.mxu0
      %v2779 = vadd.f32 %v2690, %v2778
      %2780 = vmatmul.bf16.gmra.mxu0 %v2606
      %v2781 = vpop.f32.mrf.mxu0
      %v2782 = vadd.f32 %v2693, %v2781
      %v2783 = vpop.f32.mrf.mxu0
      %v2784 = vadd.f32 %v2695, %v2783
      %2785 = vdwg.mxu0
      %v2786 = vadd.f32 %v2483, %v2707
      %v2787 = vadd.f32 %v2484, %v2709
      %v2788 = vadd.f32 %v2485, %v2712
      %v2789 = vadd.f32 %v2486, %v2714
      %v2790 = vadd.f32 %v2487, %v2717
      %v2791 = vadd.f32 %v2488, %v2719
      %v2792 = vadd.f32 %v2489, %v2722
      %v2793 = vadd.f32 %v2490, %v2724
      %v2794 = vadd.f32 %v2491, %v2727
      %v2795 = vadd.f32 %v2492, %v2729
      %v2796 = vadd.f32 %v2493, %v2732
      %v2797 = vadd.f32 %v2494, %v2734
      %v2798 = vadd.f32 %v2495, %v2737
      %v2799 = vadd.f32 %v2496, %v2739
      %v2800 = vadd.f32 %v2497, %v2742
      %v2801 = vadd.f32 %v2498, %v2744
      %v2802 = vadd.f32 %v2499, %v2747
      %v2803 = vadd.f32 %v2500, %v2749
      %v2804 = vadd.f32 %v2501, %v2752
      %v2805 = vadd.f32 %v2502, %v2754
      %v2806 = vadd.f32 %v2503, %v2757
      %v2807 = vadd.f32 %v2504, %v2759
      %v2808 = vadd.f32 %v2505, %v2762
      %v2809 = vadd.f32 %v2506, %v2764
      %v2810 = vadd.f32 %v2507, %v2767
      %v2811 = vadd.f32 %v2508, %v2769
      %v2812 = vadd.f32 %v2509, %v2772
      %v2813 = vadd.f32 %v2510, %v2774
      %v2814 = vadd.f32 %v2511, %v2777
      %v2815 = vadd.f32 %v2512, %v2779
      %v2816 = vadd.f32 %v2513, %v2782
      %v2817 = vadd.f32 %v2514, %v2784
      %s2818 = scalar_lea.vmem %s2, 240
      %v2819 = vld [vmem:[%s2818] sm:$0xf]
      %v2820 = vld [vmem:[%s2818 + $0x4] sm:$0xf]
      %v2821 = vld [vmem:[%s2818 + $0x8] sm:$0xf]
      %v2822 = vld [vmem:[%s2818 + $0xc] sm:$0xf]
      %v2823 = vld [vmem:[%s2818 + $0x10] sm:$0xf]
      %v2824 = vld [vmem:[%s2818 + $0x14] sm:$0xf]
      %v2825 = vld [vmem:[%s2818 + $0x18] sm:$0xf]
      %v2826 = vld [vmem:[%s2818 + $0x1c] sm:$0xf]
      %v2827 = vld [vmem:[%s2818 + $0x20] sm:$0xf]
      %v2828 = vld [vmem:[%s2818 + $0x24] sm:$0xf]
      %v2829 = vld [vmem:[%s2818 + $0x28] sm:$0xf]
      %v2830 = vld [vmem:[%s2818 + $0x2c] sm:$0xf]
      %v2831 = vld [vmem:[%s2818 + $0x30] sm:$0xf]
      %v2832 = vld [vmem:[%s2818 + $0x34] sm:$0xf]
      %v2833 = vld [vmem:[%s2818 + $0x38] sm:$0xf]
      %v2834 = vld [vmem:[%s2818 + $0x3c] sm:$0xf]
      %v2835 = vld [vmem:[%s2818 + $0x40] sm:$0xf]
      %v2836 = vld [vmem:[%s2818 + $0x44] sm:$0xf]
      %v2837 = vld [vmem:[%s2818 + $0x48] sm:$0xf]
      %v2838 = vld [vmem:[%s2818 + $0x4c] sm:$0xf]
      %v2841 = vunpack.c.l.b16 %v1726
      %v2842 = vunpack.c.h.b16 %v1726
      %v2843 = vunpack.c.l.b16 %v1727
      %v2844 = vunpack.c.h.b16 %v1727
      %v2845 = vpack.c.b16 %v2843, %v2841
      %v2846 = vpack.c.b16 %v2844, %v2842
      %v2868 = vunpack.c.l.b16 %v2819
      %v2869 = vunpack.c.l.b16 %v2820
      %v2870 = vunpack.c.l.b16 %v2821
      %v2871 = vunpack.c.l.b16 %v2822
      %v2872 = vunpack.c.l.b16 %v2823
      %v2873 = vunpack.c.l.b16 %v2824
      %v2874 = vunpack.c.l.b16 %v2825
      %v2875 = vunpack.c.l.b16 %v2826
      %v2876 = vunpack.c.l.b16 %v2827
      %v2877 = vunpack.c.l.b16 %v2828
      %v2878 = vunpack.c.l.b16 %v2829
      %v2879 = vunpack.c.l.b16 %v2830
      %v2880 = vunpack.c.l.b16 %v2831
      %v2881 = vunpack.c.l.b16 %v2832
      %v2882 = vunpack.c.l.b16 %v2833
      %v2883 = vunpack.c.l.b16 %v2834
      %v2884 = vunpack.c.l.b16 %v2835
      %v2885 = vunpack.c.l.b16 %v2836
      %v2886 = vunpack.c.l.b16 %v2837
      %v2887 = vunpack.c.l.b16 %v2838
      %v2888 = vpack.c.b16 %v2869, %v2868
      %v2889 = vpack.c.b16 %v2871, %v2870
      %v2890 = vpack.c.b16 %v2873, %v2872
      %v2891 = vpack.c.b16 %v2875, %v2874
      %v2892 = vpack.c.b16 %v2877, %v2876
      %v2893 = vpack.c.b16 %v2879, %v2878
      %v2894 = vpack.c.b16 %v2881, %v2880
      %v2895 = vpack.c.b16 %v2883, %v2882
      %v2896 = vpack.c.b16 %v2885, %v2884
      %v2897 = vpack.c.b16 %v2887, %v2886
      %v2909 = vsel %vm1567, %v2846, 0
      %2911 = vmatpush.bf16.msra.mxu0 %v2895
      %2912 = vmatpush.bf16.msra.mxu0 %v2894
      %2913 = vmatpush.bf16.msra.mxu0 %v2893
      %2914 = vmatpush.bf16.msra.mxu0 %v2892
      %2915 = vmatpush.bf16.msra.mxu0 %v2891
      %2916 = vmatpush.bf16.msra.mxu0 %v2890
      %2917 = vmatpush.bf16.msra.mxu0 %v2889
      %2918 = vmatpush.bf16.msra.mxu0 %v2888
      %2919 = vmatmul.bf16.gmra.mxu0 %v1852
      %v2920 = vpop.f32.mrf.mxu0
      %v2921 = vadd.f32 0.0, %v2920
      %v2922 = vpop.f32.mrf.mxu0
      %v2923 = vadd.f32 0.0, %v2922
      %2924 = vmatmul.bf16.gmra.mxu0 %v1854
      %v2925 = vpop.f32.mrf.mxu0
      %v2926 = vadd.f32 0.0, %v2925
      %v2927 = vpop.f32.mrf.mxu0
      %v2928 = vadd.f32 0.0, %v2927
      %2929 = vmatmul.bf16.gmra.mxu0 %v1856
      %v2930 = vpop.f32.mrf.mxu0
      %v2931 = vadd.f32 0.0, %v2930
      %v2932 = vpop.f32.mrf.mxu0
      %v2933 = vadd.f32 0.0, %v2932
      %2934 = vmatmul.bf16.gmra.mxu0 %v1858
      %v2935 = vpop.f32.mrf.mxu0
      %v2936 = vadd.f32 0.0, %v2935
      %v2937 = vpop.f32.mrf.mxu0
      %v2938 = vadd.f32 0.0, %v2937
      %2939 = vmatmul.bf16.gmra.mxu0 %v1860
      %v2940 = vpop.f32.mrf.mxu0
      %v2941 = vadd.f32 0.0, %v2940
      %v2942 = vpop.f32.mrf.mxu0
      %v2943 = vadd.f32 0.0, %v2942
      %2944 = vmatmul.bf16.gmra.mxu0 %v1862
      %v2945 = vpop.f32.mrf.mxu0
      %v2946 = vadd.f32 0.0, %v2945
      %v2947 = vpop.f32.mrf.mxu0
      %v2948 = vadd.f32 0.0, %v2947
      %2949 = vmatmul.bf16.gmra.mxu0 %v1864
      %v2950 = vpop.f32.mrf.mxu0
      %v2951 = vadd.f32 0.0, %v2950
      %v2952 = vpop.f32.mrf.mxu0
      %v2953 = vadd.f32 0.0, %v2952
      %2954 = vmatmul.bf16.gmra.mxu0 %v1866
      %v2955 = vpop.f32.mrf.mxu0
      %v2956 = vadd.f32 0.0, %v2955
      %v2957 = vpop.f32.mrf.mxu0
      %v2958 = vadd.f32 0.0, %v2957
      %2959 = vmatmul.bf16.gmra.mxu0 %v1868
      %v2960 = vpop.f32.mrf.mxu0
      %v2961 = vadd.f32 0.0, %v2960
      %v2962 = vpop.f32.mrf.mxu0
      %v2963 = vadd.f32 0.0, %v2962
      %2964 = vmatmul.bf16.gmra.mxu0 %v1870
      %v2965 = vpop.f32.mrf.mxu0
      %v2966 = vadd.f32 0.0, %v2965
      %v2967 = vpop.f32.mrf.mxu0
      %v2968 = vadd.f32 0.0, %v2967
      %2969 = vmatmul.bf16.gmra.mxu0 %v1872
      %v2970 = vpop.f32.mrf.mxu0
      %v2971 = vadd.f32 0.0, %v2970
      %v2972 = vpop.f32.mrf.mxu0
      %v2973 = vadd.f32 0.0, %v2972
      %2974 = vmatmul.bf16.gmra.mxu0 %v1874
      %v2975 = vpop.f32.mrf.mxu0
      %v2976 = vadd.f32 0.0, %v2975
      %v2977 = vpop.f32.mrf.mxu0
      %v2978 = vadd.f32 0.0, %v2977
      %2979 = vmatmul.bf16.gmra.mxu0 %v1876
      %v2980 = vpop.f32.mrf.mxu0
      %v2981 = vadd.f32 0.0, %v2980
      %v2982 = vpop.f32.mrf.mxu0
      %v2983 = vadd.f32 0.0, %v2982
      %2984 = vmatmul.bf16.gmra.mxu0 %v2239
      %v2985 = vpop.f32.mrf.mxu0
      %v2986 = vadd.f32 0.0, %v2985
      %v2987 = vpop.f32.mrf.mxu0
      %v2988 = vadd.f32 0.0, %v2987
      %2989 = vmatmul.bf16.gmra.mxu0 %v2542
      %v2990 = vpop.f32.mrf.mxu0
      %v2991 = vadd.f32 0.0, %v2990
      %v2992 = vpop.f32.mrf.mxu0
      %v2993 = vadd.f32 0.0, %v2992
      %2994 = vmatmul.bf16.gmra.mxu0 %v2845
      %v2995 = vpop.f32.mrf.mxu0
      %v2996 = vadd.f32 0.0, %v2995
      %v2997 = vpop.f32.mrf.mxu0
      %v2998 = vadd.f32 0.0, %v2997
      %2999 = vdwg.mxu0
      %3000 = vmatpush.bf16.msra.mxu0 0
      %3001 = vmatpush.bf16.msra.mxu0 0
      %3002 = vmatpush.bf16.msra.mxu0 0
      %3003 = vmatpush.bf16.msra.mxu0 0
      %3004 = vmatpush.bf16.msra.mxu0 0
      %3005 = vmatpush.bf16.msra.mxu0 0
      %3006 = vmatpush.bf16.msra.mxu0 %v2897
      %3007 = vmatpush.bf16.msra.mxu0 %v2896
      %3008 = vmatmul.bf16.gmra.mxu0 %v1964
      %v3009 = vpop.f32.mrf.mxu0
      %v3010 = vadd.f32 %v2921, %v3009
      %v3011 = vpop.f32.mrf.mxu0
      %v3012 = vadd.f32 %v2923, %v3011
      %3013 = vmatmul.bf16.gmra.mxu0 %v1967
      %v3014 = vpop.f32.mrf.mxu0
      %v3015 = vadd.f32 %v2926, %v3014
      %v3016 = vpop.f32.mrf.mxu0
      %v3017 = vadd.f32 %v2928, %v3016
      %3018 = vmatmul.bf16.gmra.mxu0 %v1970
      %v3019 = vpop.f32.mrf.mxu0
      %v3020 = vadd.f32 %v2931, %v3019
      %v3021 = vpop.f32.mrf.mxu0
      %v3022 = vadd.f32 %v2933, %v3021
      %3023 = vmatmul.bf16.gmra.mxu0 %v1973
      %v3024 = vpop.f32.mrf.mxu0
      %v3025 = vadd.f32 %v2936, %v3024
      %v3026 = vpop.f32.mrf.mxu0
      %v3027 = vadd.f32 %v2938, %v3026
      %3028 = vmatmul.bf16.gmra.mxu0 %v1976
      %v3029 = vpop.f32.mrf.mxu0
      %v3030 = vadd.f32 %v2941, %v3029
      %v3031 = vpop.f32.mrf.mxu0
      %v3032 = vadd.f32 %v2943, %v3031
      %3033 = vmatmul.bf16.gmra.mxu0 %v1979
      %v3034 = vpop.f32.mrf.mxu0
      %v3035 = vadd.f32 %v2946, %v3034
      %v3036 = vpop.f32.mrf.mxu0
      %v3037 = vadd.f32 %v2948, %v3036
      %3038 = vmatmul.bf16.gmra.mxu0 %v1982
      %v3039 = vpop.f32.mrf.mxu0
      %v3040 = vadd.f32 %v2951, %v3039
      %v3041 = vpop.f32.mrf.mxu0
      %v3042 = vadd.f32 %v2953, %v3041
      %3043 = vmatmul.bf16.gmra.mxu0 %v1985
      %v3044 = vpop.f32.mrf.mxu0
      %v3045 = vadd.f32 %v2956, %v3044
      %v3046 = vpop.f32.mrf.mxu0
      %v3047 = vadd.f32 %v2958, %v3046
      %3048 = vmatmul.bf16.gmra.mxu0 %v1988
      %v3049 = vpop.f32.mrf.mxu0
      %v3050 = vadd.f32 %v2961, %v3049
      %v3051 = vpop.f32.mrf.mxu0
      %v3052 = vadd.f32 %v2963, %v3051
      %3053 = vmatmul.bf16.gmra.mxu0 %v1991
      %v3054 = vpop.f32.mrf.mxu0
      %v3055 = vadd.f32 %v2966, %v3054
      %v3056 = vpop.f32.mrf.mxu0
      %v3057 = vadd.f32 %v2968, %v3056
      %3058 = vmatmul.bf16.gmra.mxu0 %v1994
      %v3059 = vpop.f32.mrf.mxu0
      %v3060 = vadd.f32 %v2971, %v3059
      %v3061 = vpop.f32.mrf.mxu0
      %v3062 = vadd.f32 %v2973, %v3061
      %3063 = vmatmul.bf16.gmra.mxu0 %v1997
      %v3064 = vpop.f32.mrf.mxu0
      %v3065 = vadd.f32 %v2976, %v3064
      %v3066 = vpop.f32.mrf.mxu0
      %v3067 = vadd.f32 %v2978, %v3066
      %3068 = vmatmul.bf16.gmra.mxu0 %v2000
      %v3069 = vpop.f32.mrf.mxu0
      %v3070 = vadd.f32 %v2981, %v3069
      %v3071 = vpop.f32.mrf.mxu0
      %v3072 = vadd.f32 %v2983, %v3071
      %3073 = vmatmul.bf16.gmra.mxu0 %v2303
      %v3074 = vpop.f32.mrf.mxu0
      %v3075 = vadd.f32 %v2986, %v3074
      %v3076 = vpop.f32.mrf.mxu0
      %v3077 = vadd.f32 %v2988, %v3076
      %3078 = vmatmul.bf16.gmra.mxu0 %v2606
      %v3079 = vpop.f32.mrf.mxu0
      %v3080 = vadd.f32 %v2991, %v3079
      %v3081 = vpop.f32.mrf.mxu0
      %v3082 = vadd.f32 %v2993, %v3081
      %3083 = vmatmul.bf16.gmra.mxu0 %v2909
      %v3084 = vpop.f32.mrf.mxu0
      %v3085 = vadd.f32 %v2996, %v3084
      %v3086 = vpop.f32.mrf.mxu0
      %v3087 = vadd.f32 %v2998, %v3086
      %3088 = vdwg.mxu0
      %v3089 = vadd.f32 %v2786, %v3010
      %v3090 = vadd.f32 %v2787, %v3012
      %v3091 = vadd.f32 %v2788, %v3015
      %v3092 = vadd.f32 %v2789, %v3017
      %v3093 = vadd.f32 %v2790, %v3020
      %v3094 = vadd.f32 %v2791, %v3022
      %v3095 = vadd.f32 %v2792, %v3025
      %v3096 = vadd.f32 %v2793, %v3027
      %v3097 = vadd.f32 %v2794, %v3030
      %v3098 = vadd.f32 %v2795, %v3032
      %v3099 = vadd.f32 %v2796, %v3035
      %v3100 = vadd.f32 %v2797, %v3037
      %v3101 = vadd.f32 %v2798, %v3040
      %v3102 = vadd.f32 %v2799, %v3042
      %v3103 = vadd.f32 %v2800, %v3045
      %v3104 = vadd.f32 %v2801, %v3047
      %v3105 = vadd.f32 %v2802, %v3050
      %v3106 = vadd.f32 %v2803, %v3052
      %v3107 = vadd.f32 %v2804, %v3055
      %v3108 = vadd.f32 %v2805, %v3057
      %v3109 = vadd.f32 %v2806, %v3060
      %v3110 = vadd.f32 %v2807, %v3062
      %v3111 = vadd.f32 %v2808, %v3065
      %v3112 = vadd.f32 %v2809, %v3067
      %v3113 = vadd.f32 %v2810, %v3070
      %v3114 = vadd.f32 %v2811, %v3072
      %v3115 = vadd.f32 %v2812, %v3075
      %v3116 = vadd.f32 %v2813, %v3077
      %v3117 = vadd.f32 %v2814, %v3080
      %v3118 = vadd.f32 %v2815, %v3082
      %v3119 = vadd.f32 %v2816, %v3085
      %v3120 = vadd.f32 %v2817, %v3087
      %s3121 = scalar_lea.vmem %s2, 320
      %v3122 = vld [vmem:[%s3121] sm:$0xf]
      %v3123 = vld [vmem:[%s3121 + $0x4] sm:$0xf]
      %v3124 = vld [vmem:[%s3121 + $0x8] sm:$0xf]
      %v3125 = vld [vmem:[%s3121 + $0xc] sm:$0xf]
      %v3126 = vld [vmem:[%s3121 + $0x10] sm:$0xf]
      %v3127 = vld [vmem:[%s3121 + $0x14] sm:$0xf]
      %v3128 = vld [vmem:[%s3121 + $0x18] sm:$0xf]
      %v3129 = vld [vmem:[%s3121 + $0x1c] sm:$0xf]
      %v3130 = vld [vmem:[%s3121 + $0x20] sm:$0xf]
      %v3131 = vld [vmem:[%s3121 + $0x24] sm:$0xf]
      %v3132 = vld [vmem:[%s3121 + $0x28] sm:$0xf]
      %v3133 = vld [vmem:[%s3121 + $0x2c] sm:$0xf]
      %v3134 = vld [vmem:[%s3121 + $0x30] sm:$0xf]
      %v3135 = vld [vmem:[%s3121 + $0x34] sm:$0xf]
      %v3136 = vld [vmem:[%s3121 + $0x38] sm:$0xf]
      %v3137 = vld [vmem:[%s3121 + $0x3c] sm:$0xf]
      %v3138 = vld [vmem:[%s3121 + $0x40] sm:$0xf]
      %v3139 = vld [vmem:[%s3121 + $0x44] sm:$0xf]
      %v3140 = vld [vmem:[%s3121 + $0x48] sm:$0xf]
      %v3141 = vld [vmem:[%s3121 + $0x4c] sm:$0xf]
      %v3144 = vunpack.c.l.b16 %v1728
      %v3145 = vunpack.c.h.b16 %v1728
      %v3146 = vunpack.c.l.b16 %v1729
      %v3147 = vunpack.c.h.b16 %v1729
      %v3148 = vpack.c.b16 %v3146, %v3144
      %v3149 = vpack.c.b16 %v3147, %v3145
      %v3171 = vunpack.c.l.b16 %v3122
      %v3172 = vunpack.c.l.b16 %v3123
      %v3173 = vunpack.c.l.b16 %v3124
      %v3174 = vunpack.c.l.b16 %v3125
      %v3175 = vunpack.c.l.b16 %v3126
      %v3176 = vunpack.c.l.b16 %v3127
      %v3177 = vunpack.c.l.b16 %v3128
      %v3178 = vunpack.c.l.b16 %v3129
      %v3179 = vunpack.c.l.b16 %v3130
      %v3180 = vunpack.c.l.b16 %v3131
      %v3181 = vunpack.c.l.b16 %v3132
      %v3182 = vunpack.c.l.b16 %v3133
      %v3183 = vunpack.c.l.b16 %v3134
      %v3184 = vunpack.c.l.b16 %v3135
      %v3185 = vunpack.c.l.b16 %v3136
      %v3186 = vunpack.c.l.b16 %v3137
      %v3187 = vunpack.c.l.b16 %v3138
      %v3188 = vunpack.c.l.b16 %v3139
      %v3189 = vunpack.c.l.b16 %v3140
      %v3190 = vunpack.c.l.b16 %v3141
      %v3191 = vpack.c.b16 %v3172, %v3171
      %v3192 = vpack.c.b16 %v3174, %v3173
      %v3193 = vpack.c.b16 %v3176, %v3175
      %v3194 = vpack.c.b16 %v3178, %v3177
      %v3195 = vpack.c.b16 %v3180, %v3179
      %v3196 = vpack.c.b16 %v3182, %v3181
      %v3197 = vpack.c.b16 %v3184, %v3183
      %v3198 = vpack.c.b16 %v3186, %v3185
      %v3199 = vpack.c.b16 %v3188, %v3187
      %v3200 = vpack.c.b16 %v3190, %v3189
      %v3212 = vsel %vm1567, %v3149, 0
      %3214 = vmatpush.bf16.msra.mxu0 %v3198
      %3215 = vmatpush.bf16.msra.mxu0 %v3197
      %3216 = vmatpush.bf16.msra.mxu0 %v3196
      %3217 = vmatpush.bf16.msra.mxu0 %v3195
      %3218 = vmatpush.bf16.msra.mxu0 %v3194
      %3219 = vmatpush.bf16.msra.mxu0 %v3193
      %3220 = vmatpush.bf16.msra.mxu0 %v3192
      %3221 = vmatpush.bf16.msra.mxu0 %v3191
      %3222 = vmatmul.bf16.gmra.mxu0 %v1854
      %v3223 = vpop.f32.mrf.mxu0
      %v3224 = vadd.f32 0.0, %v3223
      %v3225 = vpop.f32.mrf.mxu0
      %v3226 = vadd.f32 0.0, %v3225
      %3227 = vmatmul.bf16.gmra.mxu0 %v1856
      %v3228 = vpop.f32.mrf.mxu0
      %v3229 = vadd.f32 0.0, %v3228
      %v3230 = vpop.f32.mrf.mxu0
      %v3231 = vadd.f32 0.0, %v3230
      %3232 = vmatmul.bf16.gmra.mxu0 %v1858
      %v3233 = vpop.f32.mrf.mxu0
      %v3234 = vadd.f32 0.0, %v3233
      %v3235 = vpop.f32.mrf.mxu0
      %v3236 = vadd.f32 0.0, %v3235
      %3237 = vmatmul.bf16.gmra.mxu0 %v1860
      %v3238 = vpop.f32.mrf.mxu0
      %v3239 = vadd.f32 0.0, %v3238
      %v3240 = vpop.f32.mrf.mxu0
      %v3241 = vadd.f32 0.0, %v3240
      %3242 = vmatmul.bf16.gmra.mxu0 %v1862
      %v3243 = vpop.f32.mrf.mxu0
      %v3244 = vadd.f32 0.0, %v3243
      %v3245 = vpop.f32.mrf.mxu0
      %v3246 = vadd.f32 0.0, %v3245
      %3247 = vmatmul.bf16.gmra.mxu0 %v1864
      %v3248 = vpop.f32.mrf.mxu0
      %v3249 = vadd.f32 0.0, %v3248
      %v3250 = vpop.f32.mrf.mxu0
      %v3251 = vadd.f32 0.0, %v3250
      %3252 = vmatmul.bf16.gmra.mxu0 %v1866
      %v3253 = vpop.f32.mrf.mxu0
      %v3254 = vadd.f32 0.0, %v3253
      %v3255 = vpop.f32.mrf.mxu0
      %v3256 = vadd.f32 0.0, %v3255
      %3257 = vmatmul.bf16.gmra.mxu0 %v1868
      %v3258 = vpop.f32.mrf.mxu0
      %v3259 = vadd.f32 0.0, %v3258
      %v3260 = vpop.f32.mrf.mxu0
      %v3261 = vadd.f32 0.0, %v3260
      %3262 = vmatmul.bf16.gmra.mxu0 %v1870
      %v3263 = vpop.f32.mrf.mxu0
      %v3264 = vadd.f32 0.0, %v3263
      %v3265 = vpop.f32.mrf.mxu0
      %v3266 = vadd.f32 0.0, %v3265
      %3267 = vmatmul.bf16.gmra.mxu0 %v1872
      %v3268 = vpop.f32.mrf.mxu0
      %v3269 = vadd.f32 0.0, %v3268
      %v3270 = vpop.f32.mrf.mxu0
      %v3271 = vadd.f32 0.0, %v3270
      %3272 = vmatmul.bf16.gmra.mxu0 %v1874
      %v3273 = vpop.f32.mrf.mxu0
      %v3274 = vadd.f32 0.0, %v3273
      %v3275 = vpop.f32.mrf.mxu0
      %v3276 = vadd.f32 0.0, %v3275
      %3277 = vmatmul.bf16.gmra.mxu0 %v1876
      %v3278 = vpop.f32.mrf.mxu0
      %v3279 = vadd.f32 0.0, %v3278
      %v3280 = vpop.f32.mrf.mxu0
      %v3281 = vadd.f32 0.0, %v3280
      %3282 = vmatmul.bf16.gmra.mxu0 %v2239
      %v3283 = vpop.f32.mrf.mxu0
      %v3284 = vadd.f32 0.0, %v3283
      %v3285 = vpop.f32.mrf.mxu0
      %v3286 = vadd.f32 0.0, %v3285
      %3287 = vmatmul.bf16.gmra.mxu0 %v2542
      %v3288 = vpop.f32.mrf.mxu0
      %v3289 = vadd.f32 0.0, %v3288
      %v3290 = vpop.f32.mrf.mxu0
      %v3291 = vadd.f32 0.0, %v3290
      %3292 = vmatmul.bf16.gmra.mxu0 %v2845
      %v3293 = vpop.f32.mrf.mxu0
      %v3294 = vadd.f32 0.0, %v3293
      %v3295 = vpop.f32.mrf.mxu0
      %v3296 = vadd.f32 0.0, %v3295
      %3297 = vmatmul.bf16.gmra.mxu0 %v3148
      %v3298 = vpop.f32.mrf.mxu0
      %v3299 = vadd.f32 0.0, %v3298
      %v3300 = vpop.f32.mrf.mxu0
      %v3301 = vadd.f32 0.0, %v3300
      %3302 = vdwg.mxu0
      %3303 = vmatpush.bf16.msra.mxu0 0
      %3304 = vmatpush.bf16.msra.mxu0 0
      %3305 = vmatpush.bf16.msra.mxu0 0
      %3306 = vmatpush.bf16.msra.mxu0 0
      %3307 = vmatpush.bf16.msra.mxu0 0
      %3308 = vmatpush.bf16.msra.mxu0 0
      %3309 = vmatpush.bf16.msra.mxu0 %v3200
      %3310 = vmatpush.bf16.msra.mxu0 %v3199
      %3311 = vmatmul.bf16.gmra.mxu0 %v1967
      %v3312 = vpop.f32.mrf.mxu0
      %v3313 = vadd.f32 %v3224, %v3312
      %v3314 = vpop.f32.mrf.mxu0
      %v3315 = vadd.f32 %v3226, %v3314
      %3316 = vmatmul.bf16.gmra.mxu0 %v1970
      %v3317 = vpop.f32.mrf.mxu0
      %v3318 = vadd.f32 %v3229, %v3317
      %v3319 = vpop.f32.mrf.mxu0
      %v3320 = vadd.f32 %v3231, %v3319
      %3321 = vmatmul.bf16.gmra.mxu0 %v1973
      %v3322 = vpop.f32.mrf.mxu0
      %v3323 = vadd.f32 %v3234, %v3322
      %v3324 = vpop.f32.mrf.mxu0
      %v3325 = vadd.f32 %v3236, %v3324
      %3326 = vmatmul.bf16.gmra.mxu0 %v1976
      %v3327 = vpop.f32.mrf.mxu0
      %v3328 = vadd.f32 %v3239, %v3327
      %v3329 = vpop.f32.mrf.mxu0
      %v3330 = vadd.f32 %v3241, %v3329
      %3331 = vmatmul.bf16.gmra.mxu0 %v1979
      %v3332 = vpop.f32.mrf.mxu0
      %v3333 = vadd.f32 %v3244, %v3332
      %v3334 = vpop.f32.mrf.mxu0
      %v3335 = vadd.f32 %v3246, %v3334
      %3336 = vmatmul.bf16.gmra.mxu0 %v1982
      %v3337 = vpop.f32.mrf.mxu0
      %v3338 = vadd.f32 %v3249, %v3337
      %v3339 = vpop.f32.mrf.mxu0
      %v3340 = vadd.f32 %v3251, %v3339
      %3341 = vmatmul.bf16.gmra.mxu0 %v1985
      %v3342 = vpop.f32.mrf.mxu0
      %v3343 = vadd.f32 %v3254, %v3342
      %v3344 = vpop.f32.mrf.mxu0
      %v3345 = vadd.f32 %v3256, %v3344
      %3346 = vmatmul.bf16.gmra.mxu0 %v1988
      %v3347 = vpop.f32.mrf.mxu0
      %v3348 = vadd.f32 %v3259, %v3347
      %v3349 = vpop.f32.mrf.mxu0
      %v3350 = vadd.f32 %v3261, %v3349
      %3351 = vmatmul.bf16.gmra.mxu0 %v1991
      %v3352 = vpop.f32.mrf.mxu0
      %v3353 = vadd.f32 %v3264, %v3352
      %v3354 = vpop.f32.mrf.mxu0
      %v3355 = vadd.f32 %v3266, %v3354
      %3356 = vmatmul.bf16.gmra.mxu0 %v1994
      %v3357 = vpop.f32.mrf.mxu0
      %v3358 = vadd.f32 %v3269, %v3357
      %v3359 = vpop.f32.mrf.mxu0
      %v3360 = vadd.f32 %v3271, %v3359
      %3361 = vmatmul.bf16.gmra.mxu0 %v1997
      %v3362 = vpop.f32.mrf.mxu0
      %v3363 = vadd.f32 %v3274, %v3362
      %v3364 = vpop.f32.mrf.mxu0
      %v3365 = vadd.f32 %v3276, %v3364
      %3366 = vmatmul.bf16.gmra.mxu0 %v2000
      %v3367 = vpop.f32.mrf.mxu0
      %v3368 = vadd.f32 %v3279, %v3367
      %v3369 = vpop.f32.mrf.mxu0
      %v3370 = vadd.f32 %v3281, %v3369
      %3371 = vmatmul.bf16.gmra.mxu0 %v2303
      %v3372 = vpop.f32.mrf.mxu0
      %v3373 = vadd.f32 %v3284, %v3372
      %v3374 = vpop.f32.mrf.mxu0
      %v3375 = vadd.f32 %v3286, %v3374
      %3376 = vmatmul.bf16.gmra.mxu0 %v2606
      %v3377 = vpop.f32.mrf.mxu0
      %v3378 = vadd.f32 %v3289, %v3377
      %v3379 = vpop.f32.mrf.mxu0
      %v3380 = vadd.f32 %v3291, %v3379
      %3381 = vmatmul.bf16.gmra.mxu0 %v2909
      %v3382 = vpop.f32.mrf.mxu0
      %v3383 = vadd.f32 %v3294, %v3382
      %v3384 = vpop.f32.mrf.mxu0
      %v3385 = vadd.f32 %v3296, %v3384
      %3386 = vmatmul.bf16.gmra.mxu0 %v3212
      %v3387 = vpop.f32.mrf.mxu0
      %v3388 = vadd.f32 %v3299, %v3387
      %v3389 = vpop.f32.mrf.mxu0
      %v3390 = vadd.f32 %v3301, %v3389
      %3391 = vdwg.mxu0
      %v3392 = vadd.f32 %v3089, %v3313
      %v3393 = vadd.f32 %v3090, %v3315
      %v3394 = vadd.f32 %v3091, %v3318
      %v3395 = vadd.f32 %v3092, %v3320
      %v3396 = vadd.f32 %v3093, %v3323
      %v3397 = vadd.f32 %v3094, %v3325
      %v3398 = vadd.f32 %v3095, %v3328
      %v3399 = vadd.f32 %v3096, %v3330
      %v3400 = vadd.f32 %v3097, %v3333
      %v3401 = vadd.f32 %v3098, %v3335
      %v3402 = vadd.f32 %v3099, %v3338
      %v3403 = vadd.f32 %v3100, %v3340
      %v3404 = vadd.f32 %v3101, %v3343
      %v3405 = vadd.f32 %v3102, %v3345
      %v3406 = vadd.f32 %v3103, %v3348
      %v3407 = vadd.f32 %v3104, %v3350
      %v3408 = vadd.f32 %v3105, %v3353
      %v3409 = vadd.f32 %v3106, %v3355
      %v3410 = vadd.f32 %v3107, %v3358
      %v3411 = vadd.f32 %v3108, %v3360
      %v3412 = vadd.f32 %v3109, %v3363
      %v3413 = vadd.f32 %v3110, %v3365
      %v3414 = vadd.f32 %v3111, %v3368
      %v3415 = vadd.f32 %v3112, %v3370
      %v3416 = vadd.f32 %v3113, %v3373
      %v3417 = vadd.f32 %v3114, %v3375
      %v3418 = vadd.f32 %v3115, %v3378
      %v3419 = vadd.f32 %v3116, %v3380
      %v3420 = vadd.f32 %v3117, %v3383
      %v3421 = vadd.f32 %v3118, %v3385
      %v3422 = vadd.f32 %v3119, %v3388
      %v3423 = vadd.f32 %v3120, %v3390
      %v3424 = vlaneseq
      %v3425 = vand.u32 %v3424, 127
      %vm3426 = vcmp.ge.s32.totalorder %v3425, 96
      %v3427 = vmul.f32 %v3392, 2.0
      %v3428 = vmul.f32 %v3393, 2.0
      %v3429 = vmul.f32 %v3394, 2.0
      %v3430 = vmul.f32 %v3395, 2.0
      %v3431 = vmul.f32 %v3396, 2.0
      %v3432 = vmul.f32 %v3397, 2.0
      %v3433 = vmul.f32 %v3398, 2.0
      %v3434 = vmul.f32 %v3399, 2.0
      %v3435 = vmul.f32 %v3400, 2.0
      %v3436 = vmul.f32 %v3401, 2.0
      %v3437 = vmul.f32 %v3402, 2.0
      %v3438 = vmul.f32 %v3403, 2.0
      %v3439 = vmul.f32 %v3404, 2.0
      %v3440 = vmul.f32 %v3405, 2.0
      %v3441 = vmul.f32 %v3406, 2.0
      %v3442 = vmul.f32 %v3407, 2.0
      %v3443 = vmul.f32 %v3408, 2.0
      %v3444 = vmul.f32 %v3409, 2.0
      %v3445 = vmul.f32 %v3410, 2.0
      %v3446 = vmul.f32 %v3411, 2.0
      %v3447 = vmul.f32 %v3412, 2.0
      %v3448 = vmul.f32 %v3413, 2.0
      %v3449 = vmul.f32 %v3414, 2.0
      %v3450 = vmul.f32 %v3415, 2.0
      %v3451 = vmul.f32 %v3416, 2.0
      %v3452 = vmul.f32 %v3417, 2.0
      %v3453 = vmul.f32 %v3418, 2.0
      %v3454 = vmul.f32 %v3419, 2.0
      %v3455 = vmul.f32 %v3420, 2.0
      %v3456 = vmul.f32 %v3421, 2.0
      %v3457 = vmul.f32 %v3422, 2.0
      %v3458 = vmul.f32 %v3423, 2.0
      %v3459 = vsel %vm3426, %v3427, %v3392
      %v3460 = vsel %vm3426, %v3428, %v3393
      %v3461 = vsel %vm3426, %v3429, %v3394
      %v3462 = vsel %vm3426, %v3430, %v3395
      %v3463 = vsel %vm3426, %v3431, %v3396
      %v3464 = vsel %vm3426, %v3432, %v3397
      %v3465 = vsel %vm3426, %v3433, %v3398
      %v3466 = vsel %vm3426, %v3434, %v3399
      %v3467 = vsel %vm3426, %v3435, %v3400
      %v3468 = vsel %vm3426, %v3436, %v3401
      %v3469 = vsel %vm3426, %v3437, %v3402
      %v3470 = vsel %vm3426, %v3438, %v3403
      %v3471 = vsel %vm3426, %v3439, %v3404
      %v3472 = vsel %vm3426, %v3440, %v3405
      %v3473 = vsel %vm3426, %v3441, %v3406
      %v3474 = vsel %vm3426, %v3442, %v3407
      %v3475 = vsel %vm3426, %v3443, %v3408
      %v3476 = vsel %vm3426, %v3444, %v3409
      %v3477 = vsel %vm3426, %v3445, %v3410
      %v3478 = vsel %vm3426, %v3446, %v3411
      %v3479 = vsel %vm3426, %v3447, %v3412
      %v3480 = vsel %vm3426, %v3448, %v3413
      %v3481 = vsel %vm3426, %v3449, %v3414
      %v3482 = vsel %vm3426, %v3450, %v3415
      %v3483 = vsel %vm3426, %v3451, %v3416
      %v3484 = vsel %vm3426, %v3452, %v3417
      %v3485 = vsel %vm3426, %v3453, %v3418
      %v3486 = vsel %vm3426, %v3454, %v3419
      %v3487 = vsel %vm3426, %v3455, %v3420
      %v3488 = vsel %vm3426, %v3456, %v3421
      %v3489 = vsel %vm3426, %v3457, %v3422
      %v3490 = vsel %vm3426, %v3458, %v3423
      %v3491 = vxor.u32 %v3459, 2147483648
      %v3492 = vxor.u32 %v3460, 2147483648
      %v3493 = vxor.u32 %v3461, 2147483648
      %v3494 = vxor.u32 %v3462, 2147483648
      %v3495 = vxor.u32 %v3463, 2147483648
      %v3496 = vxor.u32 %v3464, 2147483648
      %v3497 = vxor.u32 %v3465, 2147483648
      %v3498 = vxor.u32 %v3466, 2147483648
      %v3499 = vxor.u32 %v3467, 2147483648
      %v3500 = vxor.u32 %v3468, 2147483648
      %v3501 = vxor.u32 %v3469, 2147483648
      %v3502 = vxor.u32 %v3470, 2147483648
      %v3503 = vxor.u32 %v3471, 2147483648
      %v3504 = vxor.u32 %v3472, 2147483648
      %v3505 = vxor.u32 %v3473, 2147483648
      %v3506 = vxor.u32 %v3474, 2147483648
      %v3507 = vxor.u32 %v3475, 2147483648
      %v3508 = vxor.u32 %v3476, 2147483648
      %v3509 = vxor.u32 %v3477, 2147483648
      %v3510 = vxor.u32 %v3478, 2147483648
      %v3511 = vxor.u32 %v3479, 2147483648
      %v3512 = vxor.u32 %v3480, 2147483648
      %v3513 = vxor.u32 %v3481, 2147483648
      %v3514 = vxor.u32 %v3482, 2147483648
      %v3515 = vxor.u32 %v3483, 2147483648
      %v3516 = vxor.u32 %v3484, 2147483648
      %v3517 = vxor.u32 %v3485, 2147483648
      %v3518 = vxor.u32 %v3486, 2147483648
      %v3519 = vxor.u32 %v3487, 2147483648
      %v3520 = vxor.u32 %v3488, 2147483648
      %v3521 = vxor.u32 %v3489, 2147483648
      %v3522 = vxor.u32 %v3490, 2147483648
      %v3523 = vmul.f32 %v3491, 1.442695
      %v3524 = vpow.pop %v3523
      %v3525 = vmul.f32 %v3492, 1.442695
      %v3526 = vpow.pop %v3525
      %v3527 = vmul.f32 %v3493, 1.442695
      %v3528 = vpow.pop %v3527
      %v3529 = vmul.f32 %v3494, 1.442695
      %v3530 = vpow.pop %v3529
      %v3531 = vmul.f32 %v3495, 1.442695
      %v3532 = vpow.pop %v3531
      %v3533 = vmul.f32 %v3496, 1.442695
      %v3534 = vpow.pop %v3533
      %v3535 = vmul.f32 %v3497, 1.442695
      %v3536 = vpow.pop %v3535
      %v3537 = vmul.f32 %v3498, 1.442695
      %v3538 = vpow.pop %v3537
      %v3539 = vmul.f32 %v3499, 1.442695
      %v3540 = vpow.pop %v3539
      %v3541 = vmul.f32 %v3500, 1.442695
      %v3542 = vpow.pop %v3541
      %v3543 = vmul.f32 %v3501, 1.442695
      %v3544 = vpow.pop %v3543
      %v3545 = vmul.f32 %v3502, 1.442695
      %v3546 = vpow.pop %v3545
      %v3547 = vmul.f32 %v3503, 1.442695
      %v3548 = vpow.pop %v3547
      %v3549 = vmul.f32 %v3504, 1.442695
      %v3550 = vpow.pop %v3549
      %v3551 = vmul.f32 %v3505, 1.442695
      %v3552 = vpow.pop %v3551
      %v3553 = vmul.f32 %v3506, 1.442695
      %v3554 = vpow.pop %v3553
      %v3555 = vmul.f32 %v3507, 1.442695
      %v3556 = vpow.pop %v3555
      %v3557 = vmul.f32 %v3508, 1.442695
      %v3558 = vpow.pop %v3557
      %v3559 = vmul.f32 %v3509, 1.442695
      %v3560 = vpow.pop %v3559
      %v3561 = vmul.f32 %v3510, 1.442695
      %v3562 = vpow.pop %v3561
      %v3563 = vmul.f32 %v3511, 1.442695
      %v3564 = vpow.pop %v3563
      %v3565 = vmul.f32 %v3512, 1.442695
      %v3566 = vpow.pop %v3565
      %v3567 = vmul.f32 %v3513, 1.442695
      %v3568 = vpow.pop %v3567
      %v3569 = vmul.f32 %v3514, 1.442695
      %v3570 = vpow.pop %v3569
      %v3571 = vmul.f32 %v3515, 1.442695
      %v3572 = vpow.pop %v3571
      %v3573 = vmul.f32 %v3516, 1.442695
      %v3574 = vpow.pop %v3573
      %v3575 = vmul.f32 %v3517, 1.442695
      %v3576 = vpow.pop %v3575
      %v3577 = vmul.f32 %v3518, 1.442695
      %v3578 = vpow.pop %v3577
      %v3579 = vmul.f32 %v3519, 1.442695
      %v3580 = vpow.pop %v3579
      %v3581 = vmul.f32 %v3520, 1.442695
      %v3582 = vpow.pop %v3581
      %v3583 = vmul.f32 %v3521, 1.442695
      %v3584 = vpow.pop %v3583
      %v3585 = vmul.f32 %v3522, 1.442695
      %v3586 = vpow.pop %v3585
      %v3587 = vadd.f32 %v3524, 1.0
      %v3588 = vadd.f32 %v3526, 1.0
      %v3589 = vadd.f32 %v3528, 1.0
      %v3590 = vadd.f32 %v3530, 1.0
      %v3591 = vadd.f32 %v3532, 1.0
      %v3592 = vadd.f32 %v3534, 1.0
      %v3593 = vadd.f32 %v3536, 1.0
      %v3594 = vadd.f32 %v3538, 1.0
      %v3595 = vadd.f32 %v3540, 1.0
      %v3596 = vadd.f32 %v3542, 1.0
      %v3597 = vadd.f32 %v3544, 1.0
      %v3598 = vadd.f32 %v3546, 1.0
      %v3599 = vadd.f32 %v3548, 1.0
      %v3600 = vadd.f32 %v3550, 1.0
      %v3601 = vadd.f32 %v3552, 1.0
      %v3602 = vadd.f32 %v3554, 1.0
      %v3603 = vadd.f32 %v3556, 1.0
      %v3604 = vadd.f32 %v3558, 1.0
      %v3605 = vadd.f32 %v3560, 1.0
      %v3606 = vadd.f32 %v3562, 1.0
      %v3607 = vadd.f32 %v3564, 1.0
      %v3608 = vadd.f32 %v3566, 1.0
      %v3609 = vadd.f32 %v3568, 1.0
      %v3610 = vadd.f32 %v3570, 1.0
      %v3611 = vadd.f32 %v3572, 1.0
      %v3612 = vadd.f32 %v3574, 1.0
      %v3613 = vadd.f32 %v3576, 1.0
      %v3614 = vadd.f32 %v3578, 1.0
      %v3615 = vadd.f32 %v3580, 1.0
      %v3616 = vadd.f32 %v3582, 1.0
      %v3617 = vadd.f32 %v3584, 1.0
      %v3618 = vadd.f32 %v3586, 1.0
      %v3619 = vrcp.pop %v3587
      %v3620 = vmul.f32 %v3587, %v3619
      %v3621 = vsub.f32 1.0, %v3620
      %v3622 = vmul.f32 %v3619, %v3621
      %v3623 = vadd.f32 %v3619, %v3622
      %vm3624 = vweird.f32 %v3587
      %vm3625 = vweird.f32 %v3619
      %vm3626 = vmor %vm3624, %vm3625
      %v3627 = vsel %vm3626, %v3619, %v3623
      %v3628 = vand.u32 2147483647, %v3587
      %vm3629 = vcmp.eq.f32.partialorder %v3628, 8.507059e+37
      %v3630 = vand.u32 %v3587, 2147483648
      %v3631 = vor.u32 1.1754944e-38, %v3630
      %v3632 = vsel %vm3629, %v3631, %v3627
      %v3633 = vmul.f32 1.0, %v3632
      %v3634 = vrcp.pop %v3588
      %v3635 = vmul.f32 %v3588, %v3634
      %v3636 = vsub.f32 1.0, %v3635
      %v3637 = vmul.f32 %v3634, %v3636
      %v3638 = vadd.f32 %v3634, %v3637
      %vm3639 = vweird.f32 %v3588
      %vm3640 = vweird.f32 %v3634
      %vm3641 = vmor %vm3639, %vm3640
      %v3642 = vsel %vm3641, %v3634, %v3638
      %v3643 = vand.u32 2147483647, %v3588
      %vm3644 = vcmp.eq.f32.partialorder %v3643, 8.507059e+37
      %v3645 = vand.u32 %v3588, 2147483648
      %v3646 = vor.u32 1.1754944e-38, %v3645
      %v3647 = vsel %vm3644, %v3646, %v3642
      %v3648 = vmul.f32 1.0, %v3647
      %v3649 = vrcp.pop %v3589
      %v3650 = vmul.f32 %v3589, %v3649
      %v3651 = vsub.f32 1.0, %v3650
      %v3652 = vmul.f32 %v3649, %v3651
      %v3653 = vadd.f32 %v3649, %v3652
      %vm3654 = vweird.f32 %v3589
      %vm3655 = vweird.f32 %v3649
      %vm3656 = vmor %vm3654, %vm3655
      %v3657 = vsel %vm3656, %v3649, %v3653
      %v3658 = vand.u32 2147483647, %v3589
      %vm3659 = vcmp.eq.f32.partialorder %v3658, 8.507059e+37
      %v3660 = vand.u32 %v3589, 2147483648
      %v3661 = vor.u32 1.1754944e-38, %v3660
      %v3662 = vsel %vm3659, %v3661, %v3657
      %v3663 = vmul.f32 1.0, %v3662
      %v3664 = vrcp.pop %v3590
      %v3665 = vmul.f32 %v3590, %v3664
      %v3666 = vsub.f32 1.0, %v3665
      %v3667 = vmul.f32 %v3664, %v3666
      %v3668 = vadd.f32 %v3664, %v3667
      %vm3669 = vweird.f32 %v3590
      %vm3670 = vweird.f32 %v3664
      %vm3671 = vmor %vm3669, %vm3670
      %v3672 = vsel %vm3671, %v3664, %v3668
      %v3673 = vand.u32 2147483647, %v3590
      %vm3674 = vcmp.eq.f32.partialorder %v3673, 8.507059e+37
      %v3675 = vand.u32 %v3590, 2147483648
      %v3676 = vor.u32 1.1754944e-38, %v3675
      %v3677 = vsel %vm3674, %v3676, %v3672
      %v3678 = vmul.f32 1.0, %v3677
      %v3679 = vrcp.pop %v3591
      %v3680 = vmul.f32 %v3591, %v3679
      %v3681 = vsub.f32 1.0, %v3680
      %v3682 = vmul.f32 %v3679, %v3681
      %v3683 = vadd.f32 %v3679, %v3682
      %vm3684 = vweird.f32 %v3591
      %vm3685 = vweird.f32 %v3679
      %vm3686 = vmor %vm3684, %vm3685
      %v3687 = vsel %vm3686, %v3679, %v3683
      %v3688 = vand.u32 2147483647, %v3591
      %vm3689 = vcmp.eq.f32.partialorder %v3688, 8.507059e+37
      %v3690 = vand.u32 %v3591, 2147483648
      %v3691 = vor.u32 1.1754944e-38, %v3690
      %v3692 = vsel %vm3689, %v3691, %v3687
      %v3693 = vmul.f32 1.0, %v3692
      %v3694 = vrcp.pop %v3592
      %v3695 = vmul.f32 %v3592, %v3694
      %v3696 = vsub.f32 1.0, %v3695
      %v3697 = vmul.f32 %v3694, %v3696
      %v3698 = vadd.f32 %v3694, %v3697
      %vm3699 = vweird.f32 %v3592
      %vm3700 = vweird.f32 %v3694
      %vm3701 = vmor %vm3699, %vm3700
      %v3702 = vsel %vm3701, %v3694, %v3698
      %v3703 = vand.u32 2147483647, %v3592
      %vm3704 = vcmp.eq.f32.partialorder %v3703, 8.507059e+37
      %v3705 = vand.u32 %v3592, 2147483648
      %v3706 = vor.u32 1.1754944e-38, %v3705
      %v3707 = vsel %vm3704, %v3706, %v3702
      %v3708 = vmul.f32 1.0, %v3707
      %v3709 = vrcp.pop %v3593
      %v3710 = vmul.f32 %v3593, %v3709
      %v3711 = vsub.f32 1.0, %v3710
      %v3712 = vmul.f32 %v3709, %v3711
      %v3713 = vadd.f32 %v3709, %v3712
      %vm3714 = vweird.f32 %v3593
      %vm3715 = vweird.f32 %v3709
      %vm3716 = vmor %vm3714, %vm3715
      %v3717 = vsel %vm3716, %v3709, %v3713
      %v3718 = vand.u32 2147483647, %v3593
      %vm3719 = vcmp.eq.f32.partialorder %v3718, 8.507059e+37
      %v3720 = vand.u32 %v3593, 2147483648
      %v3721 = vor.u32 1.1754944e-38, %v3720
      %v3722 = vsel %vm3719, %v3721, %v3717
      %v3723 = vmul.f32 1.0, %v3722
      %v3724 = vrcp.pop %v3594
      %v3725 = vmul.f32 %v3594, %v3724
      %v3726 = vsub.f32 1.0, %v3725
      %v3727 = vmul.f32 %v3724, %v3726
      %v3728 = vadd.f32 %v3724, %v3727
      %vm3729 = vweird.f32 %v3594
      %vm3730 = vweird.f32 %v3724
      %vm3731 = vmor %vm3729, %vm3730
      %v3732 = vsel %vm3731, %v3724, %v3728
      %v3733 = vand.u32 2147483647, %v3594
      %vm3734 = vcmp.eq.f32.partialorder %v3733, 8.507059e+37
      %v3735 = vand.u32 %v3594, 2147483648
      %v3736 = vor.u32 1.1754944e-38, %v3735
      %v3737 = vsel %vm3734, %v3736, %v3732
      %v3738 = vmul.f32 1.0, %v3737
      %v3739 = vrcp.pop %v3595
      %v3740 = vmul.f32 %v3595, %v3739
      %v3741 = vsub.f32 1.0, %v3740
      %v3742 = vmul.f32 %v3739, %v3741
      %v3743 = vadd.f32 %v3739, %v3742
      %vm3744 = vweird.f32 %v3595
      %vm3745 = vweird.f32 %v3739
      %vm3746 = vmor %vm3744, %vm3745
      %v3747 = vsel %vm3746, %v3739, %v3743
      %v3748 = vand.u32 2147483647, %v3595
      %vm3749 = vcmp.eq.f32.partialorder %v3748, 8.507059e+37
      %v3750 = vand.u32 %v3595, 2147483648
      %v3751 = vor.u32 1.1754944e-38, %v3750
      %v3752 = vsel %vm3749, %v3751, %v3747
      %v3753 = vmul.f32 1.0, %v3752
      %v3754 = vrcp.pop %v3596
      %v3755 = vmul.f32 %v3596, %v3754
      %v3756 = vsub.f32 1.0, %v3755
      %v3757 = vmul.f32 %v3754, %v3756
      %v3758 = vadd.f32 %v3754, %v3757
      %vm3759 = vweird.f32 %v3596
      %vm3760 = vweird.f32 %v3754
      %vm3761 = vmor %vm3759, %vm3760
      %v3762 = vsel %vm3761, %v3754, %v3758
      %v3763 = vand.u32 2147483647, %v3596
      %vm3764 = vcmp.eq.f32.partialorder %v3763, 8.507059e+37
      %v3765 = vand.u32 %v3596, 2147483648
      %v3766 = vor.u32 1.1754944e-38, %v3765
      %v3767 = vsel %vm3764, %v3766, %v3762
      %v3768 = vmul.f32 1.0, %v3767
      %v3769 = vrcp.pop %v3597
      %v3770 = vmul.f32 %v3597, %v3769
      %v3771 = vsub.f32 1.0, %v3770
      %v3772 = vmul.f32 %v3769, %v3771
      %v3773 = vadd.f32 %v3769, %v3772
      %vm3774 = vweird.f32 %v3597
      %vm3775 = vweird.f32 %v3769
      %vm3776 = vmor %vm3774, %vm3775
      %v3777 = vsel %vm3776, %v3769, %v3773
      %v3778 = vand.u32 2147483647, %v3597
      %vm3779 = vcmp.eq.f32.partialorder %v3778, 8.507059e+37
      %v3780 = vand.u32 %v3597, 2147483648
      %v3781 = vor.u32 1.1754944e-38, %v3780
      %v3782 = vsel %vm3779, %v3781, %v3777
      %v3783 = vmul.f32 1.0, %v3782
      %v3784 = vrcp.pop %v3598
      %v3785 = vmul.f32 %v3598, %v3784
      %v3786 = vsub.f32 1.0, %v3785
      %v3787 = vmul.f32 %v3784, %v3786
      %v3788 = vadd.f32 %v3784, %v3787
      %vm3789 = vweird.f32 %v3598
      %vm3790 = vweird.f32 %v3784
      %vm3791 = vmor %vm3789, %vm3790
      %v3792 = vsel %vm3791, %v3784, %v3788
      %v3793 = vand.u32 2147483647, %v3598
      %vm3794 = vcmp.eq.f32.partialorder %v3793, 8.507059e+37
      %v3795 = vand.u32 %v3598, 2147483648
      %v3796 = vor.u32 1.1754944e-38, %v3795
      %v3797 = vsel %vm3794, %v3796, %v3792
      %v3798 = vmul.f32 1.0, %v3797
      %v3799 = vrcp.pop %v3599
      %v3800 = vmul.f32 %v3599, %v3799
      %v3801 = vsub.f32 1.0, %v3800
      %v3802 = vmul.f32 %v3799, %v3801
      %v3803 = vadd.f32 %v3799, %v3802
      %vm3804 = vweird.f32 %v3599
      %vm3805 = vweird.f32 %v3799
      %vm3806 = vmor %vm3804, %vm3805
      %v3807 = vsel %vm3806, %v3799, %v3803
      %v3808 = vand.u32 2147483647, %v3599
      %vm3809 = vcmp.eq.f32.partialorder %v3808, 8.507059e+37
      %v3810 = vand.u32 %v3599, 2147483648
      %v3811 = vor.u32 1.1754944e-38, %v3810
      %v3812 = vsel %vm3809, %v3811, %v3807
      %v3813 = vmul.f32 1.0, %v3812
      %v3814 = vrcp.pop %v3600
      %v3815 = vmul.f32 %v3600, %v3814
      %v3816 = vsub.f32 1.0, %v3815
      %v3817 = vmul.f32 %v3814, %v3816
      %v3818 = vadd.f32 %v3814, %v3817
      %vm3819 = vweird.f32 %v3600
      %vm3820 = vweird.f32 %v3814
      %vm3821 = vmor %vm3819, %vm3820
      %v3822 = vsel %vm3821, %v3814, %v3818
      %v3823 = vand.u32 2147483647, %v3600
      %vm3824 = vcmp.eq.f32.partialorder %v3823, 8.507059e+37
      %v3825 = vand.u32 %v3600, 2147483648
      %v3826 = vor.u32 1.1754944e-38, %v3825
      %v3827 = vsel %vm3824, %v3826, %v3822
      %v3828 = vmul.f32 1.0, %v3827
      %v3829 = vrcp.pop %v3601
      %v3830 = vmul.f32 %v3601, %v3829
      %v3831 = vsub.f32 1.0, %v3830
      %v3832 = vmul.f32 %v3829, %v3831
      %v3833 = vadd.f32 %v3829, %v3832
      %vm3834 = vweird.f32 %v3601
      %vm3835 = vweird.f32 %v3829
      %vm3836 = vmor %vm3834, %vm3835
      %v3837 = vsel %vm3836, %v3829, %v3833
      %v3838 = vand.u32 2147483647, %v3601
      %vm3839 = vcmp.eq.f32.partialorder %v3838, 8.507059e+37
      %v3840 = vand.u32 %v3601, 2147483648
      %v3841 = vor.u32 1.1754944e-38, %v3840
      %v3842 = vsel %vm3839, %v3841, %v3837
      %v3843 = vmul.f32 1.0, %v3842
      %v3844 = vrcp.pop %v3602
      %v3845 = vmul.f32 %v3602, %v3844
      %v3846 = vsub.f32 1.0, %v3845
      %v3847 = vmul.f32 %v3844, %v3846
      %v3848 = vadd.f32 %v3844, %v3847
      %vm3849 = vweird.f32 %v3602
      %vm3850 = vweird.f32 %v3844
      %vm3851 = vmor %vm3849, %vm3850
      %v3852 = vsel %vm3851, %v3844, %v3848
      %v3853 = vand.u32 2147483647, %v3602
      %vm3854 = vcmp.eq.f32.partialorder %v3853, 8.507059e+37
      %v3855 = vand.u32 %v3602, 2147483648
      %v3856 = vor.u32 1.1754944e-38, %v3855
      %v3857 = vsel %vm3854, %v3856, %v3852
      %v3858 = vmul.f32 1.0, %v3857
      %v3859 = vrcp.pop %v3603
      %v3860 = vmul.f32 %v3603, %v3859
      %v3861 = vsub.f32 1.0, %v3860
      %v3862 = vmul.f32 %v3859, %v3861
      %v3863 = vadd.f32 %v3859, %v3862
      %vm3864 = vweird.f32 %v3603
      %vm3865 = vweird.f32 %v3859
      %vm3866 = vmor %vm3864, %vm3865
      %v3867 = vsel %vm3866, %v3859, %v3863
      %v3868 = vand.u32 2147483647, %v3603
      %vm3869 = vcmp.eq.f32.partialorder %v3868, 8.507059e+37
      %v3870 = vand.u32 %v3603, 2147483648
      %v3871 = vor.u32 1.1754944e-38, %v3870
      %v3872 = vsel %vm3869, %v3871, %v3867
      %v3873 = vmul.f32 1.0, %v3872
      %v3874 = vrcp.pop %v3604
      %v3875 = vmul.f32 %v3604, %v3874
      %v3876 = vsub.f32 1.0, %v3875
      %v3877 = vmul.f32 %v3874, %v3876
      %v3878 = vadd.f32 %v3874, %v3877
      %vm3879 = vweird.f32 %v3604
      %vm3880 = vweird.f32 %v3874
      %vm3881 = vmor %vm3879, %vm3880
      %v3882 = vsel %vm3881, %v3874, %v3878
      %v3883 = vand.u32 2147483647, %v3604
      %vm3884 = vcmp.eq.f32.partialorder %v3883, 8.507059e+37
      %v3885 = vand.u32 %v3604, 2147483648
      %v3886 = vor.u32 1.1754944e-38, %v3885
      %v3887 = vsel %vm3884, %v3886, %v3882
      %v3888 = vmul.f32 1.0, %v3887
      %v3889 = vrcp.pop %v3605
      %v3890 = vmul.f32 %v3605, %v3889
      %v3891 = vsub.f32 1.0, %v3890
      %v3892 = vmul.f32 %v3889, %v3891
      %v3893 = vadd.f32 %v3889, %v3892
      %vm3894 = vweird.f32 %v3605
      %vm3895 = vweird.f32 %v3889
      %vm3896 = vmor %vm3894, %vm3895
      %v3897 = vsel %vm3896, %v3889, %v3893
      %v3898 = vand.u32 2147483647, %v3605
      %vm3899 = vcmp.eq.f32.partialorder %v3898, 8.507059e+37
      %v3900 = vand.u32 %v3605, 2147483648
      %v3901 = vor.u32 1.1754944e-38, %v3900
      %v3902 = vsel %vm3899, %v3901, %v3897
      %v3903 = vmul.f32 1.0, %v3902
      %v3904 = vrcp.pop %v3606
      %v3905 = vmul.f32 %v3606, %v3904
      %v3906 = vsub.f32 1.0, %v3905
      %v3907 = vmul.f32 %v3904, %v3906
      %v3908 = vadd.f32 %v3904, %v3907
      %vm3909 = vweird.f32 %v3606
      %vm3910 = vweird.f32 %v3904
      %vm3911 = vmor %vm3909, %vm3910
      %v3912 = vsel %vm3911, %v3904, %v3908
      %v3913 = vand.u32 2147483647, %v3606
      %vm3914 = vcmp.eq.f32.partialorder %v3913, 8.507059e+37
      %v3915 = vand.u32 %v3606, 2147483648
      %v3916 = vor.u32 1.1754944e-38, %v3915
      %v3917 = vsel %vm3914, %v3916, %v3912
      %v3918 = vmul.f32 1.0, %v3917
      %v3919 = vrcp.pop %v3607
      %v3920 = vmul.f32 %v3607, %v3919
      %v3921 = vsub.f32 1.0, %v3920
      %v3922 = vmul.f32 %v3919, %v3921
      %v3923 = vadd.f32 %v3919, %v3922
      %vm3924 = vweird.f32 %v3607
      %vm3925 = vweird.f32 %v3919
      %vm3926 = vmor %vm3924, %vm3925
      %v3927 = vsel %vm3926, %v3919, %v3923
      %v3928 = vand.u32 2147483647, %v3607
      %vm3929 = vcmp.eq.f32.partialorder %v3928, 8.507059e+37
      %v3930 = vand.u32 %v3607, 2147483648
      %v3931 = vor.u32 1.1754944e-38, %v3930
      %v3932 = vsel %vm3929, %v3931, %v3927
      %v3933 = vmul.f32 1.0, %v3932
      %v3934 = vrcp.pop %v3608
      %v3935 = vmul.f32 %v3608, %v3934
      %v3936 = vsub.f32 1.0, %v3935
      %v3937 = vmul.f32 %v3934, %v3936
      %v3938 = vadd.f32 %v3934, %v3937
      %vm3939 = vweird.f32 %v3608
      %vm3940 = vweird.f32 %v3934
      %vm3941 = vmor %vm3939, %vm3940
      %v3942 = vsel %vm3941, %v3934, %v3938
      %v3943 = vand.u32 2147483647, %v3608
      %vm3944 = vcmp.eq.f32.partialorder %v3943, 8.507059e+37
      %v3945 = vand.u32 %v3608, 2147483648
      %v3946 = vor.u32 1.1754944e-38, %v3945
      %v3947 = vsel %vm3944, %v3946, %v3942
      %v3948 = vmul.f32 1.0, %v3947
      %v3949 = vrcp.pop %v3609
      %v3950 = vmul.f32 %v3609, %v3949
      %v3951 = vsub.f32 1.0, %v3950
      %v3952 = vmul.f32 %v3949, %v3951
      %v3953 = vadd.f32 %v3949, %v3952
      %vm3954 = vweird.f32 %v3609
      %vm3955 = vweird.f32 %v3949
      %vm3956 = vmor %vm3954, %vm3955
      %v3957 = vsel %vm3956, %v3949, %v3953
      %v3958 = vand.u32 2147483647, %v3609
      %vm3959 = vcmp.eq.f32.partialorder %v3958, 8.507059e+37
      %v3960 = vand.u32 %v3609, 2147483648
      %v3961 = vor.u32 1.1754944e-38, %v3960
      %v3962 = vsel %vm3959, %v3961, %v3957
      %v3963 = vmul.f32 1.0, %v3962
      %v3964 = vrcp.pop %v3610
      %v3965 = vmul.f32 %v3610, %v3964
      %v3966 = vsub.f32 1.0, %v3965
      %v3967 = vmul.f32 %v3964, %v3966
      %v3968 = vadd.f32 %v3964, %v3967
      %vm3969 = vweird.f32 %v3610
      %vm3970 = vweird.f32 %v3964
      %vm3971 = vmor %vm3969, %vm3970
      %v3972 = vsel %vm3971, %v3964, %v3968
      %v3973 = vand.u32 2147483647, %v3610
      %vm3974 = vcmp.eq.f32.partialorder %v3973, 8.507059e+37
      %v3975 = vand.u32 %v3610, 2147483648
      %v3976 = vor.u32 1.1754944e-38, %v3975
      %v3977 = vsel %vm3974, %v3976, %v3972
      %v3978 = vmul.f32 1.0, %v3977
      %v3979 = vrcp.pop %v3611
      %v3980 = vmul.f32 %v3611, %v3979
      %v3981 = vsub.f32 1.0, %v3980
      %v3982 = vmul.f32 %v3979, %v3981
      %v3983 = vadd.f32 %v3979, %v3982
      %vm3984 = vweird.f32 %v3611
      %vm3985 = vweird.f32 %v3979
      %vm3986 = vmor %vm3984, %vm3985
      %v3987 = vsel %vm3986, %v3979, %v3983
      %v3988 = vand.u32 2147483647, %v3611
      %vm3989 = vcmp.eq.f32.partialorder %v3988, 8.507059e+37
      %v3990 = vand.u32 %v3611, 2147483648
      %v3991 = vor.u32 1.1754944e-38, %v3990
      %v3992 = vsel %vm3989, %v3991, %v3987
      %v3993 = vmul.f32 1.0, %v3992
      %v3994 = vrcp.pop %v3612
      %v3995 = vmul.f32 %v3612, %v3994
      %v3996 = vsub.f32 1.0, %v3995
      %v3997 = vmul.f32 %v3994, %v3996
      %v3998 = vadd.f32 %v3994, %v3997
      %vm3999 = vweird.f32 %v3612
      %vm4000 = vweird.f32 %v3994
      %vm4001 = vmor %vm3999, %vm4000
      %v4002 = vsel %vm4001, %v3994, %v3998
      %v4003 = vand.u32 2147483647, %v3612
      %vm4004 = vcmp.eq.f32.partialorder %v4003, 8.507059e+37
      %v4005 = vand.u32 %v3612, 2147483648
      %v4006 = vor.u32 1.1754944e-38, %v4005
      %v4007 = vsel %vm4004, %v4006, %v4002
      %v4008 = vmul.f32 1.0, %v4007
      %v4009 = vrcp.pop %v3613
      %v4010 = vmul.f32 %v3613, %v4009
      %v4011 = vsub.f32 1.0, %v4010
      %v4012 = vmul.f32 %v4009, %v4011
      %v4013 = vadd.f32 %v4009, %v4012
      %vm4014 = vweird.f32 %v3613
      %vm4015 = vweird.f32 %v4009
      %vm4016 = vmor %vm4014, %vm4015
      %v4017 = vsel %vm4016, %v4009, %v4013
      %v4018 = vand.u32 2147483647, %v3613
      %vm4019 = vcmp.eq.f32.partialorder %v4018, 8.507059e+37
      %v4020 = vand.u32 %v3613, 2147483648
      %v4021 = vor.u32 1.1754944e-38, %v4020
      %v4022 = vsel %vm4019, %v4021, %v4017
      %v4023 = vmul.f32 1.0, %v4022
      %v4024 = vrcp.pop %v3614
      %v4025 = vmul.f32 %v3614, %v4024
      %v4026 = vsub.f32 1.0, %v4025
      %v4027 = vmul.f32 %v4024, %v4026
      %v4028 = vadd.f32 %v4024, %v4027
      %vm4029 = vweird.f32 %v3614
      %vm4030 = vweird.f32 %v4024
      %vm4031 = vmor %vm4029, %vm4030
      %v4032 = vsel %vm4031, %v4024, %v4028
      %v4033 = vand.u32 2147483647, %v3614
      %vm4034 = vcmp.eq.f32.partialorder %v4033, 8.507059e+37
      %v4035 = vand.u32 %v3614, 2147483648
      %v4036 = vor.u32 1.1754944e-38, %v4035
      %v4037 = vsel %vm4034, %v4036, %v4032
      %v4038 = vmul.f32 1.0, %v4037
      %v4039 = vrcp.pop %v3615
      %v4040 = vmul.f32 %v3615, %v4039
      %v4041 = vsub.f32 1.0, %v4040
      %v4042 = vmul.f32 %v4039, %v4041
      %v4043 = vadd.f32 %v4039, %v4042
      %vm4044 = vweird.f32 %v3615
      %vm4045 = vweird.f32 %v4039
      %vm4046 = vmor %vm4044, %vm4045
      %v4047 = vsel %vm4046, %v4039, %v4043
      %v4048 = vand.u32 2147483647, %v3615
      %vm4049 = vcmp.eq.f32.partialorder %v4048, 8.507059e+37
      %v4050 = vand.u32 %v3615, 2147483648
      %v4051 = vor.u32 1.1754944e-38, %v4050
      %v4052 = vsel %vm4049, %v4051, %v4047
      %v4053 = vmul.f32 1.0, %v4052
      %v4054 = vrcp.pop %v3616
      %v4055 = vmul.f32 %v3616, %v4054
      %v4056 = vsub.f32 1.0, %v4055
      %v4057 = vmul.f32 %v4054, %v4056
      %v4058 = vadd.f32 %v4054, %v4057
      %vm4059 = vweird.f32 %v3616
      %vm4060 = vweird.f32 %v4054
      %vm4061 = vmor %vm4059, %vm4060
      %v4062 = vsel %vm4061, %v4054, %v4058
      %v4063 = vand.u32 2147483647, %v3616
      %vm4064 = vcmp.eq.f32.partialorder %v4063, 8.507059e+37
      %v4065 = vand.u32 %v3616, 2147483648
      %v4066 = vor.u32 1.1754944e-38, %v4065
      %v4067 = vsel %vm4064, %v4066, %v4062
      %v4068 = vmul.f32 1.0, %v4067
      %v4069 = vrcp.pop %v3617
      %v4070 = vmul.f32 %v3617, %v4069
      %v4071 = vsub.f32 1.0, %v4070
      %v4072 = vmul.f32 %v4069, %v4071
      %v4073 = vadd.f32 %v4069, %v4072
      %vm4074 = vweird.f32 %v3617
      %vm4075 = vweird.f32 %v4069
      %vm4076 = vmor %vm4074, %vm4075
      %v4077 = vsel %vm4076, %v4069, %v4073
      %v4078 = vand.u32 2147483647, %v3617
      %vm4079 = vcmp.eq.f32.partialorder %v4078, 8.507059e+37
      %v4080 = vand.u32 %v3617, 2147483648
      %v4081 = vor.u32 1.1754944e-38, %v4080
      %v4082 = vsel %vm4079, %v4081, %v4077
      %v4083 = vmul.f32 1.0, %v4082
      %v4084 = vrcp.pop %v3618
      %v4085 = vmul.f32 %v3618, %v4084
      %v4086 = vsub.f32 1.0, %v4085
      %v4087 = vmul.f32 %v4084, %v4086
      %v4088 = vadd.f32 %v4084, %v4087
      %vm4089 = vweird.f32 %v3618
      %vm4090 = vweird.f32 %v4084
      %vm4091 = vmor %vm4089, %vm4090
      %v4092 = vsel %vm4091, %v4084, %v4088
      %v4093 = vand.u32 2147483647, %v3618
      %vm4094 = vcmp.eq.f32.partialorder %v4093, 8.507059e+37
      %v4095 = vand.u32 %v3618, 2147483648
      %v4096 = vor.u32 1.1754944e-38, %v4095
      %v4097 = vsel %vm4094, %v4096, %v4092
      %v4098 = vmul.f32 1.0, %v4097
      %v4099 = vmul.f32 %v3633, 2.0
      %v4100 = vmul.f32 %v3648, 2.0
      %v4101 = vmul.f32 %v3663, 2.0
      %v4102 = vmul.f32 %v3678, 2.0
      %v4103 = vmul.f32 %v3693, 2.0
      %v4104 = vmul.f32 %v3708, 2.0
      %v4105 = vmul.f32 %v3723, 2.0
      %v4106 = vmul.f32 %v3738, 2.0
      %v4107 = vmul.f32 %v3753, 2.0
      %v4108 = vmul.f32 %v3768, 2.0
      %v4109 = vmul.f32 %v3783, 2.0
      %v4110 = vmul.f32 %v3798, 2.0
      %v4111 = vmul.f32 %v3813, 2.0
      %v4112 = vmul.f32 %v3828, 2.0
      %v4113 = vmul.f32 %v3843, 2.0
      %v4114 = vmul.f32 %v3858, 2.0
      %v4115 = vmul.f32 %v3873, 2.0
      %v4116 = vmul.f32 %v3888, 2.0
      %v4117 = vmul.f32 %v3903, 2.0
      %v4118 = vmul.f32 %v3918, 2.0
      %v4119 = vmul.f32 %v3933, 2.0
      %v4120 = vmul.f32 %v3948, 2.0
      %v4121 = vmul.f32 %v3963, 2.0
      %v4122 = vmul.f32 %v3978, 2.0
      %v4123 = vmul.f32 %v3993, 2.0
      %v4124 = vmul.f32 %v4008, 2.0
      %v4125 = vmul.f32 %v4023, 2.0
      %v4126 = vmul.f32 %v4038, 2.0
      %v4127 = vmul.f32 %v4053, 2.0
      %v4128 = vmul.f32 %v4068, 2.0
      %v4129 = vmul.f32 %v4083, 2.0
      %v4130 = vmul.f32 %v4098, 2.0
      %v4131 = vsub.f32 %v4099, 1.0
      %v4132 = vsub.f32 %v4100, 1.0
      %v4133 = vsub.f32 %v4101, 1.0
      %v4134 = vsub.f32 %v4102, 1.0
      %v4135 = vsub.f32 %v4103, 1.0
      %v4136 = vsub.f32 %v4104, 1.0
      %v4137 = vsub.f32 %v4105, 1.0
      %v4138 = vsub.f32 %v4106, 1.0
      %v4139 = vsub.f32 %v4107, 1.0
      %v4140 = vsub.f32 %v4108, 1.0
      %v4141 = vsub.f32 %v4109, 1.0
      %v4142 = vsub.f32 %v4110, 1.0
      %v4143 = vsub.f32 %v4111, 1.0
      %v4144 = vsub.f32 %v4112, 1.0
      %v4145 = vsub.f32 %v4113, 1.0
      %v4146 = vsub.f32 %v4114, 1.0
      %v4147 = vsub.f32 %v4115, 1.0
      %v4148 = vsub.f32 %v4116, 1.0
      %v4149 = vsub.f32 %v4117, 1.0
      %v4150 = vsub.f32 %v4118, 1.0
      %v4151 = vsub.f32 %v4119, 1.0
      %v4152 = vsub.f32 %v4120, 1.0
      %v4153 = vsub.f32 %v4121, 1.0
      %v4154 = vsub.f32 %v4122, 1.0
      %v4155 = vsub.f32 %v4123, 1.0
      %v4156 = vsub.f32 %v4124, 1.0
      %v4157 = vsub.f32 %v4125, 1.0
      %v4158 = vsub.f32 %v4126, 1.0
      %v4159 = vsub.f32 %v4127, 1.0
      %v4160 = vsub.f32 %v4128, 1.0
      %v4161 = vsub.f32 %v4129, 1.0
      %v4162 = vsub.f32 %v4130, 1.0
      %v4163 = vsel %vm3426, %v4131, %v3633
      %v4164 = vsel %vm3426, %v4132, %v3648
      %v4165 = vsel %vm3426, %v4133, %v3663
      %v4166 = vsel %vm3426, %v4134, %v3678
      %v4167 = vsel %vm3426, %v4135, %v3693
      %v4168 = vsel %vm3426, %v4136, %v3708
      %v4169 = vsel %vm3426, %v4137, %v3723
      %v4170 = vsel %vm3426, %v4138, %v3738
      %v4171 = vsel %vm3426, %v4139, %v3753
      %v4172 = vsel %vm3426, %v4140, %v3768
      %v4173 = vsel %vm3426, %v4141, %v3783
      %v4174 = vsel %vm3426, %v4142, %v3798
      %v4175 = vsel %vm3426, %v4143, %v3813
      %v4176 = vsel %vm3426, %v4144, %v3828
      %v4177 = vsel %vm3426, %v4145, %v3843
      %v4178 = vsel %vm3426, %v4146, %v3858
      %v4179 = vsel %vm3426, %v4147, %v3873
      %v4180 = vsel %vm3426, %v4148, %v3888
      %v4181 = vsel %vm3426, %v4149, %v3903
      %v4182 = vsel %vm3426, %v4150, %v3918
      %v4183 = vsel %vm3426, %v4151, %v3933
      %v4184 = vsel %vm3426, %v4152, %v3948
      %v4185 = vsel %vm3426, %v4153, %v3963
      %v4186 = vsel %vm3426, %v4154, %v3978
      %v4187 = vsel %vm3426, %v4155, %v3993
      %v4188 = vsel %vm3426, %v4156, %v4008
      %v4189 = vsel %vm3426, %v4157, %v4023
      %v4190 = vsel %vm3426, %v4158, %v4038
      %v4191 = vsel %vm3426, %v4159, %v4053
      %v4192 = vsel %vm3426, %v4160, %v4068
      %v4193 = vsel %vm3426, %v4161, %v4083
      %v4194 = vsel %vm3426, %v4162, %v4098
      %v4195 = vld [vmem:[#allocation3] sm:$0xff]
      %v4196 = vld [vmem:[#allocation3 + $0x8] sm:$0xff]
      %v4197 = vld [vmem:[#allocation3 + $0x10] sm:$0xff]
      %v4198 = vld [vmem:[#allocation3 + $0x18] sm:$0xff]
      %v4199 = vld [vmem:[#allocation3 + $0x20] sm:$0xff]
      %v4200 = vld [vmem:[#allocation3 + $0x28] sm:$0xff]
      %v4201 = vld [vmem:[#allocation3 + $0x30] sm:$0xff]
      %v4202 = vld [vmem:[#allocation3 + $0x38] sm:$0xff]
      %v4203 = vld [vmem:[#allocation3 + $0x40] sm:$0xff]
      %v4204 = vld [vmem:[#allocation3 + $0x48] sm:$0xff]
      %v4205 = vld [vmem:[#allocation3 + $0x50] sm:$0xff]
      %v4206 = vld [vmem:[#allocation3 + $0x58] sm:$0xff]
      %v4207 = vld [vmem:[#allocation3 + $0x60] sm:$0xff]
      %v4208 = vld [vmem:[#allocation3 + $0x68] sm:$0xff]
      %v4209 = vld [vmem:[#allocation3 + $0x70] sm:$0xff]
      %v4210 = vld [vmem:[#allocation3 + $0x78] sm:$0xff]
      %v4211 = vld [vmem:[#allocation3 + $0x80] sm:$0xff]
      %v4212 = vld [vmem:[#allocation3 + $0x88] sm:$0xff]
      %v4213 = vld [vmem:[#allocation3 + $0x90] sm:$0xff]
      %v4214 = vld [vmem:[#allocation3 + $0x98] sm:$0xff]
      %v4215 = vld [vmem:[#allocation3 + $0xa0] sm:$0xff]
      %v4216 = vld [vmem:[#allocation3 + $0xa8] sm:$0xff]
      %v4217 = vld [vmem:[#allocation3 + $0xb0] sm:$0xff]
      %v4218 = vld [vmem:[#allocation3 + $0xb8] sm:$0xff]
      %v4219 = vld [vmem:[#allocation3 + $0xc0] sm:$0xff]
      %v4220 = vld [vmem:[#allocation3 + $0xc8] sm:$0xff]
      %v4221 = vld [vmem:[#allocation3 + $0xd0] sm:$0xff]
      %v4222 = vld [vmem:[#allocation3 + $0xd8] sm:$0xff]
      %v4223 = vld [vmem:[#allocation3 + $0xe0] sm:$0xff]
      %v4224 = vld [vmem:[#allocation3 + $0xe8] sm:$0xff]
      %v4225 = vld [vmem:[#allocation3 + $0xf0] sm:$0xff]
      %v4226 = vld [vmem:[#allocation3 + $0xf8] sm:$0xff]
      %4259 = vrot.lane.b32.xlu0 %v4163, 96
      %v4260 = vpop.permute.xlu0 %4259
      %4261 = vrot.lane.b32.xlu0 %v4164, 96
      %v4262 = vpop.permute.xlu0 %4261
      %4263 = vrot.lane.b32.xlu0 %v4165, 96
      %v4264 = vpop.permute.xlu0 %4263
      %4265 = vrot.lane.b32.xlu0 %v4166, 96
      %v4266 = vpop.permute.xlu0 %4265
      %4267 = vrot.lane.b32.xlu0 %v4167, 96
      %v4268 = vpop.permute.xlu0 %4267
      %4269 = vrot.lane.b32.xlu0 %v4168, 96
      %v4270 = vpop.permute.xlu0 %4269
      %4271 = vrot.lane.b32.xlu0 %v4169, 96
      %v4272 = vpop.permute.xlu0 %4271
      %4273 = vrot.lane.b32.xlu0 %v4170, 96
      %v4274 = vpop.permute.xlu0 %4273
      %4275 = vrot.lane.b32.xlu0 %v4171, 96
      %v4276 = vpop.permute.xlu0 %4275
      %4277 = vrot.lane.b32.xlu0 %v4172, 96
      %v4278 = vpop.permute.xlu0 %4277
      %4279 = vrot.lane.b32.xlu0 %v4173, 96
      %v4280 = vpop.permute.xlu0 %4279
      %4281 = vrot.lane.b32.xlu0 %v4174, 96
      %v4282 = vpop.permute.xlu0 %4281
      %4283 = vrot.lane.b32.xlu0 %v4175, 96
      %v4284 = vpop.permute.xlu0 %4283
      %4285 = vrot.lane.b32.xlu0 %v4176, 96
      %v4286 = vpop.permute.xlu0 %4285
      %4287 = vrot.lane.b32.xlu0 %v4177, 96
      %v4288 = vpop.permute.xlu0 %4287
      %4289 = vrot.lane.b32.xlu0 %v4178, 96
      %v4290 = vpop.permute.xlu0 %4289
      %4291 = vrot.lane.b32.xlu0 %v4179, 96
      %v4292 = vpop.permute.xlu0 %4291
      %4293 = vrot.lane.b32.xlu0 %v4180, 96
      %v4294 = vpop.permute.xlu0 %4293
      %4295 = vrot.lane.b32.xlu0 %v4181, 96
      %v4296 = vpop.permute.xlu0 %4295
      %4297 = vrot.lane.b32.xlu0 %v4182, 96
      %v4298 = vpop.permute.xlu0 %4297
      %4299 = vrot.lane.b32.xlu0 %v4183, 96
      %v4300 = vpop.permute.xlu0 %4299
      %4301 = vrot.lane.b32.xlu0 %v4184, 96
      %v4302 = vpop.permute.xlu0 %4301
      %4303 = vrot.lane.b32.xlu0 %v4185, 96
      %v4304 = vpop.permute.xlu0 %4303
      %4305 = vrot.lane.b32.xlu0 %v4186, 96
      %v4306 = vpop.permute.xlu0 %4305
      %4307 = vrot.lane.b32.xlu0 %v4187, 96
      %v4308 = vpop.permute.xlu0 %4307
      %4309 = vrot.lane.b32.xlu0 %v4188, 96
      %v4310 = vpop.permute.xlu0 %4309
      %4311 = vrot.lane.b32.xlu0 %v4189, 96
      %v4312 = vpop.permute.xlu0 %4311
      %4313 = vrot.lane.b32.xlu0 %v4190, 96
      %v4314 = vpop.permute.xlu0 %4313
      %4315 = vrot.lane.b32.xlu0 %v4191, 96
      %v4316 = vpop.permute.xlu0 %4315
      %4317 = vrot.lane.b32.xlu0 %v4192, 96
      %v4318 = vpop.permute.xlu0 %4317
      %4319 = vrot.lane.b32.xlu0 %v4193, 96
      %v4320 = vpop.permute.xlu0 %4319
      %4321 = vrot.lane.b32.xlu0 %v4194, 96
      %v4322 = vpop.permute.xlu0 %4321
      %v4355 = vmul.f32 %v4195, %v4260
      %v4356 = vmul.f32 %v4196, %v4262
      %v4357 = vmul.f32 %v4197, %v4264
      %v4358 = vmul.f32 %v4198, %v4266
      %v4359 = vmul.f32 %v4199, %v4268
      %v4360 = vmul.f32 %v4200, %v4270
      %v4361 = vmul.f32 %v4201, %v4272
      %v4362 = vmul.f32 %v4202, %v4274
      %v4363 = vmul.f32 %v4203, %v4276
      %v4364 = vmul.f32 %v4204, %v4278
      %v4365 = vmul.f32 %v4205, %v4280
      %v4366 = vmul.f32 %v4206, %v4282
      %v4367 = vmul.f32 %v4207, %v4284
      %v4368 = vmul.f32 %v4208, %v4286
      %v4369 = vmul.f32 %v4209, %v4288
      %v4370 = vmul.f32 %v4210, %v4290
      %v4371 = vmul.f32 %v4211, %v4292
      %v4372 = vmul.f32 %v4212, %v4294
      %v4373 = vmul.f32 %v4213, %v4296
      %v4374 = vmul.f32 %v4214, %v4298
      %v4375 = vmul.f32 %v4215, %v4300
      %v4376 = vmul.f32 %v4216, %v4302
      %v4377 = vmul.f32 %v4217, %v4304
      %v4378 = vmul.f32 %v4218, %v4306
      %v4379 = vmul.f32 %v4219, %v4308
      %v4380 = vmul.f32 %v4220, %v4310
      %v4381 = vmul.f32 %v4221, %v4312
      %v4382 = vmul.f32 %v4222, %v4314
      %v4383 = vmul.f32 %v4223, %v4316
      %v4384 = vmul.f32 %v4224, %v4318
      %v4385 = vmul.f32 %v4225, %v4320
      %v4386 = vmul.f32 %v4226, %v4322
      %4387 = vrot.lane.b32.xlu0 %v4163, 32
      %v4388 = vpop.permute.xlu0 %4387
      %4389 = vrot.lane.b32.xlu0 %v4164, 32
      %v4390 = vpop.permute.xlu0 %4389
      %4391 = vrot.lane.b32.xlu0 %v4165, 32
      %v4392 = vpop.permute.xlu0 %4391
      %4393 = vrot.lane.b32.xlu0 %v4166, 32
      %v4394 = vpop.permute.xlu0 %4393
      %4395 = vrot.lane.b32.xlu0 %v4167, 32
      %v4396 = vpop.permute.xlu0 %4395
      %4397 = vrot.lane.b32.xlu0 %v4168, 32
      %v4398 = vpop.permute.xlu0 %4397
      %4399 = vrot.lane.b32.xlu0 %v4169, 32
      %v4400 = vpop.permute.xlu0 %4399
      %4401 = vrot.lane.b32.xlu0 %v4170, 32
      %v4402 = vpop.permute.xlu0 %4401
      %4403 = vrot.lane.b32.xlu0 %v4171, 32
      %v4404 = vpop.permute.xlu0 %4403
      %4405 = vrot.lane.b32.xlu0 %v4172, 32
      %v4406 = vpop.permute.xlu0 %4405
      %4407 = vrot.lane.b32.xlu0 %v4173, 32
      %v4408 = vpop.permute.xlu0 %4407
      %4409 = vrot.lane.b32.xlu0 %v4174, 32
      %v4410 = vpop.permute.xlu0 %4409
      %4411 = vrot.lane.b32.xlu0 %v4175, 32
      %v4412 = vpop.permute.xlu0 %4411
      %4413 = vrot.lane.b32.xlu0 %v4176, 32
      %v4414 = vpop.permute.xlu0 %4413
      %4415 = vrot.lane.b32.xlu0 %v4177, 32
      %v4416 = vpop.permute.xlu0 %4415
      %4417 = vrot.lane.b32.xlu0 %v4178, 32
      %v4418 = vpop.permute.xlu0 %4417
      %4419 = vrot.lane.b32.xlu0 %v4179, 32
      %v4420 = vpop.permute.xlu0 %4419
      %4421 = vrot.lane.b32.xlu0 %v4180, 32
      %v4422 = vpop.permute.xlu0 %4421
      %4423 = vrot.lane.b32.xlu0 %v4181, 32
      %v4424 = vpop.permute.xlu0 %4423
      %4425 = vrot.lane.b32.xlu0 %v4182, 32
      %v4426 = vpop.permute.xlu0 %4425
      %4427 = vrot.lane.b32.xlu0 %v4183, 32
      %v4428 = vpop.permute.xlu0 %4427
      %4429 = vrot.lane.b32.xlu0 %v4184, 32
      %v4430 = vpop.permute.xlu0 %4429
      %4431 = vrot.lane.b32.xlu0 %v4185, 32
      %v4432 = vpop.permute.xlu0 %4431
      %4433 = vrot.lane.b32.xlu0 %v4186, 32
      %v4434 = vpop.permute.xlu0 %4433
      %4435 = vrot.lane.b32.xlu0 %v4187, 32
      %v4436 = vpop.permute.xlu0 %4435
      %4437 = vrot.lane.b32.xlu0 %v4188, 32
      %v4438 = vpop.permute.xlu0 %4437
      %4439 = vrot.lane.b32.xlu0 %v4189, 32
      %v4440 = vpop.permute.xlu0 %4439
      %4441 = vrot.lane.b32.xlu0 %v4190, 32
      %v4442 = vpop.permute.xlu0 %4441
      %4443 = vrot.lane.b32.xlu0 %v4191, 32
      %v4444 = vpop.permute.xlu0 %4443
      %4445 = vrot.lane.b32.xlu0 %v4192, 32
      %v4446 = vpop.permute.xlu0 %4445
      %4447 = vrot.lane.b32.xlu0 %v4193, 32
      %v4448 = vpop.permute.xlu0 %4447
      %4449 = vrot.lane.b32.xlu0 %v4194, 32
      %v4450 = vpop.permute.xlu0 %4449
      %v4483 = vmul.f32 %v4163, %v4388
      %v4484 = vmul.f32 %v4164, %v4390
      %v4485 = vmul.f32 %v4165, %v4392
      %v4486 = vmul.f32 %v4166, %v4394
      %v4487 = vmul.f32 %v4167, %v4396
      %v4488 = vmul.f32 %v4168, %v4398
      %v4489 = vmul.f32 %v4169, %v4400
      %v4490 = vmul.f32 %v4170, %v4402
      %v4491 = vmul.f32 %v4171, %v4404
      %v4492 = vmul.f32 %v4172, %v4406
      %v4493 = vmul.f32 %v4173, %v4408
      %v4494 = vmul.f32 %v4174, %v4410
      %v4495 = vmul.f32 %v4175, %v4412
      %v4496 = vmul.f32 %v4176, %v4414
      %v4497 = vmul.f32 %v4177, %v4416
      %v4498 = vmul.f32 %v4178, %v4418
      %v4499 = vmul.f32 %v4179, %v4420
      %v4500 = vmul.f32 %v4180, %v4422
      %v4501 = vmul.f32 %v4181, %v4424
      %v4502 = vmul.f32 %v4182, %v4426
      %v4503 = vmul.f32 %v4183, %v4428
      %v4504 = vmul.f32 %v4184, %v4430
      %v4505 = vmul.f32 %v4185, %v4432
      %v4506 = vmul.f32 %v4186, %v4434
      %v4507 = vmul.f32 %v4187, %v4436
      %v4508 = vmul.f32 %v4188, %v4438
      %v4509 = vmul.f32 %v4189, %v4440
      %v4510 = vmul.f32 %v4190, %v4442
      %v4511 = vmul.f32 %v4191, %v4444
      %v4512 = vmul.f32 %v4192, %v4446
      %v4513 = vmul.f32 %v4193, %v4448
      %v4514 = vmul.f32 %v4194, %v4450
      %v4515 = vadd.f32 %v4355, %v4483
      %v4516 = vadd.f32 %v4356, %v4484
      %v4517 = vadd.f32 %v4357, %v4485
      %v4518 = vadd.f32 %v4358, %v4486
      %v4519 = vadd.f32 %v4359, %v4487
      %v4520 = vadd.f32 %v4360, %v4488
      %v4521 = vadd.f32 %v4361, %v4489
      %v4522 = vadd.f32 %v4362, %v4490
      %v4523 = vadd.f32 %v4363, %v4491
      %v4524 = vadd.f32 %v4364, %v4492
      %v4525 = vadd.f32 %v4365, %v4493
      %v4526 = vadd.f32 %v4366, %v4494
      %v4527 = vadd.f32 %v4367, %v4495
      %v4528 = vadd.f32 %v4368, %v4496
      %v4529 = vadd.f32 %v4369, %v4497
      %v4530 = vadd.f32 %v4370, %v4498
      %v4531 = vadd.f32 %v4371, %v4499
      %v4532 = vadd.f32 %v4372, %v4500
      %v4533 = vadd.f32 %v4373, %v4501
      %v4534 = vadd.f32 %v4374, %v4502
      %v4535 = vadd.f32 %v4375, %v4503
      %v4536 = vadd.f32 %v4376, %v4504
      %v4537 = vadd.f32 %v4377, %v4505
      %v4538 = vadd.f32 %v4378, %v4506
      %v4539 = vadd.f32 %v4379, %v4507
      %v4540 = vadd.f32 %v4380, %v4508
      %v4541 = vadd.f32 %v4381, %v4509
      %v4542 = vadd.f32 %v4382, %v4510
      %v4543 = vadd.f32 %v4383, %v4511
      %v4544 = vadd.f32 %v4384, %v4512
      %v4545 = vadd.f32 %v4385, %v4513
      %v4546 = vadd.f32 %v4386, %v4514
      %v4547 = vtanh.pop %v4515
      %v4548 = vtanh.pop %v4516
      %v4549 = vtanh.pop %v4517
      %v4550 = vtanh.pop %v4518
      %v4551 = vtanh.pop %v4519
      %v4552 = vtanh.pop %v4520
      %v4553 = vtanh.pop %v4521
      %v4554 = vtanh.pop %v4522
      %v4555 = vtanh.pop %v4523
      %v4556 = vtanh.pop %v4524
      %v4557 = vtanh.pop %v4525
      %v4558 = vtanh.pop %v4526
      %v4559 = vtanh.pop %v4527
      %v4560 = vtanh.pop %v4528
      %v4561 = vtanh.pop %v4529
      %v4562 = vtanh.pop %v4530
      %v4563 = vtanh.pop %v4531
      %v4564 = vtanh.pop %v4532
      %v4565 = vtanh.pop %v4533
      %v4566 = vtanh.pop %v4534
      %v4567 = vtanh.pop %v4535
      %v4568 = vtanh.pop %v4536
      %v4569 = vtanh.pop %v4537
      %v4570 = vtanh.pop %v4538
      %v4571 = vtanh.pop %v4539
      %v4572 = vtanh.pop %v4540
      %v4573 = vtanh.pop %v4541
      %v4574 = vtanh.pop %v4542
      %v4575 = vtanh.pop %v4543
      %v4576 = vtanh.pop %v4544
      %v4577 = vtanh.pop %v4545
      %v4578 = vtanh.pop %v4546
      %4611 = vrot.lane.b32.xlu0 %v4547, 64
      %v4612 = vpop.permute.xlu0 %4611
      %4613 = vrot.lane.b32.xlu0 %v4548, 64
      %v4614 = vpop.permute.xlu0 %4613
      %4615 = vrot.lane.b32.xlu0 %v4549, 64
      %v4616 = vpop.permute.xlu0 %4615
      %4617 = vrot.lane.b32.xlu0 %v4550, 64
      %v4618 = vpop.permute.xlu0 %4617
      %4619 = vrot.lane.b32.xlu0 %v4551, 64
      %v4620 = vpop.permute.xlu0 %4619
      %4621 = vrot.lane.b32.xlu0 %v4552, 64
      %v4622 = vpop.permute.xlu0 %4621
      %4623 = vrot.lane.b32.xlu0 %v4553, 64
      %v4624 = vpop.permute.xlu0 %4623
      %4625 = vrot.lane.b32.xlu0 %v4554, 64
      %v4626 = vpop.permute.xlu0 %4625
      %4627 = vrot.lane.b32.xlu0 %v4555, 64
      %v4628 = vpop.permute.xlu0 %4627
      %4629 = vrot.lane.b32.xlu0 %v4556, 64
      %v4630 = vpop.permute.xlu0 %4629
      %4631 = vrot.lane.b32.xlu0 %v4557, 64
      %v4632 = vpop.permute.xlu0 %4631
      %4633 = vrot.lane.b32.xlu0 %v4558, 64
      %v4634 = vpop.permute.xlu0 %4633
      %4635 = vrot.lane.b32.xlu0 %v4559, 64
      %v4636 = vpop.permute.xlu0 %4635
      %4637 = vrot.lane.b32.xlu0 %v4560, 64
      %v4638 = vpop.permute.xlu0 %4637
      %4639 = vrot.lane.b32.xlu0 %v4561, 64
      %v4640 = vpop.permute.xlu0 %4639
      %4641 = vrot.lane.b32.xlu0 %v4562, 64
      %v4642 = vpop.permute.xlu0 %4641
      %4643 = vrot.lane.b32.xlu0 %v4563, 64
      %v4644 = vpop.permute.xlu0 %4643
      %4645 = vrot.lane.b32.xlu0 %v4564, 64
      %v4646 = vpop.permute.xlu0 %4645
      %4647 = vrot.lane.b32.xlu0 %v4565, 64
      %v4648 = vpop.permute.xlu0 %4647
      %4649 = vrot.lane.b32.xlu0 %v4566, 64
      %v4650 = vpop.permute.xlu0 %4649
      %4651 = vrot.lane.b32.xlu0 %v4567, 64
      %v4652 = vpop.permute.xlu0 %4651
      %4653 = vrot.lane.b32.xlu0 %v4568, 64
      %v4654 = vpop.permute.xlu0 %4653
      %4655 = vrot.lane.b32.xlu0 %v4569, 64
      %v4656 = vpop.permute.xlu0 %4655
      %4657 = vrot.lane.b32.xlu0 %v4570, 64
      %v4658 = vpop.permute.xlu0 %4657
      %4659 = vrot.lane.b32.xlu0 %v4571, 64
      %v4660 = vpop.permute.xlu0 %4659
      %4661 = vrot.lane.b32.xlu0 %v4572, 64
      %v4662 = vpop.permute.xlu0 %4661
      %4663 = vrot.lane.b32.xlu0 %v4573, 64
      %v4664 = vpop.permute.xlu0 %4663
      %4665 = vrot.lane.b32.xlu0 %v4574, 64
      %v4666 = vpop.permute.xlu0 %4665
      %4667 = vrot.lane.b32.xlu0 %v4575, 64
      %v4668 = vpop.permute.xlu0 %4667
      %4669 = vrot.lane.b32.xlu0 %v4576, 64
      %v4670 = vpop.permute.xlu0 %4669
      %4671 = vrot.lane.b32.xlu0 %v4577, 64
      %v4672 = vpop.permute.xlu0 %4671
      %4673 = vrot.lane.b32.xlu0 %v4578, 64
      %v4674 = vpop.permute.xlu0 %4673
      %v4707 = vmul.f32 %v4163, %v4612
      %v4708 = vmul.f32 %v4164, %v4614
      %v4709 = vmul.f32 %v4165, %v4616
      %v4710 = vmul.f32 %v4166, %v4618
      %v4711 = vmul.f32 %v4167, %v4620
      %v4712 = vmul.f32 %v4168, %v4622
      %v4713 = vmul.f32 %v4169, %v4624
      %v4714 = vmul.f32 %v4170, %v4626
      %v4715 = vmul.f32 %v4171, %v4628
      %v4716 = vmul.f32 %v4172, %v4630
      %v4717 = vmul.f32 %v4173, %v4632
      %v4718 = vmul.f32 %v4174, %v4634
      %v4719 = vmul.f32 %v4175, %v4636
      %v4720 = vmul.f32 %v4176, %v4638
      %v4721 = vmul.f32 %v4177, %v4640
      %v4722 = vmul.f32 %v4178, %v4642
      %v4723 = vmul.f32 %v4179, %v4644
      %v4724 = vmul.f32 %v4180, %v4646
      %v4725 = vmul.f32 %v4181, %v4648
      %v4726 = vmul.f32 %v4182, %v4650
      %v4727 = vmul.f32 %v4183, %v4652
      %v4728 = vmul.f32 %v4184, %v4654
      %v4729 = vmul.f32 %v4185, %v4656
      %v4730 = vmul.f32 %v4186, %v4658
      %v4731 = vmul.f32 %v4187, %v4660
      %v4732 = vmul.f32 %v4188, %v4662
      %v4733 = vmul.f32 %v4189, %v4664
      %v4734 = vmul.f32 %v4190, %v4666
      %v4735 = vmul.f32 %v4191, %v4668
      %v4736 = vmul.f32 %v4192, %v4670
      %v4737 = vmul.f32 %v4193, %v4672
      %v4738 = vmul.f32 %v4194, %v4674
      %4739 = vst.msk [vmem:[#allocation3] sm:$0xff] %vm1567, %v4515
      %4740 = vst.msk [vmem:[#allocation3 + $0x8] sm:$0xff] %vm1567, %v4516
      %4741 = vst.msk [vmem:[#allocation3 + $0x10] sm:$0xff] %vm1567, %v4517
      %4742 = vst.msk [vmem:[#allocation3 + $0x18] sm:$0xff] %vm1567, %v4518
      %4743 = vst.msk [vmem:[#allocation3 + $0x20] sm:$0xff] %vm1567, %v4519
      %4744 = vst.msk [vmem:[#allocation3 + $0x28] sm:$0xff] %vm1567, %v4520
      %4745 = vst.msk [vmem:[#allocation3 + $0x30] sm:$0xff] %vm1567, %v4521
      %4746 = vst.msk [vmem:[#allocation3 + $0x38] sm:$0xff] %vm1567, %v4522
      %4747 = vst.msk [vmem:[#allocation3 + $0x40] sm:$0xff] %vm1567, %v4523
      %4748 = vst.msk [vmem:[#allocation3 + $0x48] sm:$0xff] %vm1567, %v4524
      %4749 = vst.msk [vmem:[#allocation3 + $0x50] sm:$0xff] %vm1567, %v4525
      %4750 = vst.msk [vmem:[#allocation3 + $0x58] sm:$0xff] %vm1567, %v4526
      %4751 = vst.msk [vmem:[#allocation3 + $0x60] sm:$0xff] %vm1567, %v4527
      %4752 = vst.msk [vmem:[#allocation3 + $0x68] sm:$0xff] %vm1567, %v4528
      %4753 = vst.msk [vmem:[#allocation3 + $0x70] sm:$0xff] %vm1567, %v4529
      %4754 = vst.msk [vmem:[#allocation3 + $0x78] sm:$0xff] %vm1567, %v4530
      %4755 = vst.msk [vmem:[#allocation3 + $0x80] sm:$0xff] %vm1567, %v4531
      %4756 = vst.msk [vmem:[#allocation3 + $0x88] sm:$0xff] %vm1567, %v4532
      %4757 = vst.msk [vmem:[#allocation3 + $0x90] sm:$0xff] %vm1567, %v4533
      %4758 = vst.msk [vmem:[#allocation3 + $0x98] sm:$0xff] %vm1567, %v4534
      %4759 = vst.msk [vmem:[#allocation3 + $0xa0] sm:$0xff] %vm1567, %v4535
      %4760 = vst.msk [vmem:[#allocation3 + $0xa8] sm:$0xff] %vm1567, %v4536
      %4761 = vst.msk [vmem:[#allocation3 + $0xb0] sm:$0xff] %vm1567, %v4537
      %4762 = vst.msk [vmem:[#allocation3 + $0xb8] sm:$0xff] %vm1567, %v4538
      %4763 = vst.msk [vmem:[#allocation3 + $0xc0] sm:$0xff] %vm1567, %v4539
      %4764 = vst.msk [vmem:[#allocation3 + $0xc8] sm:$0xff] %vm1567, %v4540
      %4765 = vst.msk [vmem:[#allocation3 + $0xd0] sm:$0xff] %vm1567, %v4541
      %4766 = vst.msk [vmem:[#allocation3 + $0xd8] sm:$0xff] %vm1567, %v4542
      %4767 = vst.msk [vmem:[#allocation3 + $0xe0] sm:$0xff] %vm1567, %v4543
      %4768 = vst.msk [vmem:[#allocation3 + $0xe8] sm:$0xff] %vm1567, %v4544
      %4769 = vst.msk [vmem:[#allocation3 + $0xf0] sm:$0xff] %vm1567, %v4545
      %4770 = vst.msk [vmem:[#allocation3 + $0xf8] sm:$0xff] %vm1567, %v4546
      %4803 = vrot.lane.b32.xlu0 %v4707, 64
      %v4804 = vpop.permute.xlu0 %4803
      %4805 = vrot.lane.b32.xlu0 %v4708, 64
      %v4806 = vpop.permute.xlu0 %4805
      %4807 = vrot.lane.b32.xlu0 %v4709, 64
      %v4808 = vpop.permute.xlu0 %4807
      %4809 = vrot.lane.b32.xlu0 %v4710, 64
      %v4810 = vpop.permute.xlu0 %4809
      %4811 = vrot.lane.b32.xlu0 %v4711, 64
      %v4812 = vpop.permute.xlu0 %4811
      %4813 = vrot.lane.b32.xlu0 %v4712, 64
      %v4814 = vpop.permute.xlu0 %4813
      %4815 = vrot.lane.b32.xlu0 %v4713, 64
      %v4816 = vpop.permute.xlu0 %4815
      %4817 = vrot.lane.b32.xlu0 %v4714, 64
      %v4818 = vpop.permute.xlu0 %4817
      %4819 = vrot.lane.b32.xlu0 %v4715, 64
      %v4820 = vpop.permute.xlu0 %4819
      %4821 = vrot.lane.b32.xlu0 %v4716, 64
      %v4822 = vpop.permute.xlu0 %4821
      %4823 = vrot.lane.b32.xlu0 %v4717, 64
      %v4824 = vpop.permute.xlu0 %4823
      %4825 = vrot.lane.b32.xlu0 %v4718, 64
      %v4826 = vpop.permute.xlu0 %4825
      %4827 = vrot.lane.b32.xlu0 %v4719, 64
      %v4828 = vpop.permute.xlu0 %4827
      %4829 = vrot.lane.b32.xlu0 %v4720, 64
      %v4830 = vpop.permute.xlu0 %4829
      %4831 = vrot.lane.b32.xlu0 %v4721, 64
      %v4832 = vpop.permute.xlu0 %4831
      %4833 = vrot.lane.b32.xlu0 %v4722, 64
      %v4834 = vpop.permute.xlu0 %4833
      %4835 = vrot.lane.b32.xlu0 %v4723, 64
      %v4836 = vpop.permute.xlu0 %4835
      %4837 = vrot.lane.b32.xlu0 %v4724, 64
      %v4838 = vpop.permute.xlu0 %4837
      %4839 = vrot.lane.b32.xlu0 %v4725, 64
      %v4840 = vpop.permute.xlu0 %4839
      %4841 = vrot.lane.b32.xlu0 %v4726, 64
      %v4842 = vpop.permute.xlu0 %4841
      %4843 = vrot.lane.b32.xlu0 %v4727, 64
      %v4844 = vpop.permute.xlu0 %4843
      %4845 = vrot.lane.b32.xlu0 %v4728, 64
      %v4846 = vpop.permute.xlu0 %4845
      %4847 = vrot.lane.b32.xlu0 %v4729, 64
      %v4848 = vpop.permute.xlu0 %4847
      %4849 = vrot.lane.b32.xlu0 %v4730, 64
      %v4850 = vpop.permute.xlu0 %4849
      %4851 = vrot.lane.b32.xlu0 %v4731, 64
      %v4852 = vpop.permute.xlu0 %4851
      %4853 = vrot.lane.b32.xlu0 %v4732, 64
      %v4854 = vpop.permute.xlu0 %4853
      %4855 = vrot.lane.b32.xlu0 %v4733, 64
      %v4856 = vpop.permute.xlu0 %4855
      %4857 = vrot.lane.b32.xlu0 %v4734, 64
      %v4858 = vpop.permute.xlu0 %4857
      %4859 = vrot.lane.b32.xlu0 %v4735, 64
      %v4860 = vpop.permute.xlu0 %4859
      %4861 = vrot.lane.b32.xlu0 %v4736, 64
      %v4862 = vpop.permute.xlu0 %4861
      %4863 = vrot.lane.b32.xlu0 %v4737, 64
      %v4864 = vpop.permute.xlu0 %4863
      %4865 = vrot.lane.b32.xlu0 %v4738, 64
      %v4866 = vpop.permute.xlu0 %4865
      %s4899 = scalar_lea.vmem [#allocation2], 48
      %4900 = vst.msk [vmem:[%s4899 + $0x2] sm:$0xff] %vm1567, %v4804
      %4901 = vst.msk [vmem:[%s4899 + $0xa] sm:$0xff] %vm1567, %v4806
      %4902 = vst.msk [vmem:[%s4899 + $0x1a] sm:$0xff] %vm1567, %v4808
      %4903 = vst.msk [vmem:[%s4899 + $0x22] sm:$0xff] %vm1567, %v4810
      %4904 = vst.msk [vmem:[%s4899 + $0x32] sm:$0xff] %vm1567, %v4812
      %4905 = vst.msk [vmem:[%s4899 + $0x3a] sm:$0xff] %vm1567, %v4814
      %4906 = vst.msk [vmem:[%s4899 + $0x4a] sm:$0xff] %vm1567, %v4816
      %4907 = vst.msk [vmem:[%s4899 + $0x52] sm:$0xff] %vm1567, %v4818
      %4908 = vst.msk [vmem:[%s4899 + $0x62] sm:$0xff] %vm1567, %v4820
      %4909 = vst.msk [vmem:[%s4899 + $0x6a] sm:$0xff] %vm1567, %v4822
      %4910 = vst.msk [vmem:[%s4899 + $0x7a] sm:$0xff] %vm1567, %v4824
      %4911 = vst.msk [vmem:[%s4899 + $0x82] sm:$0xff] %vm1567, %v4826
      %4912 = vst.msk [vmem:[%s4899 + $0x92] sm:$0xff] %vm1567, %v4828
      %4913 = vst.msk [vmem:[%s4899 + $0x9a] sm:$0xff] %vm1567, %v4830
      %4914 = vst.msk [vmem:[%s4899 + $0xaa] sm:$0xff] %vm1567, %v4832
      %4915 = vst.msk [vmem:[%s4899 + $0xb2] sm:$0xff] %vm1567, %v4834
      %4916 = vst.msk [vmem:[%s4899 + $0xc2] sm:$0xff] %vm1567, %v4836
      %4917 = vst.msk [vmem:[%s4899 + $0xca] sm:$0xff] %vm1567, %v4838
      %4918 = vst.msk [vmem:[%s4899 + $0xda] sm:$0xff] %vm1567, %v4840
      %4919 = vst.msk [vmem:[%s4899 + $0xe2] sm:$0xff] %vm1567, %v4842
      %4920 = vst.msk [vmem:[%s4899 + $0xf2] sm:$0xff] %vm1567, %v4844
      %4921 = vst.msk [vmem:[%s4899 + $0xfa] sm:$0xff] %vm1567, %v4846
      %4922 = vst.msk [vmem:[%s4899 + $0x10a] sm:$0xff] %vm1567, %v4848
      %4923 = vst.msk [vmem:[%s4899 + $0x112] sm:$0xff] %vm1567, %v4850
      %4924 = vst.msk [vmem:[%s4899 + $0x122] sm:$0xff] %vm1567, %v4852
      %4925 = vst.msk [vmem:[%s4899 + $0x12a] sm:$0xff] %vm1567, %v4854
      %4926 = vst.msk [vmem:[%s4899 + $0x13a] sm:$0xff] %vm1567, %v4856
      %4927 = vst.msk [vmem:[%s4899 + $0x142] sm:$0xff] %vm1567, %v4858
      %4928 = vst.msk [vmem:[%s4899 + $0x152] sm:$0xff] %vm1567, %v4860
      %4929 = vst.msk [vmem:[%s4899 + $0x15a] sm:$0xff] %vm1567, %v4862
      %4930 = vst.msk [vmem:[%s4899 + $0x16a] sm:$0xff] %vm1567, %v4864
      %4931 = vst.msk [vmem:[%s4899 + $0x172] sm:$0xff] %vm1567, %v4866
      %4932 = vst.msk [vmem:[%s233] sm:$0xff] %vm1567, %v4804
      %4933 = vst.msk [vmem:[%s233 + $0x8] sm:$0xff] %vm1567, %v4806
      %4934 = vst.msk [vmem:[%s233 + $0x10] sm:$0xff] %vm1567, %v4808
      %4935 = vst.msk [vmem:[%s233 + $0x18] sm:$0xff] %vm1567, %v4810
      %4936 = vst.msk [vmem:[%s233 + $0x20] sm:$0xff] %vm1567, %v4812
      %4937 = vst.msk [vmem:[%s233 + $0x28] sm:$0xff] %vm1567, %v4814
      %4938 = vst.msk [vmem:[%s233 + $0x30] sm:$0xff] %vm1567, %v4816
      %4939 = vst.msk [vmem:[%s233 + $0x38] sm:$0xff] %vm1567, %v4818
      %4940 = vst.msk [vmem:[%s233 + $0x40] sm:$0xff] %vm1567, %v4820
      %4941 = vst.msk [vmem:[%s233 + $0x48] sm:$0xff] %vm1567, %v4822
      %4942 = vst.msk [vmem:[%s233 + $0x50] sm:$0xff] %vm1567, %v4824
      %4943 = vst.msk [vmem:[%s233 + $0x58] sm:$0xff] %vm1567, %v4826
      %4944 = vst.msk [vmem:[%s233 + $0x60] sm:$0xff] %vm1567, %v4828
      %4945 = vst.msk [vmem:[%s233 + $0x68] sm:$0xff] %vm1567, %v4830
      %4946 = vst.msk [vmem:[%s233 + $0x70] sm:$0xff] %vm1567, %v4832
      %4947 = vst.msk [vmem:[%s233 + $0x78] sm:$0xff] %vm1567, %v4834
      %4948 = vst.msk [vmem:[%s233 + $0x80] sm:$0xff] %vm1567, %v4836
      %4949 = vst.msk [vmem:[%s233 + $0x88] sm:$0xff] %vm1567, %v4838
      %4950 = vst.msk [vmem:[%s233 + $0x90] sm:$0xff] %vm1567, %v4840
      %4951 = vst.msk [vmem:[%s233 + $0x98] sm:$0xff] %vm1567, %v4842
      %4952 = vst.msk [vmem:[%s233 + $0xa0] sm:$0xff] %vm1567, %v4844
      %4953 = vst.msk [vmem:[%s233 + $0xa8] sm:$0xff] %vm1567, %v4846
      %4954 = vst.msk [vmem:[%s233 + $0xb0] sm:$0xff] %vm1567, %v4848
      %4955 = vst.msk [vmem:[%s233 + $0xb8] sm:$0xff] %vm1567, %v4850
      %4956 = vst.msk [vmem:[%s233 + $0xc0] sm:$0xff] %vm1567, %v4852
      %4957 = vst.msk [vmem:[%s233 + $0xc8] sm:$0xff] %vm1567, %v4854
      %4958 = vst.msk [vmem:[%s233 + $0xd0] sm:$0xff] %vm1567, %v4856
      %4959 = vst.msk [vmem:[%s233 + $0xd8] sm:$0xff] %vm1567, %v4858
      %4960 = vst.msk [vmem:[%s233 + $0xe0] sm:$0xff] %vm1567, %v4860
      %4961 = vst.msk [vmem:[%s233 + $0xe8] sm:$0xff] %vm1567, %v4862
      %4962 = vst.msk [vmem:[%s233 + $0xf0] sm:$0xff] %vm1567, %v4864
      %4963 = vst.msk [vmem:[%s233 + $0xf8] sm:$0xff] %vm1567, %v4866
      %p4964 = scmp.lt.s32.totalorder %s19, 1
      %s4965 = scalar_select %p4964, %s19, 1
      %p4966 = scmp.lt.s32.totalorder %s20, 2
      %s4967 = scalar_select %p4966, %s20, 2
      %s4968 = smul.addr %s4967, 32
      %s4969 = smul.addr %s4965, 96
      %s4970 = sadd.s32 %s4968, %s4969
      %s4971 = smul.addr %s4970, 8
      %s4972 = scalar_lea.vmem %s4, %s4971
      // Predicated region
      $region41: #{clstm_forward.1} parent=35 // pred_check
        %p4973 = pneg %p138
      $region42: #{clstm_forward.1} parent=35 // pred_check_branch
        %4975 = sbr.rel (%p4973) target = $region44
      $region43: #{clstm_forward.1} parent=35 // pred_region
        _
      $region44: #{clstm_forward.1} parent=35 // pred_fallthru
        _
    $region36: #{clstm_forward.1} parent=5 // pred_fallthru
      _
    %p4976 = scmp.le.s32.totalorder 2, %s10
    // Predicated region
    $region45: #{clstm_forward.1} parent=5 // pred_check
      %p4977 = pneg %p4976
    $region46: #{clstm_forward.1} parent=5 // pred_check_branch
      %4979 = sbr.rel (%p4977) target = $region48
    $region47: #{clstm_forward.1} parent=5 // pred_region
      %s4980 = ssub.s32 %s10, 2
      // Predicated region
      $region49: #{clstm_forward.1} parent=47 // pred_check
        %p4981 = pneg %p144
      $region50: #{clstm_forward.1} parent=47 // pred_check_branch
        %4983 = sbr.rel (%p4981) target = $region52
      $region51: #{clstm_forward.1} parent=47 // pred_region
        %p4984 = scmp.lt.s32.totalorder %s21, 1
        %s4985 = scalar_select %p4984, %s21, 1
        %p4986 = scmp.lt.s32.totalorder %s22, 2
        %s4987 = scalar_select %p4986, %s22, 2
        %s4988 = smul.addr %s4987, 32
        %s4989 = smul.addr %s4985, 96
        %s4990 = sadd.s32 %s4988, %s4989
        %s4991 = smul.addr %s4990, 8
        %s4992 = scalar_lea.vmem %s4, %s4991
      $region52: #{clstm_forward.1} parent=47 // pred_fallthru
        _
    $region48: #{clstm_forward.1} parent=5 // pred_fallthru
      _
  $region6: #{clstm_forward.1} parent=0 // loop_footer
    %s14 = sadd.s32 1, %s10
  $region7: #{clstm_forward.1} parent=0 // loop_footer_branch
    %9 = sbr.rel target = $region3
  $region8: #{clstm_forward.1} parent=0 // loop_exit
    _

</llo_original>
